<compile_context>
chip_gen: v6e
topology: v6e:2x2x1
jax: 0.10.0
libtpu: 0.0.40
codegen_flags: <defaults>
</compile_context>

<pallas_src>
import jax
import jax.numpy as jnp
from jax.experimental import pallas as pl
from jax.experimental.pallas import tpu as pltpu


# -----------------------------------------------------------------------------
# Kernel
# -----------------------------------------------------------------------------
def enc_dec_kernel(
    x2d_ref,       # (S*B, F_enc)  time-major, flattened encoder inputs
    dec2d_ref,     # (T*B, F_dec)  time-major, flattened decoder features
    w_ih_e_ref,    # (F_enc, 3*Hp) encoder input weights, gate-padded
    w_hh_e_ref,    # (Hp, 3*Hp)    encoder recurrent weights, gate-padded
    bias_e_ref,    # (1, 3*Hp)     b_ih_e + [b_hh_e_r, b_hh_e_z, 0]
    b_hn_e_ref,    # (1, Hp)       b_hh_e n-gate part
    w_feat_d_ref,  # (F_dec, 3*Hp) decoder feature rows of w_ih_d
    w_hh_d_ref,    # (Hp, 3*Hp)    decoder recurrent weights, gate-padded
    bias_d_ref,    # (1, 3*Hp)     b_ih_d + [b_hh_d_r, b_hh_d_z, 0]
    b_hn_d_ref,    # (1, Hp)       b_hh_d n-gate part
    w_y_ref,       # (1, 3*Hp)     row 0 of w_ih_d (y_prev column), gate-padded
    w_out_ref,     # (1, Hp)       output projection (row layout)
    b_out_ref,     # (1, 1)        output bias
    out_ref,       # (B, T)
    gi_enc_sc,     # VMEM (S*B, 3*Hp) scratch: hoisted encoder input projections
    gi_dec_sc,     # VMEM (T*B, 3*Hp) scratch: hoisted decoder feature projections
):
    B, T = out_ref.shape
    S = x2d_ref.shape[0] // B
    Hp = b_hn_e_ref.shape[1]
    G = 3 * Hp

    # ---- hoisted input projections (one matmul each, biases pre-folded) ----
    # Written to VMEM scratch so every per-step gi is a tile-aligned (B, G) load.
    gi_enc_sc[...] = (jnp.dot(x2d_ref[...], w_ih_e_ref[...],
                              preferred_element_type=jnp.float32)
                      + bias_e_ref[...])
    gi_dec_sc[...] = (jnp.dot(dec2d_ref[...], w_feat_d_ref[...],
                              preferred_element_type=jnp.float32)
                      + bias_d_ref[...])

    # Small (<=3 vreg) constants kept as values; big weights stay in their refs.
    b_hn_e = b_hn_e_ref[...]
    b_hn_d = b_hn_d_ref[...]
    w_y = w_y_ref[...]
    w_out_row = w_out_ref[...]
    b_out = b_out_ref[...]

    def gru_update(gi, gh, h, b_hn):
        # Gate blocks sit at lane offsets 0 / Hp / 2*Hp (128-aligned): VPU only.
        r = jax.nn.sigmoid(gi[:, :Hp] + gh[:, :Hp])
        z = jax.nn.sigmoid(gi[:, Hp:2 * Hp] + gh[:, Hp:2 * Hp])
        n = jnp.tanh(gi[:, 2 * Hp:] + r * (gh[:, 2 * Hp:] + b_hn))
        return (1.0 - z) * n + z * h

    # ---- encoder: only h @ w_hh_e remains on the per-step serial chain ----
    h = jnp.zeros((B, Hp), jnp.float32)
    for t in range(S):                       # static unroll (small S)
        gi = gi_enc_sc[pl.ds(t * B, B), :]   # contiguous sublane-tile load
        if t == 0:
            gh = jnp.zeros((B, G), jnp.float32)          # h0 == 0
        else:
            gh = jnp.dot(h, w_hh_e_ref[...],             # weights streamed from ref
                         preferred_element_type=jnp.float32)
        h = gru_update(gi, gh, h, b_hn_e)

    # y_prev initial value = input_seq[:, -1, 0:1] (last step, feature 0)
    y_prev = x2d_ref[pl.ds((S - 1) * B, B), :][:, 0:1]   # (B, 1)

    # ---- decoder: one (B,Hp)@(Hp,3*Hp) matmul per step; y_prev feedback is a
    #      cheap VPU broadcast-multiply into gi (no widened matmul, no concat) ----
    ys = []
    for i in range(T):                       # static unroll (output_size is small)
        gh = jnp.dot(h, w_hh_d_ref[...], preferred_element_type=jnp.float32)
        gi = gi_dec_sc[pl.ds(i * B, B), :] + y_prev * w_y
        h = gru_update(gi, gh, h, b_hn_d)
        # Scalar output head off the serial chain: VPU multiply + lane reduce.
        y = jnp.sum(h * w_out_row, axis=-1, keepdims=True) + b_out     # (B, 1)
        y_prev = y
        ys.append(y)

    out_ref[...] = jnp.concatenate(ys, axis=1)           # single store (T lanes)


# -----------------------------------------------------------------------------
# Wrapper
# -----------------------------------------------------------------------------
def encoder_decoder_forward(input_seq, decoder_features, prep):
    """input_seq: (B,S,F_enc) f32, decoder_features: (B,T,F_dec) f32  ->  (B,T)."""
    B, S, F_enc = input_seq.shape
    T, F_dec = decoder_features.shape[1], decoder_features.shape[2]
    Hp = prep[3].shape[1]           # b_hn_e is (1, Hp)
    G = 3 * Hp

    # Time-major + flattened layout (layout plumbing only): per-step kernel slices
    # become contiguous, tile-aligned (B, G) loads instead of sublane gathers.
    x2d = jnp.transpose(input_seq, (1, 0, 2)).reshape(S * B, F_enc)
    dec2d = jnp.transpose(decoder_features, (1, 0, 2)).reshape(T * B, F_dec)

    vmem = pl.BlockSpec(memory_space=pltpu.MemorySpace.VMEM)
    n_in = 2 + len(prep)
    return pl.pallas_call(
        enc_dec_kernel,
        out_shape=jax.ShapeDtypeStruct((B, T), jnp.float32),
        in_specs=[vmem] * n_in,
        out_specs=vmem,
        scratch_shapes=[pltpu.VMEM((S * B, G), jnp.float32),
                        pltpu.VMEM((T * B, G), jnp.float32)],
    )(x2d, dec2d, *prep)


# -----------------------------------------------------------------------------
# Parameter construction / preparation
# -----------------------------------------------------------------------------
def make_params(key, enc_feat, dec_feat, hidden):
    """PyTorch-layout GRU / GRUCell / Linear params (pre-transposed for x @ W)."""
    ks = jax.random.split(key, 10)
    s = 0.1
    w_ih_e = s * jax.random.normal(ks[0], (enc_feat, 3 * hidden), jnp.float32)
    w_hh_e = s * jax.random.normal(ks[1], (hidden, 3 * hidden), jnp.float32)
    b_ih_e = s * jax.random.normal(ks[2], (1, 3 * hidden), jnp.float32)
    b_hh_e = s * jax.random.normal(ks[3], (1, 3 * hidden), jnp.float32)
    w_ih_d = s * jax.random.normal(ks[4], (1 + dec_feat, 3 * hidden), jnp.float32)
    w_hh_d = s * jax.random.normal(ks[5], (hidden, 3 * hidden), jnp.float32)
    b_ih_d = s * jax.random.normal(ks[6], (1, 3 * hidden), jnp.float32)
    b_hh_d = s * jax.random.normal(ks[7], (1, 3 * hidden), jnp.float32)
    w_out = s * jax.random.normal(ks[8], (hidden, 1), jnp.float32)
    b_out = s * jax.random.normal(ks[9], (1, 1), jnp.float32)
    return (w_ih_e, w_hh_e, b_ih_e, b_hh_e,
            w_ih_d, w_hh_d, b_ih_d, b_hh_d,
            w_out, b_out)


def prepare_params(params, hidden):
    """Convert PyTorch-layout params to the lane-aligned kernel layout (one-time)."""
    (w_ih_e, w_hh_e, b_ih_e, b_hh_e,
     w_ih_d, w_hh_d, b_ih_d, b_hh_d, w_out, b_out) = params
    H = hidden
    Hp = max(128, ((H + 127) // 128) * 128)
    G = 3 * Hp

    def pad_cols(w):      # (..., 3H) -> (..., 3Hp): gate blocks at lane 0 / Hp / 2Hp
        out = jnp.zeros(w.shape[:-1] + (G,), jnp.float32)
        for g in range(3):
            out = out.at[..., g * Hp:g * Hp + H].set(w[..., g * H:(g + 1) * H])
        return out

    def pad_rows(w):      # (H, N) -> (Hp, N)
        return jnp.zeros((Hp,) + w.shape[1:], jnp.float32).at[:H].set(w)

    # encoder
    w_ih_e_p = pad_cols(w_ih_e)                                   # (F_enc, 3Hp)
    w_hh_e_p = pad_rows(pad_cols(w_hh_e))                         # (Hp, 3Hp)
    b_hh_e_p = pad_cols(b_hh_e)
    bias_e = pad_cols(b_ih_e).at[:, :2 * Hp].add(b_hh_e_p[:, :2 * Hp])
    b_hn_e = b_hh_e_p[:, 2 * Hp:]                                 # (1, Hp)

    # decoder (y_prev row kept separate; recurrent weight is just w_hh_d)
    w_y = pad_cols(w_ih_d[0:1, :])                                # (1, 3Hp)
    w_feat_d_p = pad_cols(w_ih_d[1:, :])                          # (F_dec, 3Hp)
    w_hh_d_p = pad_rows(pad_cols(w_hh_d))                         # (Hp, 3Hp)
    b_hh_d_p = pad_cols(b_hh_d)
    bias_d = pad_cols(b_ih_d).at[:, :2 * Hp].add(b_hh_d_p[:, :2 * Hp])
    b_hn_d = b_hh_d_p[:, 2 * Hp:]                                 # (1, Hp)

    w_out_row = jnp.transpose(pad_rows(w_out))                    # (1, Hp)

    return (w_ih_e_p, w_hh_e_p, bias_e, b_hn_e,
            w_feat_d_p, w_hh_d_p, bias_d, b_hn_d,
            w_y, w_out_row, b_out.astype(jnp.float32))


# -----------------------------------------------------------------------------
# Pure-jnp reference (mirrors the PyTorch module, yb=None path)
# -----------------------------------------------------------------------------
def reference_forward(input_seq, decoder_features, params):
    (w_ih_e, w_hh_e, b_ih_e, b_hh_e,
     w_ih_d, w_hh_d, b_ih_d, b_hh_d, w_out, b_out) = params
    B, S, _ = input_seq.shape
    T = decoder_features.shape[1]
    H = w_hh_e.shape[0]

    def gru(x, h, w_ih, w_hh, b_ih, b_hh):
        gi = x @ w_ih + b_ih
        gh = h @ w_hh + b_hh
        r = jax.nn.sigmoid(gi[:, :H] + gh[:, :H])
        z = jax.nn.sigmoid(gi[:, H:2 * H] + gh[:, H:2 * H])
        n = jnp.tanh(gi[:, 2 * H:] + r * gh[:, 2 * H:])
        return (1.0 - z) * n + z * h

    h = jnp.zeros((B, H), jnp.float32)
    for t in range(S):
        h = gru(input_seq[:, t, :], h, w_ih_e, w_hh_e, b_ih_e, b_hh_e)
    y_prev = input_seq[:, -1, 0:1]
    outs = []
    for i in range(T):
        step_in = jnp.concatenate([y_prev, decoder_features[:, i, :]], axis=1)
        h = gru(step_in, h, w_ih_d, w_hh_d, b_ih_d, b_hh_d)
        y = h @ w_out + b_out
        y_prev = y
        outs.append(y[:, 0])
    return jnp.stack(outs, axis=1)


if __name__ == "__main__":
    B, S, F_ENC = 8, 8, 4        # batch, sequence length, encoder features
    F_DEC = 2                    # per-step decoder features
    HIDDEN = 32
    OUTPUT_SIZE = 3

    key = jax.random.PRNGKey(0)
    k_x, k_d, k_p = jax.random.split(key, 3)
    input_seq = jax.random.normal(k_x, (B, S, F_ENC), jnp.float32)
    decoder_features = jax.random.normal(k_d, (B, OUTPUT_SIZE, F_DEC), jnp.float32)
    params = make_params(k_p, F_ENC, F_DEC, HIDDEN)
    prep = prepare_params(params, HIDDEN)

    out = encoder_decoder_forward(input_seq, decoder_features, prep)
    out = jax.block_until_ready(out)

    ref = reference_forward(input_seq, decoder_features, params)
    assert out.shape == (B, OUTPUT_SIZE)
    assert jnp.allclose(out, ref, atol=1e-4, rtol=1e-4), "mismatch vs reference"

    print("KERNEL_OK")
</pallas_src>

<mosaic_0001>
module attributes {stable_mosaic.version = 11 : i64} {
  func.func @enc_dec_kernel(%arg0: memref<64x4xf32, #tpu.memory_space<vmem>>, %arg1: memref<24x2xf32, #tpu.memory_space<vmem>>, %arg2: memref<4x384xf32, #tpu.memory_space<vmem>>, %arg3: memref<128x384xf32, #tpu.memory_space<vmem>>, %arg4: memref<1x384xf32, #tpu.memory_space<vmem>>, %arg5: memref<1x128xf32, #tpu.memory_space<vmem>>, %arg6: memref<2x384xf32, #tpu.memory_space<vmem>>, %arg7: memref<128x384xf32, #tpu.memory_space<vmem>>, %arg8: memref<1x384xf32, #tpu.memory_space<vmem>>, %arg9: memref<1x128xf32, #tpu.memory_space<vmem>>, %arg10: memref<1x384xf32, #tpu.memory_space<vmem>>, %arg11: memref<1x128xf32, #tpu.memory_space<vmem>>, %arg12: memref<1x1xf32, #tpu.memory_space<vmem>>, %arg13: memref<8x3xf32, #tpu.memory_space<vmem>>, %arg14: memref<64x384xf32, #tpu.memory_space<vmem>>, %arg15: memref<24x384xf32, #tpu.memory_space<vmem>>) attributes {dimension_semantics = [], scalar_prefetch = 0 : i64, scratch_operands = 2 : i64, tpu.core_type = #tpu.core_type<tc>} {
    %c0 = arith.constant 0 : index
    %c0_0 = arith.constant 0 : index
    %0 = vector.load %arg0[%c0, %c0_0] : memref<64x4xf32, #tpu.memory_space<vmem>>, vector<64x4xf32>
    %c0_1 = arith.constant 0 : index
    %c0_2 = arith.constant 0 : index
    %1 = vector.load %arg2[%c0_1, %c0_2] : memref<4x384xf32, #tpu.memory_space<vmem>>, vector<4x384xf32>
    %cst = arith.constant dense<0.000000e+00> : vector<64x384xf32>
    %2 = tpu.matmul %0, %1, %cst {dimension_numbers = #tpu.dot_dimension_numbers<[1], [0], [0], [1], [0, 0, 1, 1], [], []>} : vector<64x4xf32>, vector<4x384xf32>, vector<64x384xf32> -> vector<64x384xf32>
    %c0_3 = arith.constant 0 : index
    %c0_4 = arith.constant 0 : index
    %3 = vector.load %arg4[%c0_3, %c0_4] : memref<1x384xf32, #tpu.memory_space<vmem>>, vector<1x384xf32>
    %4 = vector.broadcast %3 : vector<1x384xf32> to vector<64x384xf32>
    %5 = arith.addf %2, %4 : vector<64x384xf32>
    %c0_5 = arith.constant 0 : index
    %c0_6 = arith.constant 0 : index
    %6 = vector.load %arg14[%c0_5, %c0_6] : memref<64x384xf32, #tpu.memory_space<vmem>>, vector<64x384xf32>
    tpu.vector_store %arg14[%c0_5, %c0_6], %5 {strides = array<i32>} : memref<64x384xf32, #tpu.memory_space<vmem>>, vector<64x384xf32>,
    %c0_7 = arith.constant 0 : index
    %c0_8 = arith.constant 0 : index
    %7 = vector.load %arg1[%c0_7, %c0_8] : memref<24x2xf32, #tpu.memory_space<vmem>>, vector<24x2xf32>
    %c0_9 = arith.constant 0 : index
    %c0_10 = arith.constant 0 : index
    %8 = vector.load %arg6[%c0_9, %c0_10] : memref<2x384xf32, #tpu.memory_space<vmem>>, vector<2x384xf32>
    %cst_11 = arith.constant dense<0.000000e+00> : vector<24x384xf32>
    %9 = tpu.matmul %7, %8, %cst_11 {dimension_numbers = #tpu.dot_dimension_numbers<[1], [0], [0], [1], [0, 0, 1, 1], [], []>} : vector<24x2xf32>, vector<2x384xf32>, vector<24x384xf32> -> vector<24x384xf32>
    %c0_12 = arith.constant 0 : index
    %c0_13 = arith.constant 0 : index
    %10 = vector.load %arg8[%c0_12, %c0_13] : memref<1x384xf32, #tpu.memory_space<vmem>>, vector<1x384xf32>
    %11 = vector.broadcast %10 : vector<1x384xf32> to vector<24x384xf32>
    %12 = arith.addf %9, %11 : vector<24x384xf32>
    %c0_14 = arith.constant 0 : index
    %c0_15 = arith.constant 0 : index
    %13 = vector.load %arg15[%c0_14, %c0_15] : memref<24x384xf32, #tpu.memory_space<vmem>>, vector<24x384xf32>
    tpu.vector_store %arg15[%c0_14, %c0_15], %12 {strides = array<i32>} : memref<24x384xf32, #tpu.memory_space<vmem>>, vector<24x384xf32>,
    %c0_16 = arith.constant 0 : index
    %c0_17 = arith.constant 0 : index
    %14 = vector.load %arg5[%c0_16, %c0_17] : memref<1x128xf32, #tpu.memory_space<vmem>>, vector<1x128xf32>
    %c0_18 = arith.constant 0 : index
    %c0_19 = arith.constant 0 : index
    %15 = vector.load %arg9[%c0_18, %c0_19] : memref<1x128xf32, #tpu.memory_space<vmem>>, vector<1x128xf32>
    %c0_20 = arith.constant 0 : index
    %c0_21 = arith.constant 0 : index
    %16 = vector.load %arg10[%c0_20, %c0_21] : memref<1x384xf32, #tpu.memory_space<vmem>>, vector<1x384xf32>
    %c0_22 = arith.constant 0 : index
    %c0_23 = arith.constant 0 : index
    %17 = vector.load %arg11[%c0_22, %c0_23] : memref<1x128xf32, #tpu.memory_space<vmem>>, vector<1x128xf32>
    %c0_24 = arith.constant 0 : index
    %c0_25 = arith.constant 0 : index
    %18 = vector.load %arg12[%c0_24, %c0_25] : memref<1x1xf32, #tpu.memory_space<vmem>>, vector<1x1xf32>
    %cst_26 = arith.constant 0.000000e+00 : f32
    %19 = vector.broadcast %cst_26 : f32 to vector<8x128xf32>
    %c0_27 = arith.constant 0 : index
    %c0_28 = arith.constant 0 : index
    %20 = vector.load %arg14[%c0_27, %c0_28] : memref<64x384xf32, #tpu.memory_space<vmem>>, vector<8x384xf32>
    %cst_29 = arith.constant 0.000000e+00 : f32
    %21 = vector.broadcast %cst_29 : f32 to vector<8x384xf32>
    %22 = vector.extract_strided_slice %20 {offsets = [0, 0], sizes = [8, 128], strides = [1, 1]} : vector<8x384xf32> to vector<8x128xf32>
    %23 = vector.extract_strided_slice %21 {offsets = [0, 0], sizes = [8, 128], strides = [1, 1]} : vector<8x384xf32> to vector<8x128xf32>
    %24 = arith.addf %22, %23 : vector<8x128xf32>
    %25 = arith.negf %24 : vector<8x128xf32>
    %26 = math.exp %25 : vector<8x128xf32>
    %cst_30 = arith.constant 1.000000e+00 : f32
    %27 = vector.broadcast %cst_30 : f32 to vector<8x128xf32>
    %28 = arith.addf %27, %26 : vector<8x128xf32>
    %29 = arith.divf %27, %28 : vector<8x128xf32>
    %30 = vector.extract_strided_slice %20 {offsets = [0, 128], sizes = [8, 128], strides = [1, 1]} : vector<8x384xf32> to vector<8x128xf32>
    %31 = vector.extract_strided_slice %21 {offsets = [0, 128], sizes = [8, 128], strides = [1, 1]} : vector<8x384xf32> to vector<8x128xf32>
    %32 = arith.addf %30, %31 : vector<8x128xf32>
    %33 = arith.negf %32 : vector<8x128xf32>
    %34 = math.exp %33 : vector<8x128xf32>
    %cst_31 = arith.constant 1.000000e+00 : f32
    %35 = vector.broadcast %cst_31 : f32 to vector<8x128xf32>
    %36 = arith.addf %35, %34 : vector<8x128xf32>
    %37 = arith.divf %35, %36 : vector<8x128xf32>
    %38 = vector.extract_strided_slice %20 {offsets = [0, 256], sizes = [8, 128], strides = [1, 1]} : vector<8x384xf32> to vector<8x128xf32>
    %39 = vector.extract_strided_slice %21 {offsets = [0, 256], sizes = [8, 128], strides = [1, 1]} : vector<8x384xf32> to vector<8x128xf32>
    %40 = vector.broadcast %14 : vector<1x128xf32> to vector<8x128xf32>
    %41 = arith.addf %39, %40 : vector<8x128xf32>
    %42 = arith.mulf %29, %41 : vector<8x128xf32>
    %43 = arith.addf %38, %42 : vector<8x128xf32>
    %44 = math.tanh %43 : vector<8x128xf32>
    %cst_32 = arith.constant 1.000000e+00 : f32
    %45 = vector.broadcast %cst_32 : f32 to vector<8x128xf32>
    %46 = arith.subf %45, %37 : vector<8x128xf32>
    %47 = arith.mulf %46, %44 : vector<8x128xf32>
    %48 = arith.mulf %37, %19 : vector<8x128xf32>
    %49 = arith.addf %47, %48 : vector<8x128xf32>
    %c8 = arith.constant 8 : index
    %c0_33 = arith.constant 0 : index
    %50 = vector.load %arg14[%c8, %c0_33] : memref<64x384xf32, #tpu.memory_space<vmem>>, vector<8x384xf32>
    %c0_34 = arith.constant 0 : index
    %c0_35 = arith.constant 0 : index
    %51 = vector.load %arg3[%c0_34, %c0_35] : memref<128x384xf32, #tpu.memory_space<vmem>>, vector<128x384xf32>
    %cst_36 = arith.constant dense<0.000000e+00> : vector<8x384xf32>
    %52 = tpu.matmul %49, %51, %cst_36 {dimension_numbers = #tpu.dot_dimension_numbers<[1], [0], [0], [1], [0, 0, 1, 1], [], []>} : vector<8x128xf32>, vector<128x384xf32>, vector<8x384xf32> -> vector<8x384xf32>
    %53 = vector.extract_strided_slice %50 {offsets = [0, 0], sizes = [8, 128], strides = [1, 1]} : vector<8x384xf32> to vector<8x128xf32>
    %54 = vector.extract_strided_slice %52 {offsets = [0, 0], sizes = [8, 128], strides = [1, 1]} : vector<8x384xf32> to vector<8x128xf32>
    %55 = arith.addf %53, %54 : vector<8x128xf32>
    %56 = arith.negf %55 : vector<8x128xf32>
    %57 = math.exp %56 : vector<8x128xf32>
    %cst_37 = arith.constant 1.000000e+00 : f32
    %58 = vector.broadcast %cst_37 : f32 to vector<8x128xf32>
    %59 = arith.addf %58, %57 : vector<8x128xf32>
    %60 = arith.divf %58, %59 : vector<8x128xf32>
    %61 = vector.extract_strided_slice %50 {offsets = [0, 128], sizes = [8, 128], strides = [1, 1]} : vector<8x384xf32> to vector<8x128xf32>
    %62 = vector.extract_strided_slice %52 {offsets = [0, 128], sizes = [8, 128], strides = [1, 1]} : vector<8x384xf32> to vector<8x128xf32>
    %63 = arith.addf %61, %62 : vector<8x128xf32>
    %64 = arith.negf %63 : vector<8x128xf32>
    %65 = math.exp %64 : vector<8x128xf32>
    %cst_38 = arith.constant 1.000000e+00 : f32
    %66 = vector.broadcast %cst_38 : f32 to vector<8x128xf32>
    %67 = arith.addf %66, %65 : vector<8x128xf32>
    %68 = arith.divf %66, %67 : vector<8x128xf32>
    %69 = vector.extract_strided_slice %50 {offsets = [0, 256], sizes = [8, 128], strides = [1, 1]} : vector<8x384xf32> to vector<8x128xf32>
    %70 = vector.extract_strided_slice %52 {offsets = [0, 256], sizes = [8, 128], strides = [1, 1]} : vector<8x384xf32> to vector<8x128xf32>
    %71 = vector.broadcast %14 : vector<1x128xf32> to vector<8x128xf32>
    %72 = arith.addf %70, %71 : vector<8x128xf32>
    %73 = arith.mulf %60, %72 : vector<8x128xf32>
    %74 = arith.addf %69, %73 : vector<8x128xf32>
    %75 = math.tanh %74 : vector<8x128xf32>
    %cst_39 = arith.constant 1.000000e+00 : f32
    %76 = vector.broadcast %cst_39 : f32 to vector<8x128xf32>
    %77 = arith.subf %76, %68 : vector<8x128xf32>
    %78 = arith.mulf %77, %75 : vector<8x128xf32>
    %79 = arith.mulf %68, %49 : vector<8x128xf32>
    %80 = arith.addf %78, %79 : vector<8x128xf32>
    %c16 = arith.constant 16 : index
    %c0_40 = arith.constant 0 : index
    %81 = vector.load %arg14[%c16, %c0_40] : memref<64x384xf32, #tpu.memory_space<vmem>>, vector<8x384xf32>
    %c0_41 = arith.constant 0 : index
    %c0_42 = arith.constant 0 : index
    %82 = vector.load %arg3[%c0_41, %c0_42] : memref<128x384xf32, #tpu.memory_space<vmem>>, vector<128x384xf32>
    %cst_43 = arith.constant dense<0.000000e+00> : vector<8x384xf32>
    %83 = tpu.matmul %80, %82, %cst_43 {dimension_numbers = #tpu.dot_dimension_numbers<[1], [0], [0], [1], [0, 0, 1, 1], [], []>} : vector<8x128xf32>, vector<128x384xf32>, vector<8x384xf32> -> vector<8x384xf32>
    %84 = vector.extract_strided_slice %81 {offsets = [0, 0], sizes = [8, 128], strides = [1, 1]} : vector<8x384xf32> to vector<8x128xf32>
    %85 = vector.extract_strided_slice %83 {offsets = [0, 0], sizes = [8, 128], strides = [1, 1]} : vector<8x384xf32> to vector<8x128xf32>
    %86 = arith.addf %84, %85 : vector<8x128xf32>
    %87 = arith.negf %86 : vector<8x128xf32>
    %88 = math.exp %87 : vector<8x128xf32>
    %cst_44 = arith.constant 1.000000e+00 : f32
    %89 = vector.broadcast %cst_44 : f32 to vector<8x128xf32>
    %90 = arith.addf %89, %88 : vector<8x128xf32>
    %91 = arith.divf %89, %90 : vector<8x128xf32>
    %92 = vector.extract_strided_slice %81 {offsets = [0, 128], sizes = [8, 128], strides = [1, 1]} : vector<8x384xf32> to vector<8x128xf32>
    %93 = vector.extract_strided_slice %83 {offsets = [0, 128], sizes = [8, 128], strides = [1, 1]} : vector<8x384xf32> to vector<8x128xf32>
    %94 = arith.addf %92, %93 : vector<8x128xf32>
    %95 = arith.negf %94 : vector<8x128xf32>
    %96 = math.exp %95 : vector<8x128xf32>
    %cst_45 = arith.constant 1.000000e+00 : f32
    %97 = vector.broadcast %cst_45 : f32 to vector<8x128xf32>
    %98 = arith.addf %97, %96 : vector<8x128xf32>
    %99 = arith.divf %97, %98 : vector<8x128xf32>
    %100 = vector.extract_strided_slice %81 {offsets = [0, 256], sizes = [8, 128], strides = [1, 1]} : vector<8x384xf32> to vector<8x128xf32>
    %101 = vector.extract_strided_slice %83 {offsets = [0, 256], sizes = [8, 128], strides = [1, 1]} : vector<8x384xf32> to vector<8x128xf32>
    %102 = vector.broadcast %14 : vector<1x128xf32> to vector<8x128xf32>
    %103 = arith.addf %101, %102 : vector<8x128xf32>
    %104 = arith.mulf %91, %103 : vector<8x128xf32>
    %105 = arith.addf %100, %104 : vector<8x128xf32>
    %106 = math.tanh %105 : vector<8x128xf32>
    %cst_46 = arith.constant 1.000000e+00 : f32
    %107 = vector.broadcast %cst_46 : f32 to vector<8x128xf32>
    %108 = arith.subf %107, %99 : vector<8x128xf32>
    %109 = arith.mulf %108, %106 : vector<8x128xf32>
    %110 = arith.mulf %99, %80 : vector<8x128xf32>
    %111 = arith.addf %109, %110 : vector<8x128xf32>
    %c24 = arith.constant 24 : index
    %c0_47 = arith.constant 0 : index
    %112 = vector.load %arg14[%c24, %c0_47] : memref<64x384xf32, #tpu.memory_space<vmem>>, vector<8x384xf32>
    %c0_48 = arith.constant 0 : index
    %c0_49 = arith.constant 0 : index
    %113 = vector.load %arg3[%c0_48, %c0_49] : memref<128x384xf32, #tpu.memory_space<vmem>>, vector<128x384xf32>
    %cst_50 = arith.constant dense<0.000000e+00> : vector<8x384xf32>
    %114 = tpu.matmul %111, %113, %cst_50 {dimension_numbers = #tpu.dot_dimension_numbers<[1], [0], [0], [1], [0, 0, 1, 1], [], []>} : vector<8x128xf32>, vector<128x384xf32>, vector<8x384xf32> -> vector<8x384xf32>
    %115 = vector.extract_strided_slice %112 {offsets = [0, 0], sizes = [8, 128], strides = [1, 1]} : vector<8x384xf32> to vector<8x128xf32>
    %116 = vector.extract_strided_slice %114 {offsets = [0, 0], sizes = [8, 128], strides = [1, 1]} : vector<8x384xf32> to vector<8x128xf32>
    %117 = arith.addf %115, %116 : vector<8x128xf32>
    %118 = arith.negf %117 : vector<8x128xf32>
    %119 = math.exp %118 : vector<8x128xf32>
    %cst_51 = arith.constant 1.000000e+00 : f32
    %120 = vector.broadcast %cst_51 : f32 to vector<8x128xf32>
    %121 = arith.addf %120, %119 : vector<8x128xf32>
    %122 = arith.divf %120, %121 : vector<8x128xf32>
    %123 = vector.extract_strided_slice %112 {offsets = [0, 128], sizes = [8, 128], strides = [1, 1]} : vector<8x384xf32> to vector<8x128xf32>
    %124 = vector.extract_strided_slice %114 {offsets = [0, 128], sizes = [8, 128], strides = [1, 1]} : vector<8x384xf32> to vector<8x128xf32>
    %125 = arith.addf %123, %124 : vector<8x128xf32>
    %126 = arith.negf %125 : vector<8x128xf32>
    %127 = math.exp %126 : vector<8x128xf32>
    %cst_52 = arith.constant 1.000000e+00 : f32
    %128 = vector.broadcast %cst_52 : f32 to vector<8x128xf32>
    %129 = arith.addf %128, %127 : vector<8x128xf32>
    %130 = arith.divf %128, %129 : vector<8x128xf32>
    %131 = vector.extract_strided_slice %112 {offsets = [0, 256], sizes = [8, 128], strides = [1, 1]} : vector<8x384xf32> to vector<8x128xf32>
    %132 = vector.extract_strided_slice %114 {offsets = [0, 256], sizes = [8, 128], strides = [1, 1]} : vector<8x384xf32> to vector<8x128xf32>
    %133 = vector.broadcast %14 : vector<1x128xf32> to vector<8x128xf32>
    %134 = arith.addf %132, %133 : vector<8x128xf32>
    %135 = arith.mulf %122, %134 : vector<8x128xf32>
    %136 = arith.addf %131, %135 : vector<8x128xf32>
    %137 = math.tanh %136 : vector<8x128xf32>
    %cst_53 = arith.constant 1.000000e+00 : f32
    %138 = vector.broadcast %cst_53 : f32 to vector<8x128xf32>
    %139 = arith.subf %138, %130 : vector<8x128xf32>
    %140 = arith.mulf %139, %137 : vector<8x128xf32>
    %141 = arith.mulf %130, %111 : vector<8x128xf32>
    %142 = arith.addf %140, %141 : vector<8x128xf32>
    %c32 = arith.constant 32 : index
    %c0_54 = arith.constant 0 : index
    %143 = vector.load %arg14[%c32, %c0_54] : memref<64x384xf32, #tpu.memory_space<vmem>>, vector<8x384xf32>
    %c0_55 = arith.constant 0 : index
    %c0_56 = arith.constant 0 : index
    %144 = vector.load %arg3[%c0_55, %c0_56] : memref<128x384xf32, #tpu.memory_space<vmem>>, vector<128x384xf32>
    %cst_57 = arith.constant dense<0.000000e+00> : vector<8x384xf32>
    %145 = tpu.matmul %142, %144, %cst_57 {dimension_numbers = #tpu.dot_dimension_numbers<[1], [0], [0], [1], [0, 0, 1, 1], [], []>} : vector<8x128xf32>, vector<128x384xf32>, vector<8x384xf32> -> vector<8x384xf32>
    %146 = vector.extract_strided_slice %143 {offsets = [0, 0], sizes = [8, 128], strides = [1, 1]} : vector<8x384xf32> to vector<8x128xf32>
    %147 = vector.extract_strided_slice %145 {offsets = [0, 0], sizes = [8, 128], strides = [1, 1]} : vector<8x384xf32> to vector<8x128xf32>
    %148 = arith.addf %146, %147 : vector<8x128xf32>
    %149 = arith.negf %148 : vector<8x128xf32>
    %150 = math.exp %149 : vector<8x128xf32>
    %cst_58 = arith.constant 1.000000e+00 : f32
    %151 = vector.broadcast %cst_58 : f32 to vector<8x128xf32>
    %152 = arith.addf %151, %150 : vector<8x128xf32>
    %153 = arith.divf %151, %152 : vector<8x128xf32>
    %154 = vector.extract_strided_slice %143 {offsets = [0, 128], sizes = [8, 128], strides = [1, 1]} : vector<8x384xf32> to vector<8x128xf32>
    %155 = vector.extract_strided_slice %145 {offsets = [0, 128], sizes = [8, 128], strides = [1, 1]} : vector<8x384xf32> to vector<8x128xf32>
    %156 = arith.addf %154, %155 : vector<8x128xf32>
    %157 = arith.negf %156 : vector<8x128xf32>
    %158 = math.exp %157 : vector<8x128xf32>
    %cst_59 = arith.constant 1.000000e+00 : f32
    %159 = vector.broadcast %cst_59 : f32 to vector<8x128xf32>
    %160 = arith.addf %159, %158 : vector<8x128xf32>
    %161 = arith.divf %159, %160 : vector<8x128xf32>
    %162 = vector.extract_strided_slice %143 {offsets = [0, 256], sizes = [8, 128], strides = [1, 1]} : vector<8x384xf32> to vector<8x128xf32>
    %163 = vector.extract_strided_slice %145 {offsets = [0, 256], sizes = [8, 128], strides = [1, 1]} : vector<8x384xf32> to vector<8x128xf32>
    %164 = vector.broadcast %14 : vector<1x128xf32> to vector<8x128xf32>
    %165 = arith.addf %163, %164 : vector<8x128xf32>
    %166 = arith.mulf %153, %165 : vector<8x128xf32>
    %167 = arith.addf %162, %166 : vector<8x128xf32>
    %168 = math.tanh %167 : vector<8x128xf32>
    %cst_60 = arith.constant 1.000000e+00 : f32
    %169 = vector.broadcast %cst_60 : f32 to vector<8x128xf32>
    %170 = arith.subf %169, %161 : vector<8x128xf32>
    %171 = arith.mulf %170, %168 : vector<8x128xf32>
    %172 = arith.mulf %161, %142 : vector<8x128xf32>
    %173 = arith.addf %171, %172 : vector<8x128xf32>
    %c40 = arith.constant 40 : index
    %c0_61 = arith.constant 0 : index
    %174 = vector.load %arg14[%c40, %c0_61] : memref<64x384xf32, #tpu.memory_space<vmem>>, vector<8x384xf32>
    %c0_62 = arith.constant 0 : index
    %c0_63 = arith.constant 0 : index
    %175 = vector.load %arg3[%c0_62, %c0_63] : memref<128x384xf32, #tpu.memory_space<vmem>>, vector<128x384xf32>
    %cst_64 = arith.constant dense<0.000000e+00> : vector<8x384xf32>
    %176 = tpu.matmul %173, %175, %cst_64 {dimension_numbers = #tpu.dot_dimension_numbers<[1], [0], [0], [1], [0, 0, 1, 1], [], []>} : vector<8x128xf32>, vector<128x384xf32>, vector<8x384xf32> -> vector<8x384xf32>
    %177 = vector.extract_strided_slice %174 {offsets = [0, 0], sizes = [8, 128], strides = [1, 1]} : vector<8x384xf32> to vector<8x128xf32>
    %178 = vector.extract_strided_slice %176 {offsets = [0, 0], sizes = [8, 128], strides = [1, 1]} : vector<8x384xf32> to vector<8x128xf32>
    %179 = arith.addf %177, %178 : vector<8x128xf32>
    %180 = arith.negf %179 : vector<8x128xf32>
    %181 = math.exp %180 : vector<8x128xf32>
    %cst_65 = arith.constant 1.000000e+00 : f32
    %182 = vector.broadcast %cst_65 : f32 to vector<8x128xf32>
    %183 = arith.addf %182, %181 : vector<8x128xf32>
    %184 = arith.divf %182, %183 : vector<8x128xf32>
    %185 = vector.extract_strided_slice %174 {offsets = [0, 128], sizes = [8, 128], strides = [1, 1]} : vector<8x384xf32> to vector<8x128xf32>
    %186 = vector.extract_strided_slice %176 {offsets = [0, 128], sizes = [8, 128], strides = [1, 1]} : vector<8x384xf32> to vector<8x128xf32>
    %187 = arith.addf %185, %186 : vector<8x128xf32>
    %188 = arith.negf %187 : vector<8x128xf32>
    %189 = math.exp %188 : vector<8x128xf32>
    %cst_66 = arith.constant 1.000000e+00 : f32
    %190 = vector.broadcast %cst_66 : f32 to vector<8x128xf32>
    %191 = arith.addf %190, %189 : vector<8x128xf32>
    %192 = arith.divf %190, %191 : vector<8x128xf32>
    %193 = vector.extract_strided_slice %174 {offsets = [0, 256], sizes = [8, 128], strides = [1, 1]} : vector<8x384xf32> to vector<8x128xf32>
    %194 = vector.extract_strided_slice %176 {offsets = [0, 256], sizes = [8, 128], strides = [1, 1]} : vector<8x384xf32> to vector<8x128xf32>
    %195 = vector.broadcast %14 : vector<1x128xf32> to vector<8x128xf32>
    %196 = arith.addf %194, %195 : vector<8x128xf32>
    %197 = arith.mulf %184, %196 : vector<8x128xf32>
    %198 = arith.addf %193, %197 : vector<8x128xf32>
    %199 = math.tanh %198 : vector<8x128xf32>
    %cst_67 = arith.constant 1.000000e+00 : f32
    %200 = vector.broadcast %cst_67 : f32 to vector<8x128xf32>
    %201 = arith.subf %200, %192 : vector<8x128xf32>
    %202 = arith.mulf %201, %199 : vector<8x128xf32>
    %203 = arith.mulf %192, %173 : vector<8x128xf32>
    %204 = arith.addf %202, %203 : vector<8x128xf32>
    %c48 = arith.constant 48 : index
    %c0_68 = arith.constant 0 : index
    %205 = vector.load %arg14[%c48, %c0_68] : memref<64x384xf32, #tpu.memory_space<vmem>>, vector<8x384xf32>
    %c0_69 = arith.constant 0 : index
    %c0_70 = arith.constant 0 : index
    %206 = vector.load %arg3[%c0_69, %c0_70] : memref<128x384xf32, #tpu.memory_space<vmem>>, vector<128x384xf32>
    %cst_71 = arith.constant dense<0.000000e+00> : vector<8x384xf32>
    %207 = tpu.matmul %204, %206, %cst_71 {dimension_numbers = #tpu.dot_dimension_numbers<[1], [0], [0], [1], [0, 0, 1, 1], [], []>} : vector<8x128xf32>, vector<128x384xf32>, vector<8x384xf32> -> vector<8x384xf32>
    %208 = vector.extract_strided_slice %205 {offsets = [0, 0], sizes = [8, 128], strides = [1, 1]} : vector<8x384xf32> to vector<8x128xf32>
    %209 = vector.extract_strided_slice %207 {offsets = [0, 0], sizes = [8, 128], strides = [1, 1]} : vector<8x384xf32> to vector<8x128xf32>
    %210 = arith.addf %208, %209 : vector<8x128xf32>
    %211 = arith.negf %210 : vector<8x128xf32>
    %212 = math.exp %211 : vector<8x128xf32>
    %cst_72 = arith.constant 1.000000e+00 : f32
    %213 = vector.broadcast %cst_72 : f32 to vector<8x128xf32>
    %214 = arith.addf %213, %212 : vector<8x128xf32>
    %215 = arith.divf %213, %214 : vector<8x128xf32>
    %216 = vector.extract_strided_slice %205 {offsets = [0, 128], sizes = [8, 128], strides = [1, 1]} : vector<8x384xf32> to vector<8x128xf32>
    %217 = vector.extract_strided_slice %207 {offsets = [0, 128], sizes = [8, 128], strides = [1, 1]} : vector<8x384xf32> to vector<8x128xf32>
    %218 = arith.addf %216, %217 : vector<8x128xf32>
    %219 = arith.negf %218 : vector<8x128xf32>
    %220 = math.exp %219 : vector<8x128xf32>
    %cst_73 = arith.constant 1.000000e+00 : f32
    %221 = vector.broadcast %cst_73 : f32 to vector<8x128xf32>
    %222 = arith.addf %221, %220 : vector<8x128xf32>
    %223 = arith.divf %221, %222 : vector<8x128xf32>
    %224 = vector.extract_strided_slice %205 {offsets = [0, 256], sizes = [8, 128], strides = [1, 1]} : vector<8x384xf32> to vector<8x128xf32>
    %225 = vector.extract_strided_slice %207 {offsets = [0, 256], sizes = [8, 128], strides = [1, 1]} : vector<8x384xf32> to vector<8x128xf32>
    %226 = vector.broadcast %14 : vector<1x128xf32> to vector<8x128xf32>
    %227 = arith.addf %225, %226 : vector<8x128xf32>
    %228 = arith.mulf %215, %227 : vector<8x128xf32>
    %229 = arith.addf %224, %228 : vector<8x128xf32>
    %230 = math.tanh %229 : vector<8x128xf32>
    %cst_74 = arith.constant 1.000000e+00 : f32
    %231 = vector.broadcast %cst_74 : f32 to vector<8x128xf32>
    %232 = arith.subf %231, %223 : vector<8x128xf32>
    %233 = arith.mulf %232, %230 : vector<8x128xf32>
    %234 = arith.mulf %223, %204 : vector<8x128xf32>
    %235 = arith.addf %233, %234 : vector<8x128xf32>
    %c56 = arith.constant 56 : index
    %c0_75 = arith.constant 0 : index
    %236 = vector.load %arg14[%c56, %c0_75] : memref<64x384xf32, #tpu.memory_space<vmem>>, vector<8x384xf32>
    %c0_76 = arith.constant 0 : index
    %c0_77 = arith.constant 0 : index
    %237 = vector.load %arg3[%c0_76, %c0_77] : memref<128x384xf32, #tpu.memory_space<vmem>>, vector<128x384xf32>
    %cst_78 = arith.constant dense<0.000000e+00> : vector<8x384xf32>
    %238 = tpu.matmul %235, %237, %cst_78 {dimension_numbers = #tpu.dot_dimension_numbers<[1], [0], [0], [1], [0, 0, 1, 1], [], []>} : vector<8x128xf32>, vector<128x384xf32>, vector<8x384xf32> -> vector<8x384xf32>
    %239 = vector.extract_strided_slice %236 {offsets = [0, 0], sizes = [8, 128], strides = [1, 1]} : vector<8x384xf32> to vector<8x128xf32>
    %240 = vector.extract_strided_slice %238 {offsets = [0, 0], sizes = [8, 128], strides = [1, 1]} : vector<8x384xf32> to vector<8x128xf32>
    %241 = arith.addf %239, %240 : vector<8x128xf32>
    %242 = arith.negf %241 : vector<8x128xf32>
    %243 = math.exp %242 : vector<8x128xf32>
    %cst_79 = arith.constant 1.000000e+00 : f32
    %244 = vector.broadcast %cst_79 : f32 to vector<8x128xf32>
    %245 = arith.addf %244, %243 : vector<8x128xf32>
    %246 = arith.divf %244, %245 : vector<8x128xf32>
    %247 = vector.extract_strided_slice %236 {offsets = [0, 128], sizes = [8, 128], strides = [1, 1]} : vector<8x384xf32> to vector<8x128xf32>
    %248 = vector.extract_strided_slice %238 {offsets = [0, 128], sizes = [8, 128], strides = [1, 1]} : vector<8x384xf32> to vector<8x128xf32>
    %249 = arith.addf %247, %248 : vector<8x128xf32>
    %250 = arith.negf %249 : vector<8x128xf32>
    %251 = math.exp %250 : vector<8x128xf32>
    %cst_80 = arith.constant 1.000000e+00 : f32
    %252 = vector.broadcast %cst_80 : f32 to vector<8x128xf32>
    %253 = arith.addf %252, %251 : vector<8x128xf32>
    %254 = arith.divf %252, %253 : vector<8x128xf32>
    %255 = vector.extract_strided_slice %236 {offsets = [0, 256], sizes = [8, 128], strides = [1, 1]} : vector<8x384xf32> to vector<8x128xf32>
    %256 = vector.extract_strided_slice %238 {offsets = [0, 256], sizes = [8, 128], strides = [1, 1]} : vector<8x384xf32> to vector<8x128xf32>
    %257 = vector.broadcast %14 : vector<1x128xf32> to vector<8x128xf32>
    %258 = arith.addf %256, %257 : vector<8x128xf32>
    %259 = arith.mulf %246, %258 : vector<8x128xf32>
    %260 = arith.addf %255, %259 : vector<8x128xf32>
    %261 = math.tanh %260 : vector<8x128xf32>
    %cst_81 = arith.constant 1.000000e+00 : f32
    %262 = vector.broadcast %cst_81 : f32 to vector<8x128xf32>
    %263 = arith.subf %262, %254 : vector<8x128xf32>
    %264 = arith.mulf %263, %261 : vector<8x128xf32>
    %265 = arith.mulf %254, %235 : vector<8x128xf32>
    %266 = arith.addf %264, %265 : vector<8x128xf32>
    %c56_82 = arith.constant 56 : index
    %c0_83 = arith.constant 0 : index
    %267 = vector.load %arg0[%c56_82, %c0_83] : memref<64x4xf32, #tpu.memory_space<vmem>>, vector<8x4xf32>
    %268 = vector.extract_strided_slice %267 {offsets = [0, 0], sizes = [8, 1], strides = [1, 1]} : vector<8x4xf32> to vector<8x1xf32>
    %c0_84 = arith.constant 0 : index
    %c0_85 = arith.constant 0 : index
    %269 = vector.load %arg7[%c0_84, %c0_85] : memref<128x384xf32, #tpu.memory_space<vmem>>, vector<128x384xf32>
    %cst_86 = arith.constant dense<0.000000e+00> : vector<8x384xf32>
    %270 = tpu.matmul %266, %269, %cst_86 {dimension_numbers = #tpu.dot_dimension_numbers<[1], [0], [0], [1], [0, 0, 1, 1], [], []>} : vector<8x128xf32>, vector<128x384xf32>, vector<8x384xf32> -> vector<8x384xf32>
    %c0_87 = arith.constant 0 : index
    %c0_88 = arith.constant 0 : index
    %271 = vector.load %arg15[%c0_87, %c0_88] : memref<24x384xf32, #tpu.memory_space<vmem>>, vector<8x384xf32>
    %272 = vector.broadcast %268 : vector<8x1xf32> to vector<8x384xf32>
    %273 = vector.broadcast %16 : vector<1x384xf32> to vector<8x384xf32>
    %274 = arith.mulf %272, %273 : vector<8x384xf32>
    %275 = arith.addf %271, %274 : vector<8x384xf32>
    %276 = vector.extract_strided_slice %275 {offsets = [0, 0], sizes = [8, 128], strides = [1, 1]} : vector<8x384xf32> to vector<8x128xf32>
    %277 = vector.extract_strided_slice %270 {offsets = [0, 0], sizes = [8, 128], strides = [1, 1]} : vector<8x384xf32> to vector<8x128xf32>
    %278 = arith.addf %276, %277 : vector<8x128xf32>
    %279 = arith.negf %278 : vector<8x128xf32>
    %280 = math.exp %279 : vector<8x128xf32>
    %cst_89 = arith.constant 1.000000e+00 : f32
    %281 = vector.broadcast %cst_89 : f32 to vector<8x128xf32>
    %282 = arith.addf %281, %280 : vector<8x128xf32>
    %283 = arith.divf %281, %282 : vector<8x128xf32>
    %284 = vector.extract_strided_slice %275 {offsets = [0, 128], sizes = [8, 128], strides = [1, 1]} : vector<8x384xf32> to vector<8x128xf32>
    %285 = vector.extract_strided_slice %270 {offsets = [0, 128], sizes = [8, 128], strides = [1, 1]} : vector<8x384xf32> to vector<8x128xf32>
    %286 = arith.addf %284, %285 : vector<8x128xf32>
    %287 = arith.negf %286 : vector<8x128xf32>
    %288 = math.exp %287 : vector<8x128xf32>
    %cst_90 = arith.constant 1.000000e+00 : f32
    %289 = vector.broadcast %cst_90 : f32 to vector<8x128xf32>
    %290 = arith.addf %289, %288 : vector<8x128xf32>
    %291 = arith.divf %289, %290 : vector<8x128xf32>
    %292 = vector.extract_strided_slice %275 {offsets = [0, 256], sizes = [8, 128], strides = [1, 1]} : vector<8x384xf32> to vector<8x128xf32>
    %293 = vector.extract_strided_slice %270 {offsets = [0, 256], sizes = [8, 128], strides = [1, 1]} : vector<8x384xf32> to vector<8x128xf32>
    %294 = vector.broadcast %15 : vector<1x128xf32> to vector<8x128xf32>
    %295 = arith.addf %293, %294 : vector<8x128xf32>
    %296 = arith.mulf %283, %295 : vector<8x128xf32>
    %297 = arith.addf %292, %296 : vector<8x128xf32>
    %298 = math.tanh %297 : vector<8x128xf32>
    %cst_91 = arith.constant 1.000000e+00 : f32
    %299 = vector.broadcast %cst_91 : f32 to vector<8x128xf32>
    %300 = arith.subf %299, %291 : vector<8x128xf32>
    %301 = arith.mulf %300, %298 : vector<8x128xf32>
    %302 = arith.mulf %291, %266 : vector<8x128xf32>
    %303 = arith.addf %301, %302 : vector<8x128xf32>
    %304 = vector.broadcast %17 : vector<1x128xf32> to vector<8x128xf32>
    %305 = arith.mulf %303, %304 : vector<8x128xf32>
    %cst_92 = arith.constant dense<0.000000e+00> : vector<8xf32>
    %306 = vector.multi_reduction <add>, %305, %cst_92 [1] : vector<8x128xf32> to vector<8xf32>
    %307 = vector.shape_cast %306 : vector<8xf32> to vector<8x1xf32>
    %308 = vector.broadcast %18 : vector<1x1xf32> to vector<8x1xf32>
    %309 = arith.addf %307, %308 : vector<8x1xf32>
    %c0_93 = arith.constant 0 : index
    %c0_94 = arith.constant 0 : index
    %310 = vector.load %arg7[%c0_93, %c0_94] : memref<128x384xf32, #tpu.memory_space<vmem>>, vector<128x384xf32>
    %cst_95 = arith.constant dense<0.000000e+00> : vector<8x384xf32>
    %311 = tpu.matmul %303, %310, %cst_95 {dimension_numbers = #tpu.dot_dimension_numbers<[1], [0], [0], [1], [0, 0, 1, 1], [], []>} : vector<8x128xf32>, vector<128x384xf32>, vector<8x384xf32> -> vector<8x384xf32>
    %c8_96 = arith.constant 8 : index
    %c0_97 = arith.constant 0 : index
    %312 = vector.load %arg15[%c8_96, %c0_97] : memref<24x384xf32, #tpu.memory_space<vmem>>, vector<8x384xf32>
    %313 = vector.broadcast %309 : vector<8x1xf32> to vector<8x384xf32>
    %314 = vector.broadcast %16 : vector<1x384xf32> to vector<8x384xf32>
    %315 = arith.mulf %313, %314 : vector<8x384xf32>
    %316 = arith.addf %312, %315 : vector<8x384xf32>
    %317 = vector.extract_strided_slice %316 {offsets = [0, 0], sizes = [8, 128], strides = [1, 1]} : vector<8x384xf32> to vector<8x128xf32>
    %318 = vector.extract_strided_slice %311 {offsets = [0, 0], sizes = [8, 128], strides = [1, 1]} : vector<8x384xf32> to vector<8x128xf32>
    %319 = arith.addf %317, %318 : vector<8x128xf32>
    %320 = arith.negf %319 : vector<8x128xf32>
    %321 = math.exp %320 : vector<8x128xf32>
    %cst_98 = arith.constant 1.000000e+00 : f32
    %322 = vector.broadcast %cst_98 : f32 to vector<8x128xf32>
    %323 = arith.addf %322, %321 : vector<8x128xf32>
    %324 = arith.divf %322, %323 : vector<8x128xf32>
    %325 = vector.extract_strided_slice %316 {offsets = [0, 128], sizes = [8, 128], strides = [1, 1]} : vector<8x384xf32> to vector<8x128xf32>
    %326 = vector.extract_strided_slice %311 {offsets = [0, 128], sizes = [8, 128], strides = [1, 1]} : vector<8x384xf32> to vector<8x128xf32>
    %327 = arith.addf %325, %326 : vector<8x128xf32>
    %328 = arith.negf %327 : vector<8x128xf32>
    %329 = math.exp %328 : vector<8x128xf32>
    %cst_99 = arith.constant 1.000000e+00 : f32
    %330 = vector.broadcast %cst_99 : f32 to vector<8x128xf32>
    %331 = arith.addf %330, %329 : vector<8x128xf32>
    %332 = arith.divf %330, %331 : vector<8x128xf32>
    %333 = vector.extract_strided_slice %316 {offsets = [0, 256], sizes = [8, 128], strides = [1, 1]} : vector<8x384xf32> to vector<8x128xf32>
    %334 = vector.extract_strided_slice %311 {offsets = [0, 256], sizes = [8, 128], strides = [1, 1]} : vector<8x384xf32> to vector<8x128xf32>
    %335 = vector.broadcast %15 : vector<1x128xf32> to vector<8x128xf32>
    %336 = arith.addf %334, %335 : vector<8x128xf32>
    %337 = arith.mulf %324, %336 : vector<8x128xf32>
    %338 = arith.addf %333, %337 : vector<8x128xf32>
    %339 = math.tanh %338 : vector<8x128xf32>
    %cst_100 = arith.constant 1.000000e+00 : f32
    %340 = vector.broadcast %cst_100 : f32 to vector<8x128xf32>
    %341 = arith.subf %340, %332 : vector<8x128xf32>
    %342 = arith.mulf %341, %339 : vector<8x128xf32>
    %343 = arith.mulf %332, %303 : vector<8x128xf32>
    %344 = arith.addf %342, %343 : vector<8x128xf32>
    %345 = vector.broadcast %17 : vector<1x128xf32> to vector<8x128xf32>
    %346 = arith.mulf %344, %345 : vector<8x128xf32>
    %cst_101 = arith.constant dense<0.000000e+00> : vector<8xf32>
    %347 = vector.multi_reduction <add>, %346, %cst_101 [1] : vector<8x128xf32> to vector<8xf32>
    %348 = vector.shape_cast %347 : vector<8xf32> to vector<8x1xf32>
    %349 = vector.broadcast %18 : vector<1x1xf32> to vector<8x1xf32>
    %350 = arith.addf %348, %349 : vector<8x1xf32>
    %c0_102 = arith.constant 0 : index
    %c0_103 = arith.constant 0 : index
    %351 = vector.load %arg7[%c0_102, %c0_103] : memref<128x384xf32, #tpu.memory_space<vmem>>, vector<128x384xf32>
    %cst_104 = arith.constant dense<0.000000e+00> : vector<8x384xf32>
    %352 = tpu.matmul %344, %351, %cst_104 {dimension_numbers = #tpu.dot_dimension_numbers<[1], [0], [0], [1], [0, 0, 1, 1], [], []>} : vector<8x128xf32>, vector<128x384xf32>, vector<8x384xf32> -> vector<8x384xf32>
    %c16_105 = arith.constant 16 : index
    %c0_106 = arith.constant 0 : index
    %353 = vector.load %arg15[%c16_105, %c0_106] : memref<24x384xf32, #tpu.memory_space<vmem>>, vector<8x384xf32>
    %354 = vector.broadcast %350 : vector<8x1xf32> to vector<8x384xf32>
    %355 = vector.broadcast %16 : vector<1x384xf32> to vector<8x384xf32>
    %356 = arith.mulf %354, %355 : vector<8x384xf32>
    %357 = arith.addf %353, %356 : vector<8x384xf32>
    %358 = vector.extract_strided_slice %357 {offsets = [0, 0], sizes = [8, 128], strides = [1, 1]} : vector<8x384xf32> to vector<8x128xf32>
    %359 = vector.extract_strided_slice %352 {offsets = [0, 0], sizes = [8, 128], strides = [1, 1]} : vector<8x384xf32> to vector<8x128xf32>
    %360 = arith.addf %358, %359 : vector<8x128xf32>
    %361 = arith.negf %360 : vector<8x128xf32>
    %362 = math.exp %361 : vector<8x128xf32>
    %cst_107 = arith.constant 1.000000e+00 : f32
    %363 = vector.broadcast %cst_107 : f32 to vector<8x128xf32>
    %364 = arith.addf %363, %362 : vector<8x128xf32>
    %365 = arith.divf %363, %364 : vector<8x128xf32>
    %366 = vector.extract_strided_slice %357 {offsets = [0, 128], sizes = [8, 128], strides = [1, 1]} : vector<8x384xf32> to vector<8x128xf32>
    %367 = vector.extract_strided_slice %352 {offsets = [0, 128], sizes = [8, 128], strides = [1, 1]} : vector<8x384xf32> to vector<8x128xf32>
    %368 = arith.addf %366, %367 : vector<8x128xf32>
    %369 = arith.negf %368 : vector<8x128xf32>
    %370 = math.exp %369 : vector<8x128xf32>
    %cst_108 = arith.constant 1.000000e+00 : f32
    %371 = vector.broadcast %cst_108 : f32 to vector<8x128xf32>
    %372 = arith.addf %371, %370 : vector<8x128xf32>
    %373 = arith.divf %371, %372 : vector<8x128xf32>
    %374 = vector.extract_strided_slice %357 {offsets = [0, 256], sizes = [8, 128], strides = [1, 1]} : vector<8x384xf32> to vector<8x128xf32>
    %375 = vector.extract_strided_slice %352 {offsets = [0, 256], sizes = [8, 128], strides = [1, 1]} : vector<8x384xf32> to vector<8x128xf32>
    %376 = vector.broadcast %15 : vector<1x128xf32> to vector<8x128xf32>
    %377 = arith.addf %375, %376 : vector<8x128xf32>
    %378 = arith.mulf %365, %377 : vector<8x128xf32>
    %379 = arith.addf %374, %378 : vector<8x128xf32>
    %380 = math.tanh %379 : vector<8x128xf32>
    %cst_109 = arith.constant 1.000000e+00 : f32
    %381 = vector.broadcast %cst_109 : f32 to vector<8x128xf32>
    %382 = arith.subf %381, %373 : vector<8x128xf32>
    %383 = arith.mulf %382, %380 : vector<8x128xf32>
    %384 = arith.mulf %373, %344 : vector<8x128xf32>
    %385 = arith.addf %383, %384 : vector<8x128xf32>
    %386 = vector.broadcast %17 : vector<1x128xf32> to vector<8x128xf32>
    %387 = arith.mulf %385, %386 : vector<8x128xf32>
    %cst_110 = arith.constant dense<0.000000e+00> : vector<8xf32>
    %388 = vector.multi_reduction <add>, %387, %cst_110 [1] : vector<8x128xf32> to vector<8xf32>
    %389 = vector.shape_cast %388 : vector<8xf32> to vector<8x1xf32>
    %390 = vector.broadcast %18 : vector<1x1xf32> to vector<8x1xf32>
    %391 = arith.addf %389, %390 : vector<8x1xf32>
    %392 = tpu.concatenate %309, %350, %391 in 1 : vector<8x1xf32>, vector<8x1xf32>, vector<8x1xf32> -> vector<8x3xf32>
    %c0_111 = arith.constant 0 : index
    %c0_112 = arith.constant 0 : index
    %393 = vector.load %arg13[%c0_111, %c0_112] : memref<8x3xf32, #tpu.memory_space<vmem>>, vector<8x3xf32>
    tpu.vector_store %arg13[%c0_111, %c0_112], %392 {strides = array<i32>} : memref<8x3xf32, #tpu.memory_space<vmem>>, vector<8x3xf32>,
    return
  }
}

</mosaic_0001>

<llo_original>
// kernel: tpu_custom_call.1
$region0: #{tpu_custom_call.1}
  #allocation0 [shape = 'u32[]', space=smem, size = 0x4, offset = 0x4, fixed_abs, tag = 'smem constant byte address 0x4 - core index']
  #allocation1 [shape = 'u32[144,128]{1,0:T(1,128)}', space=vmem, size = 0x12000, scoped, tag = 'internal scratch']
  #allocation2 [shape = 'f32[64,384]{1,0:T(8,128)}', space=vmem, size = 0x18000, scoped, tag = 'scratch operand']
  #allocation3 [shape = 'f32[24,384]{1,0:T(8,128)}', space=vmem, size = 0x9000, scoped, tag = 'scratch operand']
  #allocation4 [shape = 'f32[1,1]{1,0:T(1,128)S(1)}', space=vmem, size = 0x200, scoped, tag = 'scoped memory for tpu_custom_call.1']
  %s0 = inlined_call_operand.vmem [shape: f32[64,4], index: 0, kind: input, shape index: {}]
  %s1 = inlined_call_operand.vmem [shape: f32[24,2], index: 1, kind: input, shape index: {}]
  %s2 = inlined_call_operand.vmem [shape: f32[4,384], index: 2, kind: input, shape index: {}]
  %s3 = inlined_call_operand.hbm [shape: f32[128,384], index: 3, kind: input, shape index: {}]
  %s4 = inlined_call_operand.vmem [shape: f32[1,384], index: 4, kind: input, shape index: {}]
  %s5 = inlined_call_operand.vmem [shape: f32[1,128], index: 5, kind: input, shape index: {}]
  %s6 = inlined_call_operand.vmem [shape: f32[2,384], index: 6, kind: input, shape index: {}]
  %s7 = inlined_call_operand.hbm [shape: f32[128,384], index: 7, kind: input, shape index: {}]
  %s8 = inlined_call_operand.vmem [shape: f32[1,384], index: 8, kind: input, shape index: {}]
  %s9 = inlined_call_operand.vmem [shape: f32[1,128], index: 9, kind: input, shape index: {}]
  %s10 = inlined_call_operand.vmem [shape: f32[1,384], index: 10, kind: input, shape index: {}]
  %s11 = inlined_call_operand.vmem [shape: f32[1,128], index: 11, kind: input, shape index: {}]
  %s12 = inlined_call_operand.<no memory space> [shape: f32[1,1], index: 12, kind: input, shape index: {}]
  %s13 = inlined_call_operand.vmem [shape: f32[8,3], index: 13, kind: output, shape index: {}]
  %s14 = sld [smem:[#allocation0]]
  $region70: #{tpu_custom_call.1} parent=0
    _
  %s16 = ssub.s32 1, %s14
  %s17 = scalar_select 0, %s16, %s14
  %v18 = vstv %s12
  %19 = vst [vmem:[#allocation4] sm:$0x1] %v18
  $region1: #{tpu_custom_call.1} parent=0
    #allocation5 [shape = 'u8[196608]{0}', space=vmem, size = 0x30000, scoped, tag = 'input window, operand 3, single buffered']
    #allocation6 [shape = 's32[1]{0}', space=sflag, size = 0x4, scoped, tag = 'scoped memory for tpu_custom_call.1']
    #allocation7 [shape = 'u8[196608]{0}', space=vmem, size = 0x30000, scoped, tag = 'input window, operand 7, single buffered']
    #allocation8 [shape = 's32[1]{0}', space=sflag, size = 0x4, scoped, tag = 'scoped memory for tpu_custom_call.1']
    %20 = vsyncpa [#allocation6], 0
    %21 = vsyncpa [#allocation8], 0
    // Predicated region
    $region2: #{tpu_custom_call.1} parent=1 // pred_check
      _
    $region3: #{tpu_custom_call.1} parent=1 // pred_check_branch
      %23 = sbr.rel (0) target = $region5
    $region4: #{tpu_custom_call.1} parent=1 // pred_region
      _
    $region5: #{tpu_custom_call.1} parent=1 // pred_fallthru
      _
    // Predicated region
    $region6: #{tpu_custom_call.1} parent=1 // pred_check
      _
    $region7: #{tpu_custom_call.1} parent=1 // pred_check_branch
      %25 = sbr.rel (0) target = $region9
    $region8: #{tpu_custom_call.1} parent=1 // pred_region
      _
    $region9: #{tpu_custom_call.1} parent=1 // pred_fallthru
      _
    // Predicated region
    $region10: #{tpu_custom_call.1} parent=1 // pred_check
      _
    $region11: #{tpu_custom_call.1} parent=1 // pred_check_branch
      %27 = sbr.rel (0) target = $region13
    $region12: #{tpu_custom_call.1} parent=1 // pred_region
      _
    $region13: #{tpu_custom_call.1} parent=1 // pred_fallthru
      _
    // Predicated region
    $region14: #{tpu_custom_call.1} parent=1 // pred_check
      _
    $region15: #{tpu_custom_call.1} parent=1 // pred_check_branch
      %29 = sbr.rel (0) target = $region17
    $region16: #{tpu_custom_call.1} parent=1 // pred_region
      %s31 = ssub.s32 6144, 6144
      %32 = vsyncadd [#allocation6], %s31
      %s33 = sshll.u32 [#allocation5], 4
      %s34 = int_to_ptr.vmem [resolvable:$true] %s33
      %39 = dma.hbm_to_vmem [thread:$0]  %s3, 6144, %s34, [#allocation6], 384, 384, 24
    $region17: #{tpu_custom_call.1} parent=1 // pred_fallthru
      _
    // Predicated region
    $region18: #{tpu_custom_call.1} parent=1 // pred_check
      _
    $region19: #{tpu_custom_call.1} parent=1 // pred_check_branch
      %41 = sbr.rel (0) target = $region21
    $region20: #{tpu_custom_call.1} parent=1 // pred_region
      _
    $region21: #{tpu_custom_call.1} parent=1 // pred_fallthru
      _
    // Predicated region
    $region22: #{tpu_custom_call.1} parent=1 // pred_check
      _
    $region23: #{tpu_custom_call.1} parent=1 // pred_check_branch
      %43 = sbr.rel (0) target = $region25
    $region24: #{tpu_custom_call.1} parent=1 // pred_region
      _
    $region25: #{tpu_custom_call.1} parent=1 // pred_fallthru
      _
    // Predicated region
    $region26: #{tpu_custom_call.1} parent=1 // pred_check
      _
    $region27: #{tpu_custom_call.1} parent=1 // pred_check_branch
      %45 = sbr.rel (0) target = $region29
    $region28: #{tpu_custom_call.1} parent=1 // pred_region
      _
    $region29: #{tpu_custom_call.1} parent=1 // pred_fallthru
      _
    // Predicated region
    $region30: #{tpu_custom_call.1} parent=1 // pred_check
      _
    $region31: #{tpu_custom_call.1} parent=1 // pred_check_branch
      %47 = sbr.rel (0) target = $region33
    $region32: #{tpu_custom_call.1} parent=1 // pred_region
      %s49 = ssub.s32 6144, 6144
      %50 = vsyncadd [#allocation8], %s49
      %s51 = sshll.u32 [#allocation7], 4
      %s52 = int_to_ptr.vmem [resolvable:$true] %s51
      %57 = dma.hbm_to_vmem [thread:$0]  %s7, 6144, %s52, [#allocation8], 384, 384, 24
    $region33: #{tpu_custom_call.1} parent=1 // pred_fallthru
      _
    // Predicated region
    $region34: #{tpu_custom_call.1} parent=1 // pred_check
      _
    $region35: #{tpu_custom_call.1} parent=1 // pred_check_branch
      %59 = sbr.rel (0) target = $region37
    $region36: #{tpu_custom_call.1} parent=1 // pred_region
      _
    $region37: #{tpu_custom_call.1} parent=1 // pred_fallthru
      _
    // Predicated region
    $region38: #{tpu_custom_call.1} parent=1 // pred_check
      _
    $region39: #{tpu_custom_call.1} parent=1 // pred_check_branch
      %61 = sbr.rel (0) target = $region41
    $region40: #{tpu_custom_call.1} parent=1 // pred_region
      _
    $region41: #{tpu_custom_call.1} parent=1 // pred_fallthru
      _
    // Predicated region
    $region42: #{tpu_custom_call.1} parent=1 // pred_check
      _
    $region43: #{tpu_custom_call.1} parent=1 // pred_check_branch
      %63 = sbr.rel (0) target = $region45
    $region44: #{tpu_custom_call.1} parent=1 // pred_region
      _
    $region45: #{tpu_custom_call.1} parent=1 // pred_fallthru
      _
    // Predicated region
    $region46: #{tpu_custom_call.1} parent=1 // pred_check
      _
    $region47: #{tpu_custom_call.1} parent=1 // pred_check_branch
      %65 = sbr.rel (0) target = $region49
    $region48: #{tpu_custom_call.1} parent=1 // pred_region
      _
    $region49: #{tpu_custom_call.1} parent=1 // pred_fallthru
      _
    // Predicated region
    $region50: #{tpu_custom_call.1} parent=1 // pred_check
      _
    $region51: #{tpu_custom_call.1} parent=1 // pred_check_branch
      %67 = sbr.rel (0) target = $region53
    $region52: #{tpu_custom_call.1} parent=1 // pred_region
      _
    $region53: #{tpu_custom_call.1} parent=1 // pred_fallthru
      _
    // Predicated region
    $region54: #{tpu_custom_call.1} parent=1 // pred_check
      _
    $region55: #{tpu_custom_call.1} parent=1 // pred_check_branch
      %69 = sbr.rel (0) target = $region57
    $region56: #{tpu_custom_call.1} parent=1 // pred_region
      %70 = dma.done [#allocation6], 6144
    $region57: #{tpu_custom_call.1} parent=1 // pred_fallthru
      _
    // Predicated region
    $region58: #{tpu_custom_call.1} parent=1 // pred_check
      _
    $region59: #{tpu_custom_call.1} parent=1 // pred_check_branch
      %72 = sbr.rel (0) target = $region61
    $region60: #{tpu_custom_call.1} parent=1 // pred_region
      %73 = dma.done [#allocation8], 6144
    $region61: #{tpu_custom_call.1} parent=1 // pred_fallthru
      _
    %v74 = vld [vmem:[%s0] sm:$0xff]
    %v75 = vld [vmem:[%s0 + $0x8] sm:$0xff]
    %v76 = vld [vmem:[%s0 + $0x10] sm:$0xff]
    %v77 = vld [vmem:[%s0 + $0x18] sm:$0xff]
    %v78 = vld [vmem:[%s0 + $0x20] sm:$0xff]
    %v79 = vld [vmem:[%s0 + $0x28] sm:$0xff]
    %v80 = vld [vmem:[%s0 + $0x30] sm:$0xff]
    %v81 = vld [vmem:[%s0 + $0x38] sm:$0xff]
    %v82 = vld [vmem:[%s2] sm:$0xff]
    %v83 = vld [vmem:[%s2 + $0x8] sm:$0xf]
    %v84 = vld [vmem:[%s4] sm:$0x7]
    %v86 = vlaneseq
    %v87 = vshrl.u32 %v86, 7
    %v88 = vsub.s32 0, %v87
    %v89 = vrot.slane %v84, %v88
    %v90 = vlaneseq
    %v91 = vshrl.u32 %v90, 7
    %v92 = vsub.s32 1, %v91
    %v93 = vrot.slane %v84, %v92
    %v94 = vlaneseq
    %v95 = vshrl.u32 %v94, 7
    %v96 = vsub.s32 2, %v95
    %v97 = vrot.slane %v84, %v96
    %v103 = vcombine.high %v82, %v82
    %vm104 = vcmask 31744
    %v106 = vsel %vm104, %v74, 0
    %v109 = vsel %vm104, %v75, 0
    %v112 = vsel %vm104, %v76, 0
    %v115 = vsel %vm104, %v77, 0
    %v118 = vsel %vm104, %v78, 0
    %v121 = vsel %vm104, %v79, 0
    %v124 = vsel %vm104, %v80, 0
    %v127 = vsel %vm104, %v81, 0
    %vm129 = vcmask 1043456
    %v130 = vsel %vm129, %v82, 0
    %v132 = vsel %vm129, %v103, 0
    %v134 = vsel %vm129, %v83, 0
    %136 = vmatprep.subr.mxu0 0.0
    %137 = vmatpush1.msra.mxu0 0.0
    %138 = vmatprep.subr.mxu0 0.0
    %139 = vmatpush1.msra.mxu0 0.0
    %140 = vmatprep.subr.mxu0 0.0
    %141 = vmatpush1.msra.mxu0 0.0
    %142 = vmatprep.subr.mxu0 0.0
    %143 = vmatpush1.msra.mxu0 0.0
    %144 = vmatprep.subr.mxu0 0.0
    %145 = vmatpush1.msra.mxu0 0.0
    %146 = vmatprep.subr.mxu0 0.0
    %147 = vmatpush1.msra.mxu0 0.0
    %148 = vmatprep.subr.mxu0 0.0
    %149 = vmatpush1.msra.mxu0 0.0
    %150 = vmatprep.subr.mxu0 0.0
    %151 = vmatpush1.msra.mxu0 0.0
    %152 = vmatprep.subr.mxu0 0.0
    %153 = vmatpush1.msra.mxu0 0.0
    %154 = vmatprep.subr.mxu0 0.0
    %155 = vmatpush1.msra.mxu0 0.0
    %156 = vmatprep.subr.mxu0 0.0
    %157 = vmatpush1.msra.mxu0 0.0
    %158 = vmatprep.subr.mxu0 0.0
    %159 = vmatpush1.msra.mxu0 0.0
    %160 = vmatprep.subr.mxu0 0.0
    %161 = vmatpush1.msra.mxu0 0.0
    %162 = vmatprep.subr.mxu0 0.0
    %163 = vmatpush1.msra.mxu0 0.0
    %164 = vmatprep.subr.mxu0 0.0
    %165 = vmatpush1.msra.mxu0 0.0
    %166 = vmatprep.subr.mxu0 %v132
    %167 = vmatpush1.msra.mxu0 %v130
    %168 = vmatprep.subr.mxu0 0.0
    %169 = vmatpush2.msra.mxu0 0.0
    %170 = vmatprep.subr.mxu0 0.0
    %171 = vmatpush2.msra.mxu0 0.0
    %172 = vmatprep.subr.mxu0 0.0
    %173 = vmatpush2.msra.mxu0 0.0
    %174 = vmatprep.subr.mxu0 0.0
    %175 = vmatpush2.msra.mxu0 0.0
    %176 = vmatprep.subr.mxu0 0.0
    %177 = vmatpush2.msra.mxu0 0.0
    %178 = vmatprep.subr.mxu0 0.0
    %179 = vmatpush2.msra.mxu0 0.0
    %180 = vmatprep.subr.mxu0 0.0
    %181 = vmatpush2.msra.mxu0 0.0
    %182 = vmatprep.subr.mxu0 0.0
    %183 = vmatpush2.msra.mxu0 0.0
    %184 = vmatprep.subr.mxu0 0.0
    %185 = vmatpush2.msra.mxu0 0.0
    %186 = vmatprep.subr.mxu0 0.0
    %187 = vmatpush2.msra.mxu0 0.0
    %188 = vmatprep.subr.mxu0 0.0
    %189 = vmatpush2.msra.mxu0 0.0
    %190 = vmatprep.subr.mxu0 0.0
    %191 = vmatpush2.msra.mxu0 0.0
    %192 = vmatprep.subr.mxu0 0.0
    %193 = vmatpush2.msra.mxu0 0.0
    %194 = vmatprep.subr.mxu0 0.0
    %195 = vmatpush2.msra.mxu0 0.0
    %196 = vmatprep.subr.mxu0 0.0
    %197 = vmatpush2.msra.mxu0 0.0
    %198 = vmatprep.subr.mxu0 0.0
    %199 = vmatpush2.msra.mxu0 0.0
    %200 = vmatprep.mubr.f32.mxu0 0.0
    %201 = vmatmul.mubr.f32.gmra.mxu0 %v106
    %v202 = vpop.f32.mrf.mxu0
    %v203 = vadd.f32 %v89, %v202
    %v204 = vpop.f32.mrf.mxu0
    %v205 = vadd.f32 %v93, %v204
    %206 = vmatprep.mubr.f32.mxu0 0.0
    %207 = vmatmul.mubr.f32.gmra.mxu0 %v109
    %v208 = vpop.f32.mrf.mxu0
    %v209 = vadd.f32 %v89, %v208
    %v210 = vpop.f32.mrf.mxu0
    %v211 = vadd.f32 %v93, %v210
    %212 = vmatprep.mubr.f32.mxu0 0.0
    %213 = vmatmul.mubr.f32.gmra.mxu0 %v112
    %v214 = vpop.f32.mrf.mxu0
    %v215 = vadd.f32 %v89, %v214
    %v216 = vpop.f32.mrf.mxu0
    %v217 = vadd.f32 %v93, %v216
    %218 = vmatprep.mubr.f32.mxu0 0.0
    %219 = vmatmul.mubr.f32.gmra.mxu0 %v115
    %v220 = vpop.f32.mrf.mxu0
    %v221 = vadd.f32 %v89, %v220
    %v222 = vpop.f32.mrf.mxu0
    %v223 = vadd.f32 %v93, %v222
    %224 = vmatprep.mubr.f32.mxu0 0.0
    %225 = vmatmul.mubr.f32.gmra.mxu0 %v118
    %v226 = vpop.f32.mrf.mxu0
    %v227 = vadd.f32 %v89, %v226
    %v228 = vpop.f32.mrf.mxu0
    %v229 = vadd.f32 %v93, %v228
    %230 = vmatprep.mubr.f32.mxu0 0.0
    %231 = vmatmul.mubr.f32.gmra.mxu0 %v121
    %v232 = vpop.f32.mrf.mxu0
    %v233 = vadd.f32 %v89, %v232
    %v234 = vpop.f32.mrf.mxu0
    %v235 = vadd.f32 %v93, %v234
    %236 = vmatprep.mubr.f32.mxu0 0.0
    %237 = vmatmul.mubr.f32.gmra.mxu0 %v124
    %v238 = vpop.f32.mrf.mxu0
    %v239 = vadd.f32 %v89, %v238
    %v240 = vpop.f32.mrf.mxu0
    %v241 = vadd.f32 %v93, %v240
    %242 = vmatprep.mubr.f32.mxu0 0.0
    %243 = vmatmul.mubr.f32.gmra.mxu0 %v127
    %v244 = vpop.f32.mrf.mxu0
    %v245 = vadd.f32 %v89, %v244
    %v246 = vpop.f32.mrf.mxu0
    %v247 = vadd.f32 %v93, %v246
    %248 = vdwg.mxu0
    %249 = vmatprep.subr.mxu0 0.0
    %250 = vmatpush1.msra.mxu0 0.0
    %251 = vmatprep.subr.mxu0 0.0
    %252 = vmatpush1.msra.mxu0 0.0
    %253 = vmatprep.subr.mxu0 0.0
    %254 = vmatpush1.msra.mxu0 0.0
    %255 = vmatprep.subr.mxu0 0.0
    %256 = vmatpush1.msra.mxu0 0.0
    %257 = vmatprep.subr.mxu0 0.0
    %258 = vmatpush1.msra.mxu0 0.0
    %259 = vmatprep.subr.mxu0 0.0
    %260 = vmatpush1.msra.mxu0 0.0
    %261 = vmatprep.subr.mxu0 0.0
    %262 = vmatpush1.msra.mxu0 0.0
    %263 = vmatprep.subr.mxu0 0.0
    %264 = vmatpush1.msra.mxu0 0.0
    %265 = vmatprep.subr.mxu0 0.0
    %266 = vmatpush1.msra.mxu0 0.0
    %267 = vmatprep.subr.mxu0 0.0
    %268 = vmatpush1.msra.mxu0 0.0
    %269 = vmatprep.subr.mxu0 0.0
    %270 = vmatpush1.msra.mxu0 0.0
    %271 = vmatprep.subr.mxu0 0.0
    %272 = vmatpush1.msra.mxu0 0.0
    %273 = vmatprep.subr.mxu0 0.0
    %274 = vmatpush1.msra.mxu0 0.0
    %275 = vmatprep.subr.mxu0 0.0
    %276 = vmatpush1.msra.mxu0 0.0
    %277 = vmatprep.subr.mxu0 0.0
    %278 = vmatpush1.msra.mxu0 0.0
    %279 = vmatprep.subr.mxu0 0.0
    %280 = vmatpush1.msra.mxu0 %v134
    %281 = vmatprep.subr.mxu0 0.0
    %282 = vmatpush2.msra.mxu0 0.0
    %283 = vmatprep.subr.mxu0 0.0
    %284 = vmatpush2.msra.mxu0 0.0
    %285 = vmatprep.subr.mxu0 0.0
    %286 = vmatpush2.msra.mxu0 0.0
    %287 = vmatprep.subr.mxu0 0.0
    %288 = vmatpush2.msra.mxu0 0.0
    %289 = vmatprep.subr.mxu0 0.0
    %290 = vmatpush2.msra.mxu0 0.0
    %291 = vmatprep.subr.mxu0 0.0
    %292 = vmatpush2.msra.mxu0 0.0
    %293 = vmatprep.subr.mxu0 0.0
    %294 = vmatpush2.msra.mxu0 0.0
    %295 = vmatprep.subr.mxu0 0.0
    %296 = vmatpush2.msra.mxu0 0.0
    %297 = vmatprep.subr.mxu0 0.0
    %298 = vmatpush2.msra.mxu0 0.0
    %299 = vmatprep.subr.mxu0 0.0
    %300 = vmatpush2.msra.mxu0 0.0
    %301 = vmatprep.subr.mxu0 0.0
    %302 = vmatpush2.msra.mxu0 0.0
    %303 = vmatprep.subr.mxu0 0.0
    %304 = vmatpush2.msra.mxu0 0.0
    %305 = vmatprep.subr.mxu0 0.0
    %306 = vmatpush2.msra.mxu0 0.0
    %307 = vmatprep.subr.mxu0 0.0
    %308 = vmatpush2.msra.mxu0 0.0
    %309 = vmatprep.subr.mxu0 0.0
    %310 = vmatpush2.msra.mxu0 0.0
    %311 = vmatprep.subr.mxu0 0.0
    %312 = vmatpush2.msra.mxu0 0.0
    %313 = vmatprep.mubr.f32.mxu0 0.0
    %314 = vmatmul.mubr.f32.gmra.mxu0 %v106
    %v315 = vpop.f32.mrf.mxu0
    %v316 = vadd.f32 %v97, %v315
    %v317 = vpop.f32.mrf.mxu0
    %318 = vmatprep.mubr.f32.mxu0 0.0
    %319 = vmatmul.mubr.f32.gmra.mxu0 %v109
    %v320 = vpop.f32.mrf.mxu0
    %v321 = vadd.f32 %v97, %v320
    %v322 = vpop.f32.mrf.mxu0
    %323 = vmatprep.mubr.f32.mxu0 0.0
    %324 = vmatmul.mubr.f32.gmra.mxu0 %v112
    %v325 = vpop.f32.mrf.mxu0
    %v326 = vadd.f32 %v97, %v325
    %v327 = vpop.f32.mrf.mxu0
    %328 = vmatprep.mubr.f32.mxu0 0.0
    %329 = vmatmul.mubr.f32.gmra.mxu0 %v115
    %v330 = vpop.f32.mrf.mxu0
    %v331 = vadd.f32 %v97, %v330
    %v332 = vpop.f32.mrf.mxu0
    %333 = vmatprep.mubr.f32.mxu0 0.0
    %334 = vmatmul.mubr.f32.gmra.mxu0 %v118
    %v335 = vpop.f32.mrf.mxu0
    %v336 = vadd.f32 %v97, %v335
    %v337 = vpop.f32.mrf.mxu0
    %338 = vmatprep.mubr.f32.mxu0 0.0
    %339 = vmatmul.mubr.f32.gmra.mxu0 %v121
    %v340 = vpop.f32.mrf.mxu0
    %v341 = vadd.f32 %v97, %v340
    %v342 = vpop.f32.mrf.mxu0
    %343 = vmatprep.mubr.f32.mxu0 0.0
    %344 = vmatmul.mubr.f32.gmra.mxu0 %v124
    %v345 = vpop.f32.mrf.mxu0
    %v346 = vadd.f32 %v97, %v345
    %v347 = vpop.f32.mrf.mxu0
    %348 = vmatprep.mubr.f32.mxu0 0.0
    %349 = vmatmul.mubr.f32.gmra.mxu0 %v127
    %v350 = vpop.f32.mrf.mxu0
    %v351 = vadd.f32 %v97, %v350
    %v352 = vpop.f32.mrf.mxu0
    %353 = vdwg.mxu0
    %354 = vst [vmem:[#allocation2] sm:$0xff] %v203
    %355 = vst [vmem:[#allocation2 + $0x8] sm:$0xff] %v205
    %356 = vst [vmem:[#allocation2 + $0x10] sm:$0xff] %v316
    %357 = vst [vmem:[#allocation2 + $0x18] sm:$0xff] %v209
    %358 = vst [vmem:[#allocation2 + $0x20] sm:$0xff] %v211
    %359 = vst [vmem:[#allocation2 + $0x28] sm:$0xff] %v321
    %360 = vst [vmem:[#allocation2 + $0x30] sm:$0xff] %v215
    %361 = vst [vmem:[#allocation2 + $0x38] sm:$0xff] %v217
    %362 = vst [vmem:[#allocation2 + $0x40] sm:$0xff] %v326
    %363 = vst [vmem:[#allocation2 + $0x48] sm:$0xff] %v221
    %364 = vst [vmem:[#allocation2 + $0x50] sm:$0xff] %v223
    %365 = vst [vmem:[#allocation2 + $0x58] sm:$0xff] %v331
    %366 = vst [vmem:[#allocation2 + $0x60] sm:$0xff] %v227
    %367 = vst [vmem:[#allocation2 + $0x68] sm:$0xff] %v229
    %368 = vst [vmem:[#allocation2 + $0x70] sm:$0xff] %v336
    %369 = vst [vmem:[#allocation2 + $0x78] sm:$0xff] %v233
    %370 = vst [vmem:[#allocation2 + $0x80] sm:$0xff] %v235
    %371 = vst [vmem:[#allocation2 + $0x88] sm:$0xff] %v341
    %372 = vst [vmem:[#allocation2 + $0x90] sm:$0xff] %v239
    %373 = vst [vmem:[#allocation2 + $0x98] sm:$0xff] %v241
    %374 = vst [vmem:[#allocation2 + $0xa0] sm:$0xff] %v346
    %375 = vst [vmem:[#allocation2 + $0xa8] sm:$0xff] %v245
    %376 = vst [vmem:[#allocation2 + $0xb0] sm:$0xff] %v247
    %377 = vst [vmem:[#allocation2 + $0xb8] sm:$0xff] %v351
    %v378 = vld [vmem:[%s1] sm:$0xff]
    %v379 = vld [vmem:[%s1 + $0x8] sm:$0xff]
    %v380 = vld [vmem:[%s1 + $0x10] sm:$0xff]
    %v381 = vld [vmem:[%s6] sm:$0x3f]
    %v382 = vld [vmem:[%s8] sm:$0x7]
    %v384 = vlaneseq
    %v385 = vshrl.u32 %v384, 7
    %v386 = vsub.s32 0, %v385
    %v387 = vrot.slane %v382, %v386
    %v388 = vlaneseq
    %v389 = vshrl.u32 %v388, 7
    %v390 = vsub.s32 1, %v389
    %v391 = vrot.slane %v382, %v390
    %v392 = vlaneseq
    %v393 = vshrl.u32 %v392, 7
    %v394 = vsub.s32 2, %v393
    %v395 = vrot.slane %v382, %v394
    %v400 = vcombine.high %v381, %v381
    %v402 = vunpack.c.l.s4 1983009808
    %v403 = vunpack.c.0.s8 %v402
    %v404 = vlaneseq
    %v405 = vshrl.u32 %v404, 7
    %v406 = vsub.s32 %v403, %v405
    %v407 = vrot.slane %v381, %v406
    %v409 = vunpack.c.l.s4 1983009808
    %v410 = vunpack.c.0.s8 %v409
    %v411 = vlaneseq
    %v412 = vshrl.u32 %v411, 7
    %v413 = vsub.s32 %v410, %v412
    %v414 = vrot.slane %v400, %v413
    %v415 = vcombine.high %v407, %v407
    %vm416 = vcmask 15360
    %v418 = vsel %vm416, %v378, 0
    %v421 = vsel %vm416, %v379, 0
    %v424 = vsel %vm416, %v380, 0
    %vm426 = vcmask 1041408
    %v427 = vsel %vm426, %v407, 0
    %v429 = vsel %vm426, %v415, 0
    %v431 = vsel %vm426, %v414, 0
    %433 = vmatprep.subr.mxu0 0.0
    %434 = vmatpush1.msra.mxu0 0.0
    %435 = vmatprep.subr.mxu0 0.0
    %436 = vmatpush1.msra.mxu0 0.0
    %437 = vmatprep.subr.mxu0 0.0
    %438 = vmatpush1.msra.mxu0 0.0
    %439 = vmatprep.subr.mxu0 0.0
    %440 = vmatpush1.msra.mxu0 0.0
    %441 = vmatprep.subr.mxu0 0.0
    %442 = vmatpush1.msra.mxu0 0.0
    %443 = vmatprep.subr.mxu0 0.0
    %444 = vmatpush1.msra.mxu0 0.0
    %445 = vmatprep.subr.mxu0 0.0
    %446 = vmatpush1.msra.mxu0 0.0
    %447 = vmatprep.subr.mxu0 0.0
    %448 = vmatpush1.msra.mxu0 0.0
    %449 = vmatprep.subr.mxu0 0.0
    %450 = vmatpush1.msra.mxu0 0.0
    %451 = vmatprep.subr.mxu0 0.0
    %452 = vmatpush1.msra.mxu0 0.0
    %453 = vmatprep.subr.mxu0 0.0
    %454 = vmatpush1.msra.mxu0 0.0
    %455 = vmatprep.subr.mxu0 0.0
    %456 = vmatpush1.msra.mxu0 0.0
    %457 = vmatprep.subr.mxu0 0.0
    %458 = vmatpush1.msra.mxu0 0.0
    %459 = vmatprep.subr.mxu0 0.0
    %460 = vmatpush1.msra.mxu0 0.0
    %461 = vmatprep.subr.mxu0 0.0
    %462 = vmatpush1.msra.mxu0 0.0
    %463 = vmatprep.subr.mxu0 %v429
    %464 = vmatpush1.msra.mxu0 %v427
    %465 = vmatprep.subr.mxu0 0.0
    %466 = vmatpush2.msra.mxu0 0.0
    %467 = vmatprep.subr.mxu0 0.0
    %468 = vmatpush2.msra.mxu0 0.0
    %469 = vmatprep.subr.mxu0 0.0
    %470 = vmatpush2.msra.mxu0 0.0
    %471 = vmatprep.subr.mxu0 0.0
    %472 = vmatpush2.msra.mxu0 0.0
    %473 = vmatprep.subr.mxu0 0.0
    %474 = vmatpush2.msra.mxu0 0.0
    %475 = vmatprep.subr.mxu0 0.0
    %476 = vmatpush2.msra.mxu0 0.0
    %477 = vmatprep.subr.mxu0 0.0
    %478 = vmatpush2.msra.mxu0 0.0
    %479 = vmatprep.subr.mxu0 0.0
    %480 = vmatpush2.msra.mxu0 0.0
    %481 = vmatprep.subr.mxu0 0.0
    %482 = vmatpush2.msra.mxu0 0.0
    %483 = vmatprep.subr.mxu0 0.0
    %484 = vmatpush2.msra.mxu0 0.0
    %485 = vmatprep.subr.mxu0 0.0
    %486 = vmatpush2.msra.mxu0 0.0
    %487 = vmatprep.subr.mxu0 0.0
    %488 = vmatpush2.msra.mxu0 0.0
    %489 = vmatprep.subr.mxu0 0.0
    %490 = vmatpush2.msra.mxu0 0.0
    %491 = vmatprep.subr.mxu0 0.0
    %492 = vmatpush2.msra.mxu0 0.0
    %493 = vmatprep.subr.mxu0 0.0
    %494 = vmatpush2.msra.mxu0 0.0
    %495 = vmatprep.subr.mxu0 0.0
    %496 = vmatpush2.msra.mxu0 0.0
    %497 = vmatprep.mubr.f32.mxu0 0.0
    %498 = vmatmul.mubr.f32.gmra.mxu0 %v418
    %v499 = vpop.f32.mrf.mxu0
    %v500 = vadd.f32 %v387, %v499
    %v501 = vpop.f32.mrf.mxu0
    %v502 = vadd.f32 %v391, %v501
    %503 = vmatprep.mubr.f32.mxu0 0.0
    %504 = vmatmul.mubr.f32.gmra.mxu0 %v421
    %v505 = vpop.f32.mrf.mxu0
    %v506 = vadd.f32 %v387, %v505
    %v507 = vpop.f32.mrf.mxu0
    %v508 = vadd.f32 %v391, %v507
    %509 = vmatprep.mubr.f32.mxu0 0.0
    %510 = vmatmul.mubr.f32.gmra.mxu0 %v424
    %v511 = vpop.f32.mrf.mxu0
    %v512 = vadd.f32 %v387, %v511
    %v513 = vpop.f32.mrf.mxu0
    %v514 = vadd.f32 %v391, %v513
    %515 = vdwg.mxu0
    %516 = vmatprep.subr.mxu0 0.0
    %517 = vmatpush1.msra.mxu0 0.0
    %518 = vmatprep.subr.mxu0 0.0
    %519 = vmatpush1.msra.mxu0 0.0
    %520 = vmatprep.subr.mxu0 0.0
    %521 = vmatpush1.msra.mxu0 0.0
    %522 = vmatprep.subr.mxu0 0.0
    %523 = vmatpush1.msra.mxu0 0.0
    %524 = vmatprep.subr.mxu0 0.0
    %525 = vmatpush1.msra.mxu0 0.0
    %526 = vmatprep.subr.mxu0 0.0
    %527 = vmatpush1.msra.mxu0 0.0
    %528 = vmatprep.subr.mxu0 0.0
    %529 = vmatpush1.msra.mxu0 0.0
    %530 = vmatprep.subr.mxu0 0.0
    %531 = vmatpush1.msra.mxu0 0.0
    %532 = vmatprep.subr.mxu0 0.0
    %533 = vmatpush1.msra.mxu0 0.0
    %534 = vmatprep.subr.mxu0 0.0
    %535 = vmatpush1.msra.mxu0 0.0
    %536 = vmatprep.subr.mxu0 0.0
    %537 = vmatpush1.msra.mxu0 0.0
    %538 = vmatprep.subr.mxu0 0.0
    %539 = vmatpush1.msra.mxu0 0.0
    %540 = vmatprep.subr.mxu0 0.0
    %541 = vmatpush1.msra.mxu0 0.0
    %542 = vmatprep.subr.mxu0 0.0
    %543 = vmatpush1.msra.mxu0 0.0
    %544 = vmatprep.subr.mxu0 0.0
    %545 = vmatpush1.msra.mxu0 0.0
    %546 = vmatprep.subr.mxu0 0.0
    %547 = vmatpush1.msra.mxu0 %v431
    %548 = vmatprep.subr.mxu0 0.0
    %549 = vmatpush2.msra.mxu0 0.0
    %550 = vmatprep.subr.mxu0 0.0
    %551 = vmatpush2.msra.mxu0 0.0
    %552 = vmatprep.subr.mxu0 0.0
    %553 = vmatpush2.msra.mxu0 0.0
    %554 = vmatprep.subr.mxu0 0.0
    %555 = vmatpush2.msra.mxu0 0.0
    %556 = vmatprep.subr.mxu0 0.0
    %557 = vmatpush2.msra.mxu0 0.0
    %558 = vmatprep.subr.mxu0 0.0
    %559 = vmatpush2.msra.mxu0 0.0
    %560 = vmatprep.subr.mxu0 0.0
    %561 = vmatpush2.msra.mxu0 0.0
    %562 = vmatprep.subr.mxu0 0.0
    %563 = vmatpush2.msra.mxu0 0.0
    %564 = vmatprep.subr.mxu0 0.0
    %565 = vmatpush2.msra.mxu0 0.0
    %566 = vmatprep.subr.mxu0 0.0
    %567 = vmatpush2.msra.mxu0 0.0
    %568 = vmatprep.subr.mxu0 0.0
    %569 = vmatpush2.msra.mxu0 0.0
    %570 = vmatprep.subr.mxu0 0.0
    %571 = vmatpush2.msra.mxu0 0.0
    %572 = vmatprep.subr.mxu0 0.0
    %573 = vmatpush2.msra.mxu0 0.0
    %574 = vmatprep.subr.mxu0 0.0
    %575 = vmatpush2.msra.mxu0 0.0
    %576 = vmatprep.subr.mxu0 0.0
    %577 = vmatpush2.msra.mxu0 0.0
    %578 = vmatprep.subr.mxu0 0.0
    %579 = vmatpush2.msra.mxu0 0.0
    %580 = vmatprep.mubr.f32.mxu0 0.0
    %581 = vmatmul.mubr.f32.gmra.mxu0 %v418
    %v582 = vpop.f32.mrf.mxu0
    %v583 = vadd.f32 %v395, %v582
    %v584 = vpop.f32.mrf.mxu0
    %585 = vmatprep.mubr.f32.mxu0 0.0
    %586 = vmatmul.mubr.f32.gmra.mxu0 %v421
    %v587 = vpop.f32.mrf.mxu0
    %v588 = vadd.f32 %v395, %v587
    %v589 = vpop.f32.mrf.mxu0
    %590 = vmatprep.mubr.f32.mxu0 0.0
    %591 = vmatmul.mubr.f32.gmra.mxu0 %v424
    %v592 = vpop.f32.mrf.mxu0
    %v593 = vadd.f32 %v395, %v592
    %v594 = vpop.f32.mrf.mxu0
    %595 = vdwg.mxu0
    %596 = vst [vmem:[#allocation3] sm:$0xff] %v500
    %597 = vst [vmem:[#allocation3 + $0x8] sm:$0xff] %v502
    %598 = vst [vmem:[#allocation3 + $0x10] sm:$0xff] %v583
    %599 = vst [vmem:[#allocation3 + $0x18] sm:$0xff] %v506
    %600 = vst [vmem:[#allocation3 + $0x20] sm:$0xff] %v508
    %601 = vst [vmem:[#allocation3 + $0x28] sm:$0xff] %v588
    %602 = vst [vmem:[#allocation3 + $0x30] sm:$0xff] %v512
    %603 = vst [vmem:[#allocation3 + $0x38] sm:$0xff] %v514
    %604 = vst [vmem:[#allocation3 + $0x40] sm:$0xff] %v593
    %v605 = vld [vmem:[%s5] sm:$0x1]
    %v606 = vld [vmem:[%s9] sm:$0x1]
    %v607 = vld [vmem:[%s10] sm:$0x7]
    %v608 = vld [vmem:[%s11] sm:$0x1]
    %v609 = vld [vmem:[#allocation4] sm:$0x1]
    %v610 = vld [vmem:[#allocation2] sm:$0xff]
    %v611 = vld [vmem:[#allocation2 + $0x8] sm:$0xff]
    %v612 = vld [vmem:[#allocation2 + $0x10] sm:$0xff]
    %v613 = vadd.f32 %v610, 0.0
    %v614 = vxor.u32 %v613, 2147483648
    %v615 = vmul.f32 %v614, 1.442695
    %v616 = vpow.pop %v615
    %v617 = vadd.f32 %v616, 1.0
    %v618 = vrcp.pop %v617
    %v619 = vmul.f32 1.0, %v618
    %v620 = vadd.f32 %v611, 0.0
    %v621 = vxor.u32 %v620, 2147483648
    %v622 = vmul.f32 %v621, 1.442695
    %v623 = vpow.pop %v622
    %v624 = vadd.f32 %v623, 1.0
    %v625 = vrcp.pop %v624
    %v626 = vmul.f32 1.0, %v625
    %v628 = vlaneseq
    %v629 = vshrl.u32 %v628, 7
    %v630 = vsub.s32 0, %v629
    %v631 = vrot.slane %v605, %v630
    %v633 = vadd.f32 %v631, 0.0
    %v634 = vmul.f32 %v619, %v633
    %v635 = vadd.f32 %v612, %v634
    %v636 = vtanh.pop %v635
    %v637 = vsub.f32 1.0, %v626
    %v638 = vmul.f32 %v637, %v636
    %v639 = vmul.f32 %v626, 0.0
    %v640 = vadd.f32 %v638, %v639
    %v641 = vld [vmem:[#allocation2 + $0x18] sm:$0xff]
    %v642 = vld [vmem:[#allocation2 + $0x20] sm:$0xff]
    %v643 = vld [vmem:[#allocation2 + $0x28] sm:$0xff]
    %v644 = vld [vmem:[#allocation5] sm:$0xff]
    %v645 = vld [vmem:[#allocation5 + $0x8] sm:$0xff]
    %v646 = vld [vmem:[#allocation5 + $0x10] sm:$0xff]
    %v647 = vld [vmem:[#allocation5 + $0x18] sm:$0xff]
    %v648 = vld [vmem:[#allocation5 + $0x20] sm:$0xff]
    %v649 = vld [vmem:[#allocation5 + $0x28] sm:$0xff]
    %v650 = vld [vmem:[#allocation5 + $0x30] sm:$0xff]
    %v651 = vld [vmem:[#allocation5 + $0x38] sm:$0xff]
    %v652 = vld [vmem:[#allocation5 + $0x40] sm:$0xff]
    %v653 = vld [vmem:[#allocation5 + $0x48] sm:$0xff]
    %v654 = vld [vmem:[#allocation5 + $0x50] sm:$0xff]
    %v655 = vld [vmem:[#allocation5 + $0x58] sm:$0xff]
    %v656 = vld [vmem:[#allocation5 + $0x60] sm:$0xff]
    %v657 = vld [vmem:[#allocation5 + $0x68] sm:$0xff]
    %v658 = vld [vmem:[#allocation5 + $0x70] sm:$0xff]
    %v659 = vld [vmem:[#allocation5 + $0x78] sm:$0xff]
    %v660 = vld [vmem:[#allocation5 + $0x80] sm:$0xff]
    %v661 = vld [vmem:[#allocation5 + $0x88] sm:$0xff]
    %v662 = vld [vmem:[#allocation5 + $0x90] sm:$0xff]
    %v663 = vld [vmem:[#allocation5 + $0x98] sm:$0xff]
    %v664 = vld [vmem:[#allocation5 + $0xa0] sm:$0xff]
    %v665 = vld [vmem:[#allocation5 + $0xa8] sm:$0xff]
    %v666 = vld [vmem:[#allocation5 + $0xb0] sm:$0xff]
    %v667 = vld [vmem:[#allocation5 + $0xb8] sm:$0xff]
    %v668 = vld [vmem:[#allocation5 + $0xc0] sm:$0xff]
    %v669 = vld [vmem:[#allocation5 + $0xc8] sm:$0xff]
    %v670 = vld [vmem:[#allocation5 + $0xd0] sm:$0xff]
    %v671 = vld [vmem:[#allocation5 + $0xd8] sm:$0xff]
    %v672 = vld [vmem:[#allocation5 + $0xe0] sm:$0xff]
    %v673 = vld [vmem:[#allocation5 + $0xe8] sm:$0xff]
    %v674 = vld [vmem:[#allocation5 + $0xf0] sm:$0xff]
    %v675 = vld [vmem:[#allocation5 + $0xf8] sm:$0xff]
    %v676 = vld [vmem:[#allocation5 + $0x100] sm:$0xff]
    %v677 = vld [vmem:[#allocation5 + $0x108] sm:$0xff]
    %v678 = vld [vmem:[#allocation5 + $0x110] sm:$0xff]
    %v679 = vld [vmem:[#allocation5 + $0x118] sm:$0xff]
    %v680 = vld [vmem:[#allocation5 + $0x120] sm:$0xff]
    %v681 = vld [vmem:[#allocation5 + $0x128] sm:$0xff]
    %v682 = vld [vmem:[#allocation5 + $0x130] sm:$0xff]
    %v683 = vld [vmem:[#allocation5 + $0x138] sm:$0xff]
    %v684 = vld [vmem:[#allocation5 + $0x140] sm:$0xff]
    %v685 = vld [vmem:[#allocation5 + $0x148] sm:$0xff]
    %v686 = vld [vmem:[#allocation5 + $0x150] sm:$0xff]
    %v687 = vld [vmem:[#allocation5 + $0x158] sm:$0xff]
    %v688 = vld [vmem:[#allocation5 + $0x160] sm:$0xff]
    %v689 = vld [vmem:[#allocation5 + $0x168] sm:$0xff]
    %v690 = vld [vmem:[#allocation5 + $0x170] sm:$0xff]
    %v691 = vld [vmem:[#allocation5 + $0x178] sm:$0xff]
    %692 = vmatprep.subr.mxu0 %v690
    %693 = vmatpush1.msra.mxu0 %v689
    %694 = vmatprep.subr.mxu0 %v687
    %695 = vmatpush1.msra.mxu0 %v686
    %696 = vmatprep.subr.mxu0 %v684
    %697 = vmatpush1.msra.mxu0 %v683
    %698 = vmatprep.subr.mxu0 %v681
    %699 = vmatpush1.msra.mxu0 %v680
    %700 = vmatprep.subr.mxu0 %v678
    %701 = vmatpush1.msra.mxu0 %v677
    %702 = vmatprep.subr.mxu0 %v675
    %703 = vmatpush1.msra.mxu0 %v674
    %704 = vmatprep.subr.mxu0 %v672
    %705 = vmatpush1.msra.mxu0 %v671
    %706 = vmatprep.subr.mxu0 %v669
    %707 = vmatpush1.msra.mxu0 %v668
    %708 = vmatprep.subr.mxu0 %v666
    %709 = vmatpush1.msra.mxu0 %v665
    %710 = vmatprep.subr.mxu0 %v663
    %711 = vmatpush1.msra.mxu0 %v662
    %712 = vmatprep.subr.mxu0 %v660
    %713 = vmatpush1.msra.mxu0 %v659
    %714 = vmatprep.subr.mxu0 %v657
    %715 = vmatpush1.msra.mxu0 %v656
    %716 = vmatprep.subr.mxu0 %v654
    %717 = vmatpush1.msra.mxu0 %v653
    %718 = vmatprep.subr.mxu0 %v651
    %719 = vmatpush1.msra.mxu0 %v650
    %720 = vmatprep.subr.mxu0 %v648
    %721 = vmatpush1.msra.mxu0 %v647
    %722 = vmatprep.subr.mxu0 %v645
    %723 = vmatpush1.msra.mxu0 %v644
    %724 = vmatprep.subr.mxu0 0.0
    %725 = vmatpush2.msra.mxu0 0.0
    %726 = vmatprep.subr.mxu0 0.0
    %727 = vmatpush2.msra.mxu0 0.0
    %728 = vmatprep.subr.mxu0 0.0
    %729 = vmatpush2.msra.mxu0 0.0
    %730 = vmatprep.subr.mxu0 0.0
    %731 = vmatpush2.msra.mxu0 0.0
    %732 = vmatprep.subr.mxu0 0.0
    %733 = vmatpush2.msra.mxu0 0.0
    %734 = vmatprep.subr.mxu0 0.0
    %735 = vmatpush2.msra.mxu0 0.0
    %736 = vmatprep.subr.mxu0 0.0
    %737 = vmatpush2.msra.mxu0 0.0
    %738 = vmatprep.subr.mxu0 0.0
    %739 = vmatpush2.msra.mxu0 0.0
    %740 = vmatprep.subr.mxu0 0.0
    %741 = vmatpush2.msra.mxu0 0.0
    %742 = vmatprep.subr.mxu0 0.0
    %743 = vmatpush2.msra.mxu0 0.0
    %744 = vmatprep.subr.mxu0 0.0
    %745 = vmatpush2.msra.mxu0 0.0
    %746 = vmatprep.subr.mxu0 0.0
    %747 = vmatpush2.msra.mxu0 0.0
    %748 = vmatprep.subr.mxu0 0.0
    %749 = vmatpush2.msra.mxu0 0.0
    %750 = vmatprep.subr.mxu0 0.0
    %751 = vmatpush2.msra.mxu0 0.0
    %752 = vmatprep.subr.mxu0 0.0
    %753 = vmatpush2.msra.mxu0 0.0
    %754 = vmatprep.subr.mxu0 0.0
    %755 = vmatpush2.msra.mxu0 0.0
    %756 = vmatprep.mubr.f32.mxu0 0.0
    %757 = vmatmul.mubr.f32.gmra.mxu0 %v640
    %v758 = vpop.f32.mrf.mxu0
    %v759 = vadd.f32 0.0, %v758
    %v760 = vpop.f32.mrf.mxu0
    %v761 = vadd.f32 0.0, %v760
    %762 = vdwg.mxu0
    %763 = vmatprep.subr.mxu0 0.0
    %764 = vmatpush1.msra.mxu0 %v691
    %765 = vmatprep.subr.mxu0 0.0
    %766 = vmatpush1.msra.mxu0 %v688
    %767 = vmatprep.subr.mxu0 0.0
    %768 = vmatpush1.msra.mxu0 %v685
    %769 = vmatprep.subr.mxu0 0.0
    %770 = vmatpush1.msra.mxu0 %v682
    %771 = vmatprep.subr.mxu0 0.0
    %772 = vmatpush1.msra.mxu0 %v679
    %773 = vmatprep.subr.mxu0 0.0
    %774 = vmatpush1.msra.mxu0 %v676
    %775 = vmatprep.subr.mxu0 0.0
    %776 = vmatpush1.msra.mxu0 %v673
    %777 = vmatprep.subr.mxu0 0.0
    %778 = vmatpush1.msra.mxu0 %v670
    %779 = vmatprep.subr.mxu0 0.0
    %780 = vmatpush1.msra.mxu0 %v667
    %781 = vmatprep.subr.mxu0 0.0
    %782 = vmatpush1.msra.mxu0 %v664
    %783 = vmatprep.subr.mxu0 0.0
    %784 = vmatpush1.msra.mxu0 %v661
    %785 = vmatprep.subr.mxu0 0.0
    %786 = vmatpush1.msra.mxu0 %v658
    %787 = vmatprep.subr.mxu0 0.0
    %788 = vmatpush1.msra.mxu0 %v655
    %789 = vmatprep.subr.mxu0 0.0
    %790 = vmatpush1.msra.mxu0 %v652
    %791 = vmatprep.subr.mxu0 0.0
    %792 = vmatpush1.msra.mxu0 %v649
    %793 = vmatprep.subr.mxu0 0.0
    %794 = vmatpush1.msra.mxu0 %v646
    %795 = vmatprep.subr.mxu0 0.0
    %796 = vmatpush2.msra.mxu0 0.0
    %797 = vmatprep.subr.mxu0 0.0
    %798 = vmatpush2.msra.mxu0 0.0
    %799 = vmatprep.subr.mxu0 0.0
    %800 = vmatpush2.msra.mxu0 0.0
    %801 = vmatprep.subr.mxu0 0.0
    %802 = vmatpush2.msra.mxu0 0.0
    %803 = vmatprep.subr.mxu0 0.0
    %804 = vmatpush2.msra.mxu0 0.0
    %805 = vmatprep.subr.mxu0 0.0
    %806 = vmatpush2.msra.mxu0 0.0
    %807 = vmatprep.subr.mxu0 0.0
    %808 = vmatpush2.msra.mxu0 0.0
    %809 = vmatprep.subr.mxu0 0.0
    %810 = vmatpush2.msra.mxu0 0.0
    %811 = vmatprep.subr.mxu0 0.0
    %812 = vmatpush2.msra.mxu0 0.0
    %813 = vmatprep.subr.mxu0 0.0
    %814 = vmatpush2.msra.mxu0 0.0
    %815 = vmatprep.subr.mxu0 0.0
    %816 = vmatpush2.msra.mxu0 0.0
    %817 = vmatprep.subr.mxu0 0.0
    %818 = vmatpush2.msra.mxu0 0.0
    %819 = vmatprep.subr.mxu0 0.0
    %820 = vmatpush2.msra.mxu0 0.0
    %821 = vmatprep.subr.mxu0 0.0
    %822 = vmatpush2.msra.mxu0 0.0
    %823 = vmatprep.subr.mxu0 0.0
    %824 = vmatpush2.msra.mxu0 0.0
    %825 = vmatprep.subr.mxu0 0.0
    %826 = vmatpush2.msra.mxu0 0.0
    %827 = vmatprep.mubr.f32.mxu0 0.0
    %828 = vmatmul.mubr.f32.gmra.mxu0 %v640
    %v829 = vpop.f32.mrf.mxu0
    %v830 = vadd.f32 0.0, %v829
    %v831 = vpop.f32.mrf.mxu0
    %832 = vdwg.mxu0
    %v833 = vadd.f32 %v641, %v759
    %v834 = vxor.u32 %v833, 2147483648
    %v835 = vmul.f32 %v834, 1.442695
    %v836 = vpow.pop %v835
    %v837 = vadd.f32 %v836, 1.0
    %v838 = vrcp.pop %v837
    %v839 = vmul.f32 1.0, %v838
    %v840 = vadd.f32 %v642, %v761
    %v841 = vxor.u32 %v840, 2147483648
    %v842 = vmul.f32 %v841, 1.442695
    %v843 = vpow.pop %v842
    %v844 = vadd.f32 %v843, 1.0
    %v845 = vrcp.pop %v844
    %v846 = vmul.f32 1.0, %v845
    %v847 = vadd.f32 %v830, %v631
    %v848 = vmul.f32 %v839, %v847
    %v849 = vadd.f32 %v643, %v848
    %v850 = vtanh.pop %v849
    %v851 = vsub.f32 1.0, %v846
    %v852 = vmul.f32 %v851, %v850
    %v853 = vmul.f32 %v846, %v640
    %v854 = vadd.f32 %v852, %v853
    %v855 = vld [vmem:[#allocation2 + $0x30] sm:$0xff]
    %v856 = vld [vmem:[#allocation2 + $0x38] sm:$0xff]
    %v857 = vld [vmem:[#allocation2 + $0x40] sm:$0xff]
    %858 = vmatprep.subr.mxu0 %v690
    %859 = vmatpush1.msra.mxu0 %v689
    %860 = vmatprep.subr.mxu0 %v687
    %861 = vmatpush1.msra.mxu0 %v686
    %862 = vmatprep.subr.mxu0 %v684
    %863 = vmatpush1.msra.mxu0 %v683
    %864 = vmatprep.subr.mxu0 %v681
    %865 = vmatpush1.msra.mxu0 %v680
    %866 = vmatprep.subr.mxu0 %v678
    %867 = vmatpush1.msra.mxu0 %v677
    %868 = vmatprep.subr.mxu0 %v675
    %869 = vmatpush1.msra.mxu0 %v674
    %870 = vmatprep.subr.mxu0 %v672
    %871 = vmatpush1.msra.mxu0 %v671
    %872 = vmatprep.subr.mxu0 %v669
    %873 = vmatpush1.msra.mxu0 %v668
    %874 = vmatprep.subr.mxu0 %v666
    %875 = vmatpush1.msra.mxu0 %v665
    %876 = vmatprep.subr.mxu0 %v663
    %877 = vmatpush1.msra.mxu0 %v662
    %878 = vmatprep.subr.mxu0 %v660
    %879 = vmatpush1.msra.mxu0 %v659
    %880 = vmatprep.subr.mxu0 %v657
    %881 = vmatpush1.msra.mxu0 %v656
    %882 = vmatprep.subr.mxu0 %v654
    %883 = vmatpush1.msra.mxu0 %v653
    %884 = vmatprep.subr.mxu0 %v651
    %885 = vmatpush1.msra.mxu0 %v650
    %886 = vmatprep.subr.mxu0 %v648
    %887 = vmatpush1.msra.mxu0 %v647
    %888 = vmatprep.subr.mxu0 %v645
    %889 = vmatpush1.msra.mxu0 %v644
    %890 = vmatprep.subr.mxu0 0.0
    %891 = vmatpush2.msra.mxu0 0.0
    %892 = vmatprep.subr.mxu0 0.0
    %893 = vmatpush2.msra.mxu0 0.0
    %894 = vmatprep.subr.mxu0 0.0
    %895 = vmatpush2.msra.mxu0 0.0
    %896 = vmatprep.subr.mxu0 0.0
    %897 = vmatpush2.msra.mxu0 0.0
    %898 = vmatprep.subr.mxu0 0.0
    %899 = vmatpush2.msra.mxu0 0.0
    %900 = vmatprep.subr.mxu0 0.0
    %901 = vmatpush2.msra.mxu0 0.0
    %902 = vmatprep.subr.mxu0 0.0
    %903 = vmatpush2.msra.mxu0 0.0
    %904 = vmatprep.subr.mxu0 0.0
    %905 = vmatpush2.msra.mxu0 0.0
    %906 = vmatprep.subr.mxu0 0.0
    %907 = vmatpush2.msra.mxu0 0.0
    %908 = vmatprep.subr.mxu0 0.0
    %909 = vmatpush2.msra.mxu0 0.0
    %910 = vmatprep.subr.mxu0 0.0
    %911 = vmatpush2.msra.mxu0 0.0
    %912 = vmatprep.subr.mxu0 0.0
    %913 = vmatpush2.msra.mxu0 0.0
    %914 = vmatprep.subr.mxu0 0.0
    %915 = vmatpush2.msra.mxu0 0.0
    %916 = vmatprep.subr.mxu0 0.0
    %917 = vmatpush2.msra.mxu0 0.0
    %918 = vmatprep.subr.mxu0 0.0
    %919 = vmatpush2.msra.mxu0 0.0
    %920 = vmatprep.subr.mxu0 0.0
    %921 = vmatpush2.msra.mxu0 0.0
    %922 = vmatprep.mubr.f32.mxu0 0.0
    %923 = vmatmul.mubr.f32.gmra.mxu0 %v854
    %v924 = vpop.f32.mrf.mxu0
    %v925 = vadd.f32 0.0, %v924
    %v926 = vpop.f32.mrf.mxu0
    %v927 = vadd.f32 0.0, %v926
    %928 = vdwg.mxu0
    %929 = vmatprep.subr.mxu0 0.0
    %930 = vmatpush1.msra.mxu0 %v691
    %931 = vmatprep.subr.mxu0 0.0
    %932 = vmatpush1.msra.mxu0 %v688
    %933 = vmatprep.subr.mxu0 0.0
    %934 = vmatpush1.msra.mxu0 %v685
    %935 = vmatprep.subr.mxu0 0.0
    %936 = vmatpush1.msra.mxu0 %v682
    %937 = vmatprep.subr.mxu0 0.0
    %938 = vmatpush1.msra.mxu0 %v679
    %939 = vmatprep.subr.mxu0 0.0
    %940 = vmatpush1.msra.mxu0 %v676
    %941 = vmatprep.subr.mxu0 0.0
    %942 = vmatpush1.msra.mxu0 %v673
    %943 = vmatprep.subr.mxu0 0.0
    %944 = vmatpush1.msra.mxu0 %v670
    %945 = vmatprep.subr.mxu0 0.0
    %946 = vmatpush1.msra.mxu0 %v667
    %947 = vmatprep.subr.mxu0 0.0
    %948 = vmatpush1.msra.mxu0 %v664
    %949 = vmatprep.subr.mxu0 0.0
    %950 = vmatpush1.msra.mxu0 %v661
    %951 = vmatprep.subr.mxu0 0.0
    %952 = vmatpush1.msra.mxu0 %v658
    %953 = vmatprep.subr.mxu0 0.0
    %954 = vmatpush1.msra.mxu0 %v655
    %955 = vmatprep.subr.mxu0 0.0
    %956 = vmatpush1.msra.mxu0 %v652
    %957 = vmatprep.subr.mxu0 0.0
    %958 = vmatpush1.msra.mxu0 %v649
    %959 = vmatprep.subr.mxu0 0.0
    %960 = vmatpush1.msra.mxu0 %v646
    %961 = vmatprep.subr.mxu0 0.0
    %962 = vmatpush2.msra.mxu0 0.0
    %963 = vmatprep.subr.mxu0 0.0
    %964 = vmatpush2.msra.mxu0 0.0
    %965 = vmatprep.subr.mxu0 0.0
    %966 = vmatpush2.msra.mxu0 0.0
    %967 = vmatprep.subr.mxu0 0.0
    %968 = vmatpush2.msra.mxu0 0.0
    %969 = vmatprep.subr.mxu0 0.0
    %970 = vmatpush2.msra.mxu0 0.0
    %971 = vmatprep.subr.mxu0 0.0
    %972 = vmatpush2.msra.mxu0 0.0
    %973 = vmatprep.subr.mxu0 0.0
    %974 = vmatpush2.msra.mxu0 0.0
    %975 = vmatprep.subr.mxu0 0.0
    %976 = vmatpush2.msra.mxu0 0.0
    %977 = vmatprep.subr.mxu0 0.0
    %978 = vmatpush2.msra.mxu0 0.0
    %979 = vmatprep.subr.mxu0 0.0
    %980 = vmatpush2.msra.mxu0 0.0
    %981 = vmatprep.subr.mxu0 0.0
    %982 = vmatpush2.msra.mxu0 0.0
    %983 = vmatprep.subr.mxu0 0.0
    %984 = vmatpush2.msra.mxu0 0.0
    %985 = vmatprep.subr.mxu0 0.0
    %986 = vmatpush2.msra.mxu0 0.0
    %987 = vmatprep.subr.mxu0 0.0
    %988 = vmatpush2.msra.mxu0 0.0
    %989 = vmatprep.subr.mxu0 0.0
    %990 = vmatpush2.msra.mxu0 0.0
    %991 = vmatprep.subr.mxu0 0.0
    %992 = vmatpush2.msra.mxu0 0.0
    %993 = vmatprep.mubr.f32.mxu0 0.0
    %994 = vmatmul.mubr.f32.gmra.mxu0 %v854
    %v995 = vpop.f32.mrf.mxu0
    %v996 = vadd.f32 0.0, %v995
    %v997 = vpop.f32.mrf.mxu0
    %998 = vdwg.mxu0
    %v999 = vadd.f32 %v855, %v925
    %v1000 = vxor.u32 %v999, 2147483648
    %v1001 = vmul.f32 %v1000, 1.442695
    %v1002 = vpow.pop %v1001
    %v1003 = vadd.f32 %v1002, 1.0
    %v1004 = vrcp.pop %v1003
    %v1005 = vmul.f32 1.0, %v1004
    %v1006 = vadd.f32 %v856, %v927
    %v1007 = vxor.u32 %v1006, 2147483648
    %v1008 = vmul.f32 %v1007, 1.442695
    %v1009 = vpow.pop %v1008
    %v1010 = vadd.f32 %v1009, 1.0
    %v1011 = vrcp.pop %v1010
    %v1012 = vmul.f32 1.0, %v1011
    %v1013 = vadd.f32 %v996, %v631
    %v1014 = vmul.f32 %v1005, %v1013
    %v1015 = vadd.f32 %v857, %v1014
    %v1016 = vtanh.pop %v1015
    %v1017 = vsub.f32 1.0, %v1012
    %v1018 = vmul.f32 %v1017, %v1016
    %v1019 = vmul.f32 %v1012, %v854
    %v1020 = vadd.f32 %v1018, %v1019
    %v1021 = vld [vmem:[#allocation2 + $0x48] sm:$0xff]
    %v1022 = vld [vmem:[#allocation2 + $0x50] sm:$0xff]
    %v1023 = vld [vmem:[#allocation2 + $0x58] sm:$0xff]
    %1024 = vmatprep.subr.mxu0 %v690
    %1025 = vmatpush1.msra.mxu0 %v689
    %1026 = vmatprep.subr.mxu0 %v687
    %1027 = vmatpush1.msra.mxu0 %v686
    %1028 = vmatprep.subr.mxu0 %v684
    %1029 = vmatpush1.msra.mxu0 %v683
    %1030 = vmatprep.subr.mxu0 %v681
    %1031 = vmatpush1.msra.mxu0 %v680
    %1032 = vmatprep.subr.mxu0 %v678
    %1033 = vmatpush1.msra.mxu0 %v677
    %1034 = vmatprep.subr.mxu0 %v675
    %1035 = vmatpush1.msra.mxu0 %v674
    %1036 = vmatprep.subr.mxu0 %v672
    %1037 = vmatpush1.msra.mxu0 %v671
    %1038 = vmatprep.subr.mxu0 %v669
    %1039 = vmatpush1.msra.mxu0 %v668
    %1040 = vmatprep.subr.mxu0 %v666
    %1041 = vmatpush1.msra.mxu0 %v665
    %1042 = vmatprep.subr.mxu0 %v663
    %1043 = vmatpush1.msra.mxu0 %v662
    %1044 = vmatprep.subr.mxu0 %v660
    %1045 = vmatpush1.msra.mxu0 %v659
    %1046 = vmatprep.subr.mxu0 %v657
    %1047 = vmatpush1.msra.mxu0 %v656
    %1048 = vmatprep.subr.mxu0 %v654
    %1049 = vmatpush1.msra.mxu0 %v653
    %1050 = vmatprep.subr.mxu0 %v651
    %1051 = vmatpush1.msra.mxu0 %v650
    %1052 = vmatprep.subr.mxu0 %v648
    %1053 = vmatpush1.msra.mxu0 %v647
    %1054 = vmatprep.subr.mxu0 %v645
    %1055 = vmatpush1.msra.mxu0 %v644
    %1056 = vmatprep.subr.mxu0 0.0
    %1057 = vmatpush2.msra.mxu0 0.0
    %1058 = vmatprep.subr.mxu0 0.0
    %1059 = vmatpush2.msra.mxu0 0.0
    %1060 = vmatprep.subr.mxu0 0.0
    %1061 = vmatpush2.msra.mxu0 0.0
    %1062 = vmatprep.subr.mxu0 0.0
    %1063 = vmatpush2.msra.mxu0 0.0
    %1064 = vmatprep.subr.mxu0 0.0
    %1065 = vmatpush2.msra.mxu0 0.0
    %1066 = vmatprep.subr.mxu0 0.0
    %1067 = vmatpush2.msra.mxu0 0.0
    %1068 = vmatprep.subr.mxu0 0.0
    %1069 = vmatpush2.msra.mxu0 0.0
    %1070 = vmatprep.subr.mxu0 0.0
    %1071 = vmatpush2.msra.mxu0 0.0
    %1072 = vmatprep.subr.mxu0 0.0
    %1073 = vmatpush2.msra.mxu0 0.0
    %1074 = vmatprep.subr.mxu0 0.0
    %1075 = vmatpush2.msra.mxu0 0.0
    %1076 = vmatprep.subr.mxu0 0.0
    %1077 = vmatpush2.msra.mxu0 0.0
    %1078 = vmatprep.subr.mxu0 0.0
    %1079 = vmatpush2.msra.mxu0 0.0
    %1080 = vmatprep.subr.mxu0 0.0
    %1081 = vmatpush2.msra.mxu0 0.0
    %1082 = vmatprep.subr.mxu0 0.0
    %1083 = vmatpush2.msra.mxu0 0.0
    %1084 = vmatprep.subr.mxu0 0.0
    %1085 = vmatpush2.msra.mxu0 0.0
    %1086 = vmatprep.subr.mxu0 0.0
    %1087 = vmatpush2.msra.mxu0 0.0
    %1088 = vmatprep.mubr.f32.mxu0 0.0
    %1089 = vmatmul.mubr.f32.gmra.mxu0 %v1020
    %v1090 = vpop.f32.mrf.mxu0
    %v1091 = vadd.f32 0.0, %v1090
    %v1092 = vpop.f32.mrf.mxu0
    %v1093 = vadd.f32 0.0, %v1092
    %1094 = vdwg.mxu0
    %1095 = vmatprep.subr.mxu0 0.0
    %1096 = vmatpush1.msra.mxu0 %v691
    %1097 = vmatprep.subr.mxu0 0.0
    %1098 = vmatpush1.msra.mxu0 %v688
    %1099 = vmatprep.subr.mxu0 0.0
    %1100 = vmatpush1.msra.mxu0 %v685
    %1101 = vmatprep.subr.mxu0 0.0
    %1102 = vmatpush1.msra.mxu0 %v682
    %1103 = vmatprep.subr.mxu0 0.0
    %1104 = vmatpush1.msra.mxu0 %v679
    %1105 = vmatprep.subr.mxu0 0.0
    %1106 = vmatpush1.msra.mxu0 %v676
    %1107 = vmatprep.subr.mxu0 0.0
    %1108 = vmatpush1.msra.mxu0 %v673
    %1109 = vmatprep.subr.mxu0 0.0
    %1110 = vmatpush1.msra.mxu0 %v670
    %1111 = vmatprep.subr.mxu0 0.0
    %1112 = vmatpush1.msra.mxu0 %v667
    %1113 = vmatprep.subr.mxu0 0.0
    %1114 = vmatpush1.msra.mxu0 %v664
    %1115 = vmatprep.subr.mxu0 0.0
    %1116 = vmatpush1.msra.mxu0 %v661
    %1117 = vmatprep.subr.mxu0 0.0
    %1118 = vmatpush1.msra.mxu0 %v658
    %1119 = vmatprep.subr.mxu0 0.0
    %1120 = vmatpush1.msra.mxu0 %v655
    %1121 = vmatprep.subr.mxu0 0.0
    %1122 = vmatpush1.msra.mxu0 %v652
    %1123 = vmatprep.subr.mxu0 0.0
    %1124 = vmatpush1.msra.mxu0 %v649
    %1125 = vmatprep.subr.mxu0 0.0
    %1126 = vmatpush1.msra.mxu0 %v646
    %1127 = vmatprep.subr.mxu0 0.0
    %1128 = vmatpush2.msra.mxu0 0.0
    %1129 = vmatprep.subr.mxu0 0.0
    %1130 = vmatpush2.msra.mxu0 0.0
    %1131 = vmatprep.subr.mxu0 0.0
    %1132 = vmatpush2.msra.mxu0 0.0
    %1133 = vmatprep.subr.mxu0 0.0
    %1134 = vmatpush2.msra.mxu0 0.0
    %1135 = vmatprep.subr.mxu0 0.0
    %1136 = vmatpush2.msra.mxu0 0.0
    %1137 = vmatprep.subr.mxu0 0.0
    %1138 = vmatpush2.msra.mxu0 0.0
    %1139 = vmatprep.subr.mxu0 0.0
    %1140 = vmatpush2.msra.mxu0 0.0
    %1141 = vmatprep.subr.mxu0 0.0
    %1142 = vmatpush2.msra.mxu0 0.0
    %1143 = vmatprep.subr.mxu0 0.0
    %1144 = vmatpush2.msra.mxu0 0.0
    %1145 = vmatprep.subr.mxu0 0.0
    %1146 = vmatpush2.msra.mxu0 0.0
    %1147 = vmatprep.subr.mxu0 0.0
    %1148 = vmatpush2.msra.mxu0 0.0
    %1149 = vmatprep.subr.mxu0 0.0
    %1150 = vmatpush2.msra.mxu0 0.0
    %1151 = vmatprep.subr.mxu0 0.0
    %1152 = vmatpush2.msra.mxu0 0.0
    %1153 = vmatprep.subr.mxu0 0.0
    %1154 = vmatpush2.msra.mxu0 0.0
    %1155 = vmatprep.subr.mxu0 0.0
    %1156 = vmatpush2.msra.mxu0 0.0
    %1157 = vmatprep.subr.mxu0 0.0
    %1158 = vmatpush2.msra.mxu0 0.0
    %1159 = vmatprep.mubr.f32.mxu0 0.0
    %1160 = vmatmul.mubr.f32.gmra.mxu0 %v1020
    %v1161 = vpop.f32.mrf.mxu0
    %v1162 = vadd.f32 0.0, %v1161
    %v1163 = vpop.f32.mrf.mxu0
    %1164 = vdwg.mxu0
    %v1165 = vadd.f32 %v1021, %v1091
    %v1166 = vxor.u32 %v1165, 2147483648
    %v1167 = vmul.f32 %v1166, 1.442695
    %v1168 = vpow.pop %v1167
    %v1169 = vadd.f32 %v1168, 1.0
    %v1170 = vrcp.pop %v1169
    %v1171 = vmul.f32 1.0, %v1170
    %v1172 = vadd.f32 %v1022, %v1093
    %v1173 = vxor.u32 %v1172, 2147483648
    %v1174 = vmul.f32 %v1173, 1.442695
    %v1175 = vpow.pop %v1174
    %v1176 = vadd.f32 %v1175, 1.0
    %v1177 = vrcp.pop %v1176
    %v1178 = vmul.f32 1.0, %v1177
    %v1179 = vadd.f32 %v1162, %v631
    %v1180 = vmul.f32 %v1171, %v1179
    %v1181 = vadd.f32 %v1023, %v1180
    %v1182 = vtanh.pop %v1181
    %v1183 = vsub.f32 1.0, %v1178
    %v1184 = vmul.f32 %v1183, %v1182
    %v1185 = vmul.f32 %v1178, %v1020
    %v1186 = vadd.f32 %v1184, %v1185
    %v1187 = vld [vmem:[#allocation2 + $0x60] sm:$0xff]
    %v1188 = vld [vmem:[#allocation2 + $0x68] sm:$0xff]
    %v1189 = vld [vmem:[#allocation2 + $0x70] sm:$0xff]
    %1190 = vmatprep.subr.mxu0 %v690
    %1191 = vmatpush1.msra.mxu0 %v689
    %1192 = vmatprep.subr.mxu0 %v687
    %1193 = vmatpush1.msra.mxu0 %v686
    %1194 = vmatprep.subr.mxu0 %v684
    %1195 = vmatpush1.msra.mxu0 %v683
    %1196 = vmatprep.subr.mxu0 %v681
    %1197 = vmatpush1.msra.mxu0 %v680
    %1198 = vmatprep.subr.mxu0 %v678
    %1199 = vmatpush1.msra.mxu0 %v677
    %1200 = vmatprep.subr.mxu0 %v675
    %1201 = vmatpush1.msra.mxu0 %v674
    %1202 = vmatprep.subr.mxu0 %v672
    %1203 = vmatpush1.msra.mxu0 %v671
    %1204 = vmatprep.subr.mxu0 %v669
    %1205 = vmatpush1.msra.mxu0 %v668
    %1206 = vmatprep.subr.mxu0 %v666
    %1207 = vmatpush1.msra.mxu0 %v665
    %1208 = vmatprep.subr.mxu0 %v663
    %1209 = vmatpush1.msra.mxu0 %v662
    %1210 = vmatprep.subr.mxu0 %v660
    %1211 = vmatpush1.msra.mxu0 %v659
    %1212 = vmatprep.subr.mxu0 %v657
    %1213 = vmatpush1.msra.mxu0 %v656
    %1214 = vmatprep.subr.mxu0 %v654
    %1215 = vmatpush1.msra.mxu0 %v653
    %1216 = vmatprep.subr.mxu0 %v651
    %1217 = vmatpush1.msra.mxu0 %v650
    %1218 = vmatprep.subr.mxu0 %v648
    %1219 = vmatpush1.msra.mxu0 %v647
    %1220 = vmatprep.subr.mxu0 %v645
    %1221 = vmatpush1.msra.mxu0 %v644
    %1222 = vmatprep.subr.mxu0 0.0
    %1223 = vmatpush2.msra.mxu0 0.0
    %1224 = vmatprep.subr.mxu0 0.0
    %1225 = vmatpush2.msra.mxu0 0.0
    %1226 = vmatprep.subr.mxu0 0.0
    %1227 = vmatpush2.msra.mxu0 0.0
    %1228 = vmatprep.subr.mxu0 0.0
    %1229 = vmatpush2.msra.mxu0 0.0
    %1230 = vmatprep.subr.mxu0 0.0
    %1231 = vmatpush2.msra.mxu0 0.0
    %1232 = vmatprep.subr.mxu0 0.0
    %1233 = vmatpush2.msra.mxu0 0.0
    %1234 = vmatprep.subr.mxu0 0.0
    %1235 = vmatpush2.msra.mxu0 0.0
    %1236 = vmatprep.subr.mxu0 0.0
    %1237 = vmatpush2.msra.mxu0 0.0
    %1238 = vmatprep.subr.mxu0 0.0
    %1239 = vmatpush2.msra.mxu0 0.0
    %1240 = vmatprep.subr.mxu0 0.0
    %1241 = vmatpush2.msra.mxu0 0.0
    %1242 = vmatprep.subr.mxu0 0.0
    %1243 = vmatpush2.msra.mxu0 0.0
    %1244 = vmatprep.subr.mxu0 0.0
    %1245 = vmatpush2.msra.mxu0 0.0
    %1246 = vmatprep.subr.mxu0 0.0
    %1247 = vmatpush2.msra.mxu0 0.0
    %1248 = vmatprep.subr.mxu0 0.0
    %1249 = vmatpush2.msra.mxu0 0.0
    %1250 = vmatprep.subr.mxu0 0.0
    %1251 = vmatpush2.msra.mxu0 0.0
    %1252 = vmatprep.subr.mxu0 0.0
    %1253 = vmatpush2.msra.mxu0 0.0
    %1254 = vmatprep.mubr.f32.mxu0 0.0
    %1255 = vmatmul.mubr.f32.gmra.mxu0 %v1186
    %v1256 = vpop.f32.mrf.mxu0
    %v1257 = vadd.f32 0.0, %v1256
    %v1258 = vpop.f32.mrf.mxu0
    %v1259 = vadd.f32 0.0, %v1258
    %1260 = vdwg.mxu0
    %1261 = vmatprep.subr.mxu0 0.0
    %1262 = vmatpush1.msra.mxu0 %v691
    %1263 = vmatprep.subr.mxu0 0.0
    %1264 = vmatpush1.msra.mxu0 %v688
    %1265 = vmatprep.subr.mxu0 0.0
    %1266 = vmatpush1.msra.mxu0 %v685
    %1267 = vmatprep.subr.mxu0 0.0
    %1268 = vmatpush1.msra.mxu0 %v682
    %1269 = vmatprep.subr.mxu0 0.0
    %1270 = vmatpush1.msra.mxu0 %v679
    %1271 = vmatprep.subr.mxu0 0.0
    %1272 = vmatpush1.msra.mxu0 %v676
    %1273 = vmatprep.subr.mxu0 0.0
    %1274 = vmatpush1.msra.mxu0 %v673
    %1275 = vmatprep.subr.mxu0 0.0
    %1276 = vmatpush1.msra.mxu0 %v670
    %1277 = vmatprep.subr.mxu0 0.0
    %1278 = vmatpush1.msra.mxu0 %v667
    %1279 = vmatprep.subr.mxu0 0.0
    %1280 = vmatpush1.msra.mxu0 %v664
    %1281 = vmatprep.subr.mxu0 0.0
    %1282 = vmatpush1.msra.mxu0 %v661
    %1283 = vmatprep.subr.mxu0 0.0
    %1284 = vmatpush1.msra.mxu0 %v658
    %1285 = vmatprep.subr.mxu0 0.0
    %1286 = vmatpush1.msra.mxu0 %v655
    %1287 = vmatprep.subr.mxu0 0.0
    %1288 = vmatpush1.msra.mxu0 %v652
    %1289 = vmatprep.subr.mxu0 0.0
    %1290 = vmatpush1.msra.mxu0 %v649
    %1291 = vmatprep.subr.mxu0 0.0
    %1292 = vmatpush1.msra.mxu0 %v646
    %1293 = vmatprep.subr.mxu0 0.0
    %1294 = vmatpush2.msra.mxu0 0.0
    %1295 = vmatprep.subr.mxu0 0.0
    %1296 = vmatpush2.msra.mxu0 0.0
    %1297 = vmatprep.subr.mxu0 0.0
    %1298 = vmatpush2.msra.mxu0 0.0
    %1299 = vmatprep.subr.mxu0 0.0
    %1300 = vmatpush2.msra.mxu0 0.0
    %1301 = vmatprep.subr.mxu0 0.0
    %1302 = vmatpush2.msra.mxu0 0.0
    %1303 = vmatprep.subr.mxu0 0.0
    %1304 = vmatpush2.msra.mxu0 0.0
    %1305 = vmatprep.subr.mxu0 0.0
    %1306 = vmatpush2.msra.mxu0 0.0
    %1307 = vmatprep.subr.mxu0 0.0
    %1308 = vmatpush2.msra.mxu0 0.0
    %1309 = vmatprep.subr.mxu0 0.0
    %1310 = vmatpush2.msra.mxu0 0.0
    %1311 = vmatprep.subr.mxu0 0.0
    %1312 = vmatpush2.msra.mxu0 0.0
    %1313 = vmatprep.subr.mxu0 0.0
    %1314 = vmatpush2.msra.mxu0 0.0
    %1315 = vmatprep.subr.mxu0 0.0
    %1316 = vmatpush2.msra.mxu0 0.0
    %1317 = vmatprep.subr.mxu0 0.0
    %1318 = vmatpush2.msra.mxu0 0.0
    %1319 = vmatprep.subr.mxu0 0.0
    %1320 = vmatpush2.msra.mxu0 0.0
    %1321 = vmatprep.subr.mxu0 0.0
    %1322 = vmatpush2.msra.mxu0 0.0
    %1323 = vmatprep.subr.mxu0 0.0
    %1324 = vmatpush2.msra.mxu0 0.0
    %1325 = vmatprep.mubr.f32.mxu0 0.0
    %1326 = vmatmul.mubr.f32.gmra.mxu0 %v1186
    %v1327 = vpop.f32.mrf.mxu0
    %v1328 = vadd.f32 0.0, %v1327
    %v1329 = vpop.f32.mrf.mxu0
    %1330 = vdwg.mxu0
    %v1331 = vadd.f32 %v1187, %v1257
    %v1332 = vxor.u32 %v1331, 2147483648
    %v1333 = vmul.f32 %v1332, 1.442695
    %v1334 = vpow.pop %v1333
    %v1335 = vadd.f32 %v1334, 1.0
    %v1336 = vrcp.pop %v1335
    %v1337 = vmul.f32 1.0, %v1336
    %v1338 = vadd.f32 %v1188, %v1259
    %v1339 = vxor.u32 %v1338, 2147483648
    %v1340 = vmul.f32 %v1339, 1.442695
    %v1341 = vpow.pop %v1340
    %v1342 = vadd.f32 %v1341, 1.0
    %v1343 = vrcp.pop %v1342
    %v1344 = vmul.f32 1.0, %v1343
    %v1345 = vadd.f32 %v1328, %v631
    %v1346 = vmul.f32 %v1337, %v1345
    %v1347 = vadd.f32 %v1189, %v1346
    %v1348 = vtanh.pop %v1347
    %v1349 = vsub.f32 1.0, %v1344
    %v1350 = vmul.f32 %v1349, %v1348
    %v1351 = vmul.f32 %v1344, %v1186
    %v1352 = vadd.f32 %v1350, %v1351
    %v1353 = vld [vmem:[#allocation2 + $0x78] sm:$0xff]
    %v1354 = vld [vmem:[#allocation2 + $0x80] sm:$0xff]
    %v1355 = vld [vmem:[#allocation2 + $0x88] sm:$0xff]
    %1356 = vmatprep.subr.mxu0 %v690
    %1357 = vmatpush1.msra.mxu0 %v689
    %1358 = vmatprep.subr.mxu0 %v687
    %1359 = vmatpush1.msra.mxu0 %v686
    %1360 = vmatprep.subr.mxu0 %v684
    %1361 = vmatpush1.msra.mxu0 %v683
    %1362 = vmatprep.subr.mxu0 %v681
    %1363 = vmatpush1.msra.mxu0 %v680
    %1364 = vmatprep.subr.mxu0 %v678
    %1365 = vmatpush1.msra.mxu0 %v677
    %1366 = vmatprep.subr.mxu0 %v675
    %1367 = vmatpush1.msra.mxu0 %v674
    %1368 = vmatprep.subr.mxu0 %v672
    %1369 = vmatpush1.msra.mxu0 %v671
    %1370 = vmatprep.subr.mxu0 %v669
    %1371 = vmatpush1.msra.mxu0 %v668
    %1372 = vmatprep.subr.mxu0 %v666
    %1373 = vmatpush1.msra.mxu0 %v665
    %1374 = vmatprep.subr.mxu0 %v663
    %1375 = vmatpush1.msra.mxu0 %v662
    %1376 = vmatprep.subr.mxu0 %v660
    %1377 = vmatpush1.msra.mxu0 %v659
    %1378 = vmatprep.subr.mxu0 %v657
    %1379 = vmatpush1.msra.mxu0 %v656
    %1380 = vmatprep.subr.mxu0 %v654
    %1381 = vmatpush1.msra.mxu0 %v653
    %1382 = vmatprep.subr.mxu0 %v651
    %1383 = vmatpush1.msra.mxu0 %v650
    %1384 = vmatprep.subr.mxu0 %v648
    %1385 = vmatpush1.msra.mxu0 %v647
    %1386 = vmatprep.subr.mxu0 %v645
    %1387 = vmatpush1.msra.mxu0 %v644
    %1388 = vmatprep.subr.mxu0 0.0
    %1389 = vmatpush2.msra.mxu0 0.0
    %1390 = vmatprep.subr.mxu0 0.0
    %1391 = vmatpush2.msra.mxu0 0.0
    %1392 = vmatprep.subr.mxu0 0.0
    %1393 = vmatpush2.msra.mxu0 0.0
    %1394 = vmatprep.subr.mxu0 0.0
    %1395 = vmatpush2.msra.mxu0 0.0
    %1396 = vmatprep.subr.mxu0 0.0
    %1397 = vmatpush2.msra.mxu0 0.0
    %1398 = vmatprep.subr.mxu0 0.0
    %1399 = vmatpush2.msra.mxu0 0.0
    %1400 = vmatprep.subr.mxu0 0.0
    %1401 = vmatpush2.msra.mxu0 0.0
    %1402 = vmatprep.subr.mxu0 0.0
    %1403 = vmatpush2.msra.mxu0 0.0
    %1404 = vmatprep.subr.mxu0 0.0
    %1405 = vmatpush2.msra.mxu0 0.0
    %1406 = vmatprep.subr.mxu0 0.0
    %1407 = vmatpush2.msra.mxu0 0.0
    %1408 = vmatprep.subr.mxu0 0.0
    %1409 = vmatpush2.msra.mxu0 0.0
    %1410 = vmatprep.subr.mxu0 0.0
    %1411 = vmatpush2.msra.mxu0 0.0
    %1412 = vmatprep.subr.mxu0 0.0
    %1413 = vmatpush2.msra.mxu0 0.0
    %1414 = vmatprep.subr.mxu0 0.0
    %1415 = vmatpush2.msra.mxu0 0.0
    %1416 = vmatprep.subr.mxu0 0.0
    %1417 = vmatpush2.msra.mxu0 0.0
    %1418 = vmatprep.subr.mxu0 0.0
    %1419 = vmatpush2.msra.mxu0 0.0
    %1420 = vmatprep.mubr.f32.mxu0 0.0
    %1421 = vmatmul.mubr.f32.gmra.mxu0 %v1352
    %v1422 = vpop.f32.mrf.mxu0
    %v1423 = vadd.f32 0.0, %v1422
    %v1424 = vpop.f32.mrf.mxu0
    %v1425 = vadd.f32 0.0, %v1424
    %1426 = vdwg.mxu0
    %1427 = vmatprep.subr.mxu0 0.0
    %1428 = vmatpush1.msra.mxu0 %v691
    %1429 = vmatprep.subr.mxu0 0.0
    %1430 = vmatpush1.msra.mxu0 %v688
    %1431 = vmatprep.subr.mxu0 0.0
    %1432 = vmatpush1.msra.mxu0 %v685
    %1433 = vmatprep.subr.mxu0 0.0
    %1434 = vmatpush1.msra.mxu0 %v682
    %1435 = vmatprep.subr.mxu0 0.0
    %1436 = vmatpush1.msra.mxu0 %v679
    %1437 = vmatprep.subr.mxu0 0.0
    %1438 = vmatpush1.msra.mxu0 %v676
    %1439 = vmatprep.subr.mxu0 0.0
    %1440 = vmatpush1.msra.mxu0 %v673
    %1441 = vmatprep.subr.mxu0 0.0
    %1442 = vmatpush1.msra.mxu0 %v670
    %1443 = vmatprep.subr.mxu0 0.0
    %1444 = vmatpush1.msra.mxu0 %v667
    %1445 = vmatprep.subr.mxu0 0.0
    %1446 = vmatpush1.msra.mxu0 %v664
    %1447 = vmatprep.subr.mxu0 0.0
    %1448 = vmatpush1.msra.mxu0 %v661
    %1449 = vmatprep.subr.mxu0 0.0
    %1450 = vmatpush1.msra.mxu0 %v658
    %1451 = vmatprep.subr.mxu0 0.0
    %1452 = vmatpush1.msra.mxu0 %v655
    %1453 = vmatprep.subr.mxu0 0.0
    %1454 = vmatpush1.msra.mxu0 %v652
    %1455 = vmatprep.subr.mxu0 0.0
    %1456 = vmatpush1.msra.mxu0 %v649
    %1457 = vmatprep.subr.mxu0 0.0
    %1458 = vmatpush1.msra.mxu0 %v646
    %1459 = vmatprep.subr.mxu0 0.0
    %1460 = vmatpush2.msra.mxu0 0.0
    %1461 = vmatprep.subr.mxu0 0.0
    %1462 = vmatpush2.msra.mxu0 0.0
    %1463 = vmatprep.subr.mxu0 0.0
    %1464 = vmatpush2.msra.mxu0 0.0
    %1465 = vmatprep.subr.mxu0 0.0
    %1466 = vmatpush2.msra.mxu0 0.0
    %1467 = vmatprep.subr.mxu0 0.0
    %1468 = vmatpush2.msra.mxu0 0.0
    %1469 = vmatprep.subr.mxu0 0.0
    %1470 = vmatpush2.msra.mxu0 0.0
    %1471 = vmatprep.subr.mxu0 0.0
    %1472 = vmatpush2.msra.mxu0 0.0
    %1473 = vmatprep.subr.mxu0 0.0
    %1474 = vmatpush2.msra.mxu0 0.0
    %1475 = vmatprep.subr.mxu0 0.0
    %1476 = vmatpush2.msra.mxu0 0.0
    %1477 = vmatprep.subr.mxu0 0.0
    %1478 = vmatpush2.msra.mxu0 0.0
    %1479 = vmatprep.subr.mxu0 0.0
    %1480 = vmatpush2.msra.mxu0 0.0
    %1481 = vmatprep.subr.mxu0 0.0
    %1482 = vmatpush2.msra.mxu0 0.0
    %1483 = vmatprep.subr.mxu0 0.0
    %1484 = vmatpush2.msra.mxu0 0.0
    %1485 = vmatprep.subr.mxu0 0.0
    %1486 = vmatpush2.msra.mxu0 0.0
    %1487 = vmatprep.subr.mxu0 0.0
    %1488 = vmatpush2.msra.mxu0 0.0
    %1489 = vmatprep.subr.mxu0 0.0
    %1490 = vmatpush2.msra.mxu0 0.0
    %1491 = vmatprep.mubr.f32.mxu0 0.0
    %1492 = vmatmul.mubr.f32.gmra.mxu0 %v1352
    %v1493 = vpop.f32.mrf.mxu0
    %v1494 = vadd.f32 0.0, %v1493
    %v1495 = vpop.f32.mrf.mxu0
    %1496 = vdwg.mxu0
    %v1497 = vadd.f32 %v1353, %v1423
    %v1498 = vxor.u32 %v1497, 2147483648
    %v1499 = vmul.f32 %v1498, 1.442695
    %v1500 = vpow.pop %v1499
    %v1501 = vadd.f32 %v1500, 1.0
    %v1502 = vrcp.pop %v1501
    %v1503 = vmul.f32 1.0, %v1502
    %v1504 = vadd.f32 %v1354, %v1425
    %v1505 = vxor.u32 %v1504, 2147483648
    %v1506 = vmul.f32 %v1505, 1.442695
    %v1507 = vpow.pop %v1506
    %v1508 = vadd.f32 %v1507, 1.0
    %v1509 = vrcp.pop %v1508
    %v1510 = vmul.f32 1.0, %v1509
    %v1511 = vadd.f32 %v1494, %v631
    %v1512 = vmul.f32 %v1503, %v1511
    %v1513 = vadd.f32 %v1355, %v1512
    %v1514 = vtanh.pop %v1513
    %v1515 = vsub.f32 1.0, %v1510
    %v1516 = vmul.f32 %v1515, %v1514
    %v1517 = vmul.f32 %v1510, %v1352
    %v1518 = vadd.f32 %v1516, %v1517
    %v1519 = vld [vmem:[#allocation2 + $0x90] sm:$0xff]
    %v1520 = vld [vmem:[#allocation2 + $0x98] sm:$0xff]
    %v1521 = vld [vmem:[#allocation2 + $0xa0] sm:$0xff]
    %1522 = vmatprep.subr.mxu0 %v690
    %1523 = vmatpush1.msra.mxu0 %v689
    %1524 = vmatprep.subr.mxu0 %v687
    %1525 = vmatpush1.msra.mxu0 %v686
    %1526 = vmatprep.subr.mxu0 %v684
    %1527 = vmatpush1.msra.mxu0 %v683
    %1528 = vmatprep.subr.mxu0 %v681
    %1529 = vmatpush1.msra.mxu0 %v680
    %1530 = vmatprep.subr.mxu0 %v678
    %1531 = vmatpush1.msra.mxu0 %v677
    %1532 = vmatprep.subr.mxu0 %v675
    %1533 = vmatpush1.msra.mxu0 %v674
    %1534 = vmatprep.subr.mxu0 %v672
    %1535 = vmatpush1.msra.mxu0 %v671
    %1536 = vmatprep.subr.mxu0 %v669
    %1537 = vmatpush1.msra.mxu0 %v668
    %1538 = vmatprep.subr.mxu0 %v666
    %1539 = vmatpush1.msra.mxu0 %v665
    %1540 = vmatprep.subr.mxu0 %v663
    %1541 = vmatpush1.msra.mxu0 %v662
    %1542 = vmatprep.subr.mxu0 %v660
    %1543 = vmatpush1.msra.mxu0 %v659
    %1544 = vmatprep.subr.mxu0 %v657
    %1545 = vmatpush1.msra.mxu0 %v656
    %1546 = vmatprep.subr.mxu0 %v654
    %1547 = vmatpush1.msra.mxu0 %v653
    %1548 = vmatprep.subr.mxu0 %v651
    %1549 = vmatpush1.msra.mxu0 %v650
    %1550 = vmatprep.subr.mxu0 %v648
    %1551 = vmatpush1.msra.mxu0 %v647
    %1552 = vmatprep.subr.mxu0 %v645
    %1553 = vmatpush1.msra.mxu0 %v644
    %1554 = vmatprep.subr.mxu0 0.0
    %1555 = vmatpush2.msra.mxu0 0.0
    %1556 = vmatprep.subr.mxu0 0.0
    %1557 = vmatpush2.msra.mxu0 0.0
    %1558 = vmatprep.subr.mxu0 0.0
    %1559 = vmatpush2.msra.mxu0 0.0
    %1560 = vmatprep.subr.mxu0 0.0
    %1561 = vmatpush2.msra.mxu0 0.0
    %1562 = vmatprep.subr.mxu0 0.0
    %1563 = vmatpush2.msra.mxu0 0.0
    %1564 = vmatprep.subr.mxu0 0.0
    %1565 = vmatpush2.msra.mxu0 0.0
    %1566 = vmatprep.subr.mxu0 0.0
    %1567 = vmatpush2.msra.mxu0 0.0
    %1568 = vmatprep.subr.mxu0 0.0
    %1569 = vmatpush2.msra.mxu0 0.0
    %1570 = vmatprep.subr.mxu0 0.0
    %1571 = vmatpush2.msra.mxu0 0.0
    %1572 = vmatprep.subr.mxu0 0.0
    %1573 = vmatpush2.msra.mxu0 0.0
    %1574 = vmatprep.subr.mxu0 0.0
    %1575 = vmatpush2.msra.mxu0 0.0
    %1576 = vmatprep.subr.mxu0 0.0
    %1577 = vmatpush2.msra.mxu0 0.0
    %1578 = vmatprep.subr.mxu0 0.0
    %1579 = vmatpush2.msra.mxu0 0.0
    %1580 = vmatprep.subr.mxu0 0.0
    %1581 = vmatpush2.msra.mxu0 0.0
    %1582 = vmatprep.subr.mxu0 0.0
    %1583 = vmatpush2.msra.mxu0 0.0
    %1584 = vmatprep.subr.mxu0 0.0
    %1585 = vmatpush2.msra.mxu0 0.0
    %1586 = vmatprep.mubr.f32.mxu0 0.0
    %1587 = vmatmul.mubr.f32.gmra.mxu0 %v1518
    %v1588 = vpop.f32.mrf.mxu0
    %v1589 = vadd.f32 0.0, %v1588
    %v1590 = vpop.f32.mrf.mxu0
    %v1591 = vadd.f32 0.0, %v1590
    %1592 = vdwg.mxu0
    %1593 = vmatprep.subr.mxu0 0.0
    %1594 = vmatpush1.msra.mxu0 %v691
    %1595 = vmatprep.subr.mxu0 0.0
    %1596 = vmatpush1.msra.mxu0 %v688
    %1597 = vmatprep.subr.mxu0 0.0
    %1598 = vmatpush1.msra.mxu0 %v685
    %1599 = vmatprep.subr.mxu0 0.0
    %1600 = vmatpush1.msra.mxu0 %v682
    %1601 = vmatprep.subr.mxu0 0.0
    %1602 = vmatpush1.msra.mxu0 %v679
    %1603 = vmatprep.subr.mxu0 0.0
    %1604 = vmatpush1.msra.mxu0 %v676
    %1605 = vmatprep.subr.mxu0 0.0
    %1606 = vmatpush1.msra.mxu0 %v673
    %1607 = vmatprep.subr.mxu0 0.0
    %1608 = vmatpush1.msra.mxu0 %v670
    %1609 = vmatprep.subr.mxu0 0.0
    %1610 = vmatpush1.msra.mxu0 %v667
    %1611 = vmatprep.subr.mxu0 0.0
    %1612 = vmatpush1.msra.mxu0 %v664
    %1613 = vmatprep.subr.mxu0 0.0
    %1614 = vmatpush1.msra.mxu0 %v661
    %1615 = vmatprep.subr.mxu0 0.0
    %1616 = vmatpush1.msra.mxu0 %v658
    %1617 = vmatprep.subr.mxu0 0.0
    %1618 = vmatpush1.msra.mxu0 %v655
    %1619 = vmatprep.subr.mxu0 0.0
    %1620 = vmatpush1.msra.mxu0 %v652
    %1621 = vmatprep.subr.mxu0 0.0
    %1622 = vmatpush1.msra.mxu0 %v649
    %1623 = vmatprep.subr.mxu0 0.0
    %1624 = vmatpush1.msra.mxu0 %v646
    %1625 = vmatprep.subr.mxu0 0.0
    %1626 = vmatpush2.msra.mxu0 0.0
    %1627 = vmatprep.subr.mxu0 0.0
    %1628 = vmatpush2.msra.mxu0 0.0
    %1629 = vmatprep.subr.mxu0 0.0
    %1630 = vmatpush2.msra.mxu0 0.0
    %1631 = vmatprep.subr.mxu0 0.0
    %1632 = vmatpush2.msra.mxu0 0.0
    %1633 = vmatprep.subr.mxu0 0.0
    %1634 = vmatpush2.msra.mxu0 0.0
    %1635 = vmatprep.subr.mxu0 0.0
    %1636 = vmatpush2.msra.mxu0 0.0
    %1637 = vmatprep.subr.mxu0 0.0
    %1638 = vmatpush2.msra.mxu0 0.0
    %1639 = vmatprep.subr.mxu0 0.0
    %1640 = vmatpush2.msra.mxu0 0.0
    %1641 = vmatprep.subr.mxu0 0.0
    %1642 = vmatpush2.msra.mxu0 0.0
    %1643 = vmatprep.subr.mxu0 0.0
    %1644 = vmatpush2.msra.mxu0 0.0
    %1645 = vmatprep.subr.mxu0 0.0
    %1646 = vmatpush2.msra.mxu0 0.0
    %1647 = vmatprep.subr.mxu0 0.0
    %1648 = vmatpush2.msra.mxu0 0.0
    %1649 = vmatprep.subr.mxu0 0.0
    %1650 = vmatpush2.msra.mxu0 0.0
    %1651 = vmatprep.subr.mxu0 0.0
    %1652 = vmatpush2.msra.mxu0 0.0
    %1653 = vmatprep.subr.mxu0 0.0
    %1654 = vmatpush2.msra.mxu0 0.0
    %1655 = vmatprep.subr.mxu0 0.0
    %1656 = vmatpush2.msra.mxu0 0.0
    %1657 = vmatprep.mubr.f32.mxu0 0.0
    %1658 = vmatmul.mubr.f32.gmra.mxu0 %v1518
    %v1659 = vpop.f32.mrf.mxu0
    %v1660 = vadd.f32 0.0, %v1659
    %v1661 = vpop.f32.mrf.mxu0
    %1662 = vdwg.mxu0
    %v1663 = vadd.f32 %v1519, %v1589
    %v1664 = vxor.u32 %v1663, 2147483648
    %v1665 = vmul.f32 %v1664, 1.442695
    %v1666 = vpow.pop %v1665
    %v1667 = vadd.f32 %v1666, 1.0
    %v1668 = vrcp.pop %v1667
    %v1669 = vmul.f32 1.0, %v1668
    %v1670 = vadd.f32 %v1520, %v1591
    %v1671 = vxor.u32 %v1670, 2147483648
    %v1672 = vmul.f32 %v1671, 1.442695
    %v1673 = vpow.pop %v1672
    %v1674 = vadd.f32 %v1673, 1.0
    %v1675 = vrcp.pop %v1674
    %v1676 = vmul.f32 1.0, %v1675
    %v1677 = vadd.f32 %v1660, %v631
    %v1678 = vmul.f32 %v1669, %v1677
    %v1679 = vadd.f32 %v1521, %v1678
    %v1680 = vtanh.pop %v1679
    %v1681 = vsub.f32 1.0, %v1676
    %v1682 = vmul.f32 %v1681, %v1680
    %v1683 = vmul.f32 %v1676, %v1518
    %v1684 = vadd.f32 %v1682, %v1683
    %v1685 = vld [vmem:[#allocation2 + $0xa8] sm:$0xff]
    %v1686 = vld [vmem:[#allocation2 + $0xb0] sm:$0xff]
    %v1687 = vld [vmem:[#allocation2 + $0xb8] sm:$0xff]
    %1688 = vmatprep.subr.mxu0 %v690
    %1689 = vmatpush1.msra.mxu0 %v689
    %1690 = vmatprep.subr.mxu0 %v687
    %1691 = vmatpush1.msra.mxu0 %v686
    %1692 = vmatprep.subr.mxu0 %v684
    %1693 = vmatpush1.msra.mxu0 %v683
    %1694 = vmatprep.subr.mxu0 %v681
    %1695 = vmatpush1.msra.mxu0 %v680
    %1696 = vmatprep.subr.mxu0 %v678
    %1697 = vmatpush1.msra.mxu0 %v677
    %1698 = vmatprep.subr.mxu0 %v675
    %1699 = vmatpush1.msra.mxu0 %v674
    %1700 = vmatprep.subr.mxu0 %v672
    %1701 = vmatpush1.msra.mxu0 %v671
    %1702 = vmatprep.subr.mxu0 %v669
    %1703 = vmatpush1.msra.mxu0 %v668
    %1704 = vmatprep.subr.mxu0 %v666
    %1705 = vmatpush1.msra.mxu0 %v665
    %1706 = vmatprep.subr.mxu0 %v663
    %1707 = vmatpush1.msra.mxu0 %v662
    %1708 = vmatprep.subr.mxu0 %v660
    %1709 = vmatpush1.msra.mxu0 %v659
    %1710 = vmatprep.subr.mxu0 %v657
    %1711 = vmatpush1.msra.mxu0 %v656
    %1712 = vmatprep.subr.mxu0 %v654
    %1713 = vmatpush1.msra.mxu0 %v653
    %1714 = vmatprep.subr.mxu0 %v651
    %1715 = vmatpush1.msra.mxu0 %v650
    %1716 = vmatprep.subr.mxu0 %v648
    %1717 = vmatpush1.msra.mxu0 %v647
    %1718 = vmatprep.subr.mxu0 %v645
    %1719 = vmatpush1.msra.mxu0 %v644
    %1720 = vmatprep.subr.mxu0 0.0
    %1721 = vmatpush2.msra.mxu0 0.0
    %1722 = vmatprep.subr.mxu0 0.0
    %1723 = vmatpush2.msra.mxu0 0.0
    %1724 = vmatprep.subr.mxu0 0.0
    %1725 = vmatpush2.msra.mxu0 0.0
    %1726 = vmatprep.subr.mxu0 0.0
    %1727 = vmatpush2.msra.mxu0 0.0
    %1728 = vmatprep.subr.mxu0 0.0
    %1729 = vmatpush2.msra.mxu0 0.0
    %1730 = vmatprep.subr.mxu0 0.0
    %1731 = vmatpush2.msra.mxu0 0.0
    %1732 = vmatprep.subr.mxu0 0.0
    %1733 = vmatpush2.msra.mxu0 0.0
    %1734 = vmatprep.subr.mxu0 0.0
    %1735 = vmatpush2.msra.mxu0 0.0
    %1736 = vmatprep.subr.mxu0 0.0
    %1737 = vmatpush2.msra.mxu0 0.0
    %1738 = vmatprep.subr.mxu0 0.0
    %1739 = vmatpush2.msra.mxu0 0.0
    %1740 = vmatprep.subr.mxu0 0.0
    %1741 = vmatpush2.msra.mxu0 0.0
    %1742 = vmatprep.subr.mxu0 0.0
    %1743 = vmatpush2.msra.mxu0 0.0
    %1744 = vmatprep.subr.mxu0 0.0
    %1745 = vmatpush2.msra.mxu0 0.0
    %1746 = vmatprep.subr.mxu0 0.0
    %1747 = vmatpush2.msra.mxu0 0.0
    %1748 = vmatprep.subr.mxu0 0.0
    %1749 = vmatpush2.msra.mxu0 0.0
    %1750 = vmatprep.subr.mxu0 0.0
    %1751 = vmatpush2.msra.mxu0 0.0
    %1752 = vmatprep.mubr.f32.mxu0 0.0
    %1753 = vmatmul.mubr.f32.gmra.mxu0 %v1684
    %v1754 = vpop.f32.mrf.mxu0
    %v1755 = vadd.f32 0.0, %v1754
    %v1756 = vpop.f32.mrf.mxu0
    %v1757 = vadd.f32 0.0, %v1756
    %1758 = vdwg.mxu0
    %1759 = vmatprep.subr.mxu0 0.0
    %1760 = vmatpush1.msra.mxu0 %v691
    %1761 = vmatprep.subr.mxu0 0.0
    %1762 = vmatpush1.msra.mxu0 %v688
    %1763 = vmatprep.subr.mxu0 0.0
    %1764 = vmatpush1.msra.mxu0 %v685
    %1765 = vmatprep.subr.mxu0 0.0
    %1766 = vmatpush1.msra.mxu0 %v682
    %1767 = vmatprep.subr.mxu0 0.0
    %1768 = vmatpush1.msra.mxu0 %v679
    %1769 = vmatprep.subr.mxu0 0.0
    %1770 = vmatpush1.msra.mxu0 %v676
    %1771 = vmatprep.subr.mxu0 0.0
    %1772 = vmatpush1.msra.mxu0 %v673
    %1773 = vmatprep.subr.mxu0 0.0
    %1774 = vmatpush1.msra.mxu0 %v670
    %1775 = vmatprep.subr.mxu0 0.0
    %1776 = vmatpush1.msra.mxu0 %v667
    %1777 = vmatprep.subr.mxu0 0.0
    %1778 = vmatpush1.msra.mxu0 %v664
    %1779 = vmatprep.subr.mxu0 0.0
    %1780 = vmatpush1.msra.mxu0 %v661
    %1781 = vmatprep.subr.mxu0 0.0
    %1782 = vmatpush1.msra.mxu0 %v658
    %1783 = vmatprep.subr.mxu0 0.0
    %1784 = vmatpush1.msra.mxu0 %v655
    %1785 = vmatprep.subr.mxu0 0.0
    %1786 = vmatpush1.msra.mxu0 %v652
    %1787 = vmatprep.subr.mxu0 0.0
    %1788 = vmatpush1.msra.mxu0 %v649
    %1789 = vmatprep.subr.mxu0 0.0
    %1790 = vmatpush1.msra.mxu0 %v646
    %1791 = vmatprep.subr.mxu0 0.0
    %1792 = vmatpush2.msra.mxu0 0.0
    %1793 = vmatprep.subr.mxu0 0.0
    %1794 = vmatpush2.msra.mxu0 0.0
    %1795 = vmatprep.subr.mxu0 0.0
    %1796 = vmatpush2.msra.mxu0 0.0
    %1797 = vmatprep.subr.mxu0 0.0
    %1798 = vmatpush2.msra.mxu0 0.0
    %1799 = vmatprep.subr.mxu0 0.0
    %1800 = vmatpush2.msra.mxu0 0.0
    %1801 = vmatprep.subr.mxu0 0.0
    %1802 = vmatpush2.msra.mxu0 0.0
    %1803 = vmatprep.subr.mxu0 0.0
    %1804 = vmatpush2.msra.mxu0 0.0
    %1805 = vmatprep.subr.mxu0 0.0
    %1806 = vmatpush2.msra.mxu0 0.0
    %1807 = vmatprep.subr.mxu0 0.0
    %1808 = vmatpush2.msra.mxu0 0.0
    %1809 = vmatprep.subr.mxu0 0.0
    %1810 = vmatpush2.msra.mxu0 0.0
    %1811 = vmatprep.subr.mxu0 0.0
    %1812 = vmatpush2.msra.mxu0 0.0
    %1813 = vmatprep.subr.mxu0 0.0
    %1814 = vmatpush2.msra.mxu0 0.0
    %1815 = vmatprep.subr.mxu0 0.0
    %1816 = vmatpush2.msra.mxu0 0.0
    %1817 = vmatprep.subr.mxu0 0.0
    %1818 = vmatpush2.msra.mxu0 0.0
    %1819 = vmatprep.subr.mxu0 0.0
    %1820 = vmatpush2.msra.mxu0 0.0
    %1821 = vmatprep.subr.mxu0 0.0
    %1822 = vmatpush2.msra.mxu0 0.0
    %1823 = vmatprep.mubr.f32.mxu0 0.0
    %1824 = vmatmul.mubr.f32.gmra.mxu0 %v1684
    %v1825 = vpop.f32.mrf.mxu0
    %v1826 = vadd.f32 0.0, %v1825
    %v1827 = vpop.f32.mrf.mxu0
    %1828 = vdwg.mxu0
    %v1829 = vadd.f32 %v1685, %v1755
    %v1830 = vxor.u32 %v1829, 2147483648
    %v1831 = vmul.f32 %v1830, 1.442695
    %v1832 = vpow.pop %v1831
    %v1833 = vadd.f32 %v1832, 1.0
    %v1834 = vrcp.pop %v1833
    %v1835 = vmul.f32 1.0, %v1834
    %v1836 = vadd.f32 %v1686, %v1757
    %v1837 = vxor.u32 %v1836, 2147483648
    %v1838 = vmul.f32 %v1837, 1.442695
    %v1839 = vpow.pop %v1838
    %v1840 = vadd.f32 %v1839, 1.0
    %v1841 = vrcp.pop %v1840
    %v1842 = vmul.f32 1.0, %v1841
    %v1843 = vadd.f32 %v1826, %v631
    %v1844 = vmul.f32 %v1835, %v1843
    %v1845 = vadd.f32 %v1687, %v1844
    %v1846 = vtanh.pop %v1845
    %v1847 = vsub.f32 1.0, %v1842
    %v1848 = vmul.f32 %v1847, %v1846
    %v1849 = vmul.f32 %v1842, %v1684
    %v1850 = vadd.f32 %v1848, %v1849
    %v1851 = vld [vmem:[%s0 + $0x38] sm:$0xff]
    %v1852 = vld [vmem:[#allocation7] sm:$0xff]
    %v1853 = vld [vmem:[#allocation7 + $0x8] sm:$0xff]
    %v1854 = vld [vmem:[#allocation7 + $0x10] sm:$0xff]
    %v1855 = vld [vmem:[#allocation7 + $0x18] sm:$0xff]
    %v1856 = vld [vmem:[#allocation7 + $0x20] sm:$0xff]
    %v1857 = vld [vmem:[#allocation7 + $0x28] sm:$0xff]
    %v1858 = vld [vmem:[#allocation7 + $0x30] sm:$0xff]
    %v1859 = vld [vmem:[#allocation7 + $0x38] sm:$0xff]
    %v1860 = vld [vmem:[#allocation7 + $0x40] sm:$0xff]
    %v1861 = vld [vmem:[#allocation7 + $0x48] sm:$0xff]
    %v1862 = vld [vmem:[#allocation7 + $0x50] sm:$0xff]
    %v1863 = vld [vmem:[#allocation7 + $0x58] sm:$0xff]
    %v1864 = vld [vmem:[#allocation7 + $0x60] sm:$0xff]
    %v1865 = vld [vmem:[#allocation7 + $0x68] sm:$0xff]
    %v1866 = vld [vmem:[#allocation7 + $0x70] sm:$0xff]
    %v1867 = vld [vmem:[#allocation7 + $0x78] sm:$0xff]
    %v1868 = vld [vmem:[#allocation7 + $0x80] sm:$0xff]
    %v1869 = vld [vmem:[#allocation7 + $0x88] sm:$0xff]
    %v1870 = vld [vmem:[#allocation7 + $0x90] sm:$0xff]
    %v1871 = vld [vmem:[#allocation7 + $0x98] sm:$0xff]
    %v1872 = vld [vmem:[#allocation7 + $0xa0] sm:$0xff]
    %v1873 = vld [vmem:[#allocation7 + $0xa8] sm:$0xff]
    %v1874 = vld [vmem:[#allocation7 + $0xb0] sm:$0xff]
    %v1875 = vld [vmem:[#allocation7 + $0xb8] sm:$0xff]
    %v1876 = vld [vmem:[#allocation7 + $0xc0] sm:$0xff]
    %v1877 = vld [vmem:[#allocation7 + $0xc8] sm:$0xff]
    %v1878 = vld [vmem:[#allocation7 + $0xd0] sm:$0xff]
    %v1879 = vld [vmem:[#allocation7 + $0xd8] sm:$0xff]
    %v1880 = vld [vmem:[#allocation7 + $0xe0] sm:$0xff]
    %v1881 = vld [vmem:[#allocation7 + $0xe8] sm:$0xff]
    %v1882 = vld [vmem:[#allocation7 + $0xf0] sm:$0xff]
    %v1883 = vld [vmem:[#allocation7 + $0xf8] sm:$0xff]
    %v1884 = vld [vmem:[#allocation7 + $0x100] sm:$0xff]
    %v1885 = vld [vmem:[#allocation7 + $0x108] sm:$0xff]
    %v1886 = vld [vmem:[#allocation7 + $0x110] sm:$0xff]
    %v1887 = vld [vmem:[#allocation7 + $0x118] sm:$0xff]
    %v1888 = vld [vmem:[#allocation7 + $0x120] sm:$0xff]
    %v1889 = vld [vmem:[#allocation7 + $0x128] sm:$0xff]
    %v1890 = vld [vmem:[#allocation7 + $0x130] sm:$0xff]
    %v1891 = vld [vmem:[#allocation7 + $0x138] sm:$0xff]
    %v1892 = vld [vmem:[#allocation7 + $0x140] sm:$0xff]
    %v1893 = vld [vmem:[#allocation7 + $0x148] sm:$0xff]
    %v1894 = vld [vmem:[#allocation7 + $0x150] sm:$0xff]
    %v1895 = vld [vmem:[#allocation7 + $0x158] sm:$0xff]
    %v1896 = vld [vmem:[#allocation7 + $0x160] sm:$0xff]
    %v1897 = vld [vmem:[#allocation7 + $0x168] sm:$0xff]
    %v1898 = vld [vmem:[#allocation7 + $0x170] sm:$0xff]
    %v1899 = vld [vmem:[#allocation7 + $0x178] sm:$0xff]
    %1900 = vmatprep.subr.mxu0 %v1898
    %1901 = vmatpush1.msra.mxu0 %v1897
    %1902 = vmatprep.subr.mxu0 %v1895
    %1903 = vmatpush1.msra.mxu0 %v1894
    %1904 = vmatprep.subr.mxu0 %v1892
    %1905 = vmatpush1.msra.mxu0 %v1891
    %1906 = vmatprep.subr.mxu0 %v1889
    %1907 = vmatpush1.msra.mxu0 %v1888
    %1908 = vmatprep.subr.mxu0 %v1886
    %1909 = vmatpush1.msra.mxu0 %v1885
    %1910 = vmatprep.subr.mxu0 %v1883
    %1911 = vmatpush1.msra.mxu0 %v1882
    %1912 = vmatprep.subr.mxu0 %v1880
    %1913 = vmatpush1.msra.mxu0 %v1879
    %1914 = vmatprep.subr.mxu0 %v1877
    %1915 = vmatpush1.msra.mxu0 %v1876
    %1916 = vmatprep.subr.mxu0 %v1874
    %1917 = vmatpush1.msra.mxu0 %v1873
    %1918 = vmatprep.subr.mxu0 %v1871
    %1919 = vmatpush1.msra.mxu0 %v1870
    %1920 = vmatprep.subr.mxu0 %v1868
    %1921 = vmatpush1.msra.mxu0 %v1867
    %1922 = vmatprep.subr.mxu0 %v1865
    %1923 = vmatpush1.msra.mxu0 %v1864
    %1924 = vmatprep.subr.mxu0 %v1862
    %1925 = vmatpush1.msra.mxu0 %v1861
    %1926 = vmatprep.subr.mxu0 %v1859
    %1927 = vmatpush1.msra.mxu0 %v1858
    %1928 = vmatprep.subr.mxu0 %v1856
    %1929 = vmatpush1.msra.mxu0 %v1855
    %1930 = vmatprep.subr.mxu0 %v1853
    %1931 = vmatpush1.msra.mxu0 %v1852
    %1932 = vmatprep.subr.mxu0 0.0
    %1933 = vmatpush2.msra.mxu0 0.0
    %1934 = vmatprep.subr.mxu0 0.0
    %1935 = vmatpush2.msra.mxu0 0.0
    %1936 = vmatprep.subr.mxu0 0.0
    %1937 = vmatpush2.msra.mxu0 0.0
    %1938 = vmatprep.subr.mxu0 0.0
    %1939 = vmatpush2.msra.mxu0 0.0
    %1940 = vmatprep.subr.mxu0 0.0
    %1941 = vmatpush2.msra.mxu0 0.0
    %1942 = vmatprep.subr.mxu0 0.0
    %1943 = vmatpush2.msra.mxu0 0.0
    %1944 = vmatprep.subr.mxu0 0.0
    %1945 = vmatpush2.msra.mxu0 0.0
    %1946 = vmatprep.subr.mxu0 0.0
    %1947 = vmatpush2.msra.mxu0 0.0
    %1948 = vmatprep.subr.mxu0 0.0
    %1949 = vmatpush2.msra.mxu0 0.0
    %1950 = vmatprep.subr.mxu0 0.0
    %1951 = vmatpush2.msra.mxu0 0.0
    %1952 = vmatprep.subr.mxu0 0.0
    %1953 = vmatpush2.msra.mxu0 0.0
    %1954 = vmatprep.subr.mxu0 0.0
    %1955 = vmatpush2.msra.mxu0 0.0
    %1956 = vmatprep.subr.mxu0 0.0
    %1957 = vmatpush2.msra.mxu0 0.0
    %1958 = vmatprep.subr.mxu0 0.0
    %1959 = vmatpush2.msra.mxu0 0.0
    %1960 = vmatprep.subr.mxu0 0.0
    %1961 = vmatpush2.msra.mxu0 0.0
    %1962 = vmatprep.subr.mxu0 0.0
    %1963 = vmatpush2.msra.mxu0 0.0
    %1964 = vmatprep.mubr.f32.mxu0 0.0
    %1965 = vmatmul.mubr.f32.gmra.mxu0 %v1850
    %v1966 = vpop.f32.mrf.mxu0
    %v1967 = vadd.f32 0.0, %v1966
    %v1968 = vpop.f32.mrf.mxu0
    %v1969 = vadd.f32 0.0, %v1968
    %1970 = vdwg.mxu0
    %1971 = vmatprep.subr.mxu0 0.0
    %1972 = vmatpush1.msra.mxu0 %v1899
    %1973 = vmatprep.subr.mxu0 0.0
    %1974 = vmatpush1.msra.mxu0 %v1896
    %1975 = vmatprep.subr.mxu0 0.0
    %1976 = vmatpush1.msra.mxu0 %v1893
    %1977 = vmatprep.subr.mxu0 0.0
    %1978 = vmatpush1.msra.mxu0 %v1890
    %1979 = vmatprep.subr.mxu0 0.0
    %1980 = vmatpush1.msra.mxu0 %v1887
    %1981 = vmatprep.subr.mxu0 0.0
    %1982 = vmatpush1.msra.mxu0 %v1884
    %1983 = vmatprep.subr.mxu0 0.0
    %1984 = vmatpush1.msra.mxu0 %v1881
    %1985 = vmatprep.subr.mxu0 0.0
    %1986 = vmatpush1.msra.mxu0 %v1878
    %1987 = vmatprep.subr.mxu0 0.0
    %1988 = vmatpush1.msra.mxu0 %v1875
    %1989 = vmatprep.subr.mxu0 0.0
    %1990 = vmatpush1.msra.mxu0 %v1872
    %1991 = vmatprep.subr.mxu0 0.0
    %1992 = vmatpush1.msra.mxu0 %v1869
    %1993 = vmatprep.subr.mxu0 0.0
    %1994 = vmatpush1.msra.mxu0 %v1866
    %1995 = vmatprep.subr.mxu0 0.0
    %1996 = vmatpush1.msra.mxu0 %v1863
    %1997 = vmatprep.subr.mxu0 0.0
    %1998 = vmatpush1.msra.mxu0 %v1860
    %1999 = vmatprep.subr.mxu0 0.0
    %2000 = vmatpush1.msra.mxu0 %v1857
    %2001 = vmatprep.subr.mxu0 0.0
    %2002 = vmatpush1.msra.mxu0 %v1854
    %2003 = vmatprep.subr.mxu0 0.0
    %2004 = vmatpush2.msra.mxu0 0.0
    %2005 = vmatprep.subr.mxu0 0.0
    %2006 = vmatpush2.msra.mxu0 0.0
    %2007 = vmatprep.subr.mxu0 0.0
    %2008 = vmatpush2.msra.mxu0 0.0
    %2009 = vmatprep.subr.mxu0 0.0
    %2010 = vmatpush2.msra.mxu0 0.0
    %2011 = vmatprep.subr.mxu0 0.0
    %2012 = vmatpush2.msra.mxu0 0.0
    %2013 = vmatprep.subr.mxu0 0.0
    %2014 = vmatpush2.msra.mxu0 0.0
    %2015 = vmatprep.subr.mxu0 0.0
    %2016 = vmatpush2.msra.mxu0 0.0
    %2017 = vmatprep.subr.mxu0 0.0
    %2018 = vmatpush2.msra.mxu0 0.0
    %2019 = vmatprep.subr.mxu0 0.0
    %2020 = vmatpush2.msra.mxu0 0.0
    %2021 = vmatprep.subr.mxu0 0.0
    %2022 = vmatpush2.msra.mxu0 0.0
    %2023 = vmatprep.subr.mxu0 0.0
    %2024 = vmatpush2.msra.mxu0 0.0
    %2025 = vmatprep.subr.mxu0 0.0
    %2026 = vmatpush2.msra.mxu0 0.0
    %2027 = vmatprep.subr.mxu0 0.0
    %2028 = vmatpush2.msra.mxu0 0.0
    %2029 = vmatprep.subr.mxu0 0.0
    %2030 = vmatpush2.msra.mxu0 0.0
    %2031 = vmatprep.subr.mxu0 0.0
    %2032 = vmatpush2.msra.mxu0 0.0
    %2033 = vmatprep.subr.mxu0 0.0
    %2034 = vmatpush2.msra.mxu0 0.0
    %2035 = vmatprep.mubr.f32.mxu0 0.0
    %2036 = vmatmul.mubr.f32.gmra.mxu0 %v1850
    %v2037 = vpop.f32.mrf.mxu0
    %v2038 = vadd.f32 0.0, %v2037
    %v2039 = vpop.f32.mrf.mxu0
    %2040 = vdwg.mxu0
    %v2041 = vld [vmem:[#allocation3] sm:$0xff]
    %v2042 = vld [vmem:[#allocation3 + $0x8] sm:$0xff]
    %v2043 = vld [vmem:[#allocation3 + $0x10] sm:$0xff]
    %2045 = vset.pattern.permute.xlu0 0
    %2046 = vperm.xlu0 %2045, %v1851
    %v2047 = vpop.permute.xlu0 %2046
    %v2050 = vlaneseq
    %v2051 = vshrl.u32 %v2050, 7
    %v2052 = vsub.s32 0, %v2051
    %v2053 = vrot.slane %v607, %v2052
    %v2054 = vlaneseq
    %v2055 = vshrl.u32 %v2054, 7
    %v2056 = vsub.s32 1, %v2055
    %v2057 = vrot.slane %v607, %v2056
    %v2058 = vlaneseq
    %v2059 = vshrl.u32 %v2058, 7
    %v2060 = vsub.s32 2, %v2059
    %v2061 = vrot.slane %v607, %v2060
    %v2065 = vmul.f32 %v2047, %v2053
    %v2066 = vmul.f32 %v2047, %v2057
    %v2067 = vmul.f32 %v2047, %v2061
    %v2068 = vadd.f32 %v2041, %v2065
    %v2069 = vadd.f32 %v2042, %v2066
    %v2070 = vadd.f32 %v2043, %v2067
    %v2071 = vadd.f32 %v2068, %v1967
    %v2072 = vxor.u32 %v2071, 2147483648
    %v2073 = vmul.f32 %v2072, 1.442695
    %v2074 = vpow.pop %v2073
    %v2075 = vadd.f32 %v2074, 1.0
    %v2076 = vrcp.pop %v2075
    %v2077 = vmul.f32 1.0, %v2076
    %v2078 = vadd.f32 %v2069, %v1969
    %v2079 = vxor.u32 %v2078, 2147483648
    %v2080 = vmul.f32 %v2079, 1.442695
    %v2081 = vpow.pop %v2080
    %v2082 = vadd.f32 %v2081, 1.0
    %v2083 = vrcp.pop %v2082
    %v2084 = vmul.f32 1.0, %v2083
    %v2086 = vlaneseq
    %v2087 = vshrl.u32 %v2086, 7
    %v2088 = vsub.s32 0, %v2087
    %v2089 = vrot.slane %v606, %v2088
    %v2091 = vadd.f32 %v2038, %v2089
    %v2092 = vmul.f32 %v2077, %v2091
    %v2093 = vadd.f32 %v2070, %v2092
    %v2094 = vtanh.pop %v2093
    %v2095 = vsub.f32 1.0, %v2084
    %v2096 = vmul.f32 %v2095, %v2094
    %v2097 = vmul.f32 %v2084, %v1850
    %v2098 = vadd.f32 %v2096, %v2097
    %v2100 = vlaneseq
    %v2101 = vshrl.u32 %v2100, 7
    %v2102 = vsub.s32 0, %v2101
    %v2103 = vrot.slane %v608, %v2102
    %v2105 = vmul.f32 %v2098, %v2103
    %2106 = vadd.xlane.f32.xlu0 %v2105
    %v2107 = vpop.xlane.xlu0 %2106
    %v2109 = vlaneseq
    %v2110 = vshrl.u32 %v2109, 7
    %v2111 = vsub.s32 0, %v2110
    %v2112 = vrot.slane %v609, %v2111
    %v2114 = vadd.f32 %v2107, %v2112
    %2115 = vmatprep.subr.mxu0 %v1898
    %2116 = vmatpush1.msra.mxu0 %v1897
    %2117 = vmatprep.subr.mxu0 %v1895
    %2118 = vmatpush1.msra.mxu0 %v1894
    %2119 = vmatprep.subr.mxu0 %v1892
    %2120 = vmatpush1.msra.mxu0 %v1891
    %2121 = vmatprep.subr.mxu0 %v1889
    %2122 = vmatpush1.msra.mxu0 %v1888
    %2123 = vmatprep.subr.mxu0 %v1886
    %2124 = vmatpush1.msra.mxu0 %v1885
    %2125 = vmatprep.subr.mxu0 %v1883
    %2126 = vmatpush1.msra.mxu0 %v1882
    %2127 = vmatprep.subr.mxu0 %v1880
    %2128 = vmatpush1.msra.mxu0 %v1879
    %2129 = vmatprep.subr.mxu0 %v1877
    %2130 = vmatpush1.msra.mxu0 %v1876
    %2131 = vmatprep.subr.mxu0 %v1874
    %2132 = vmatpush1.msra.mxu0 %v1873
    %2133 = vmatprep.subr.mxu0 %v1871
    %2134 = vmatpush1.msra.mxu0 %v1870
    %2135 = vmatprep.subr.mxu0 %v1868
    %2136 = vmatpush1.msra.mxu0 %v1867
    %2137 = vmatprep.subr.mxu0 %v1865
    %2138 = vmatpush1.msra.mxu0 %v1864
    %2139 = vmatprep.subr.mxu0 %v1862
    %2140 = vmatpush1.msra.mxu0 %v1861
    %2141 = vmatprep.subr.mxu0 %v1859
    %2142 = vmatpush1.msra.mxu0 %v1858
    %2143 = vmatprep.subr.mxu0 %v1856
    %2144 = vmatpush1.msra.mxu0 %v1855
    %2145 = vmatprep.subr.mxu0 %v1853
    %2146 = vmatpush1.msra.mxu0 %v1852
    %2147 = vmatprep.subr.mxu0 0.0
    %2148 = vmatpush2.msra.mxu0 0.0
    %2149 = vmatprep.subr.mxu0 0.0
    %2150 = vmatpush2.msra.mxu0 0.0
    %2151 = vmatprep.subr.mxu0 0.0
    %2152 = vmatpush2.msra.mxu0 0.0
    %2153 = vmatprep.subr.mxu0 0.0
    %2154 = vmatpush2.msra.mxu0 0.0
    %2155 = vmatprep.subr.mxu0 0.0
    %2156 = vmatpush2.msra.mxu0 0.0
    %2157 = vmatprep.subr.mxu0 0.0
    %2158 = vmatpush2.msra.mxu0 0.0
    %2159 = vmatprep.subr.mxu0 0.0
    %2160 = vmatpush2.msra.mxu0 0.0
    %2161 = vmatprep.subr.mxu0 0.0
    %2162 = vmatpush2.msra.mxu0 0.0
    %2163 = vmatprep.subr.mxu0 0.0
    %2164 = vmatpush2.msra.mxu0 0.0
    %2165 = vmatprep.subr.mxu0 0.0
    %2166 = vmatpush2.msra.mxu0 0.0
    %2167 = vmatprep.subr.mxu0 0.0
    %2168 = vmatpush2.msra.mxu0 0.0
    %2169 = vmatprep.subr.mxu0 0.0
    %2170 = vmatpush2.msra.mxu0 0.0
    %2171 = vmatprep.subr.mxu0 0.0
    %2172 = vmatpush2.msra.mxu0 0.0
    %2173 = vmatprep.subr.mxu0 0.0
    %2174 = vmatpush2.msra.mxu0 0.0
    %2175 = vmatprep.subr.mxu0 0.0
    %2176 = vmatpush2.msra.mxu0 0.0
    %2177 = vmatprep.subr.mxu0 0.0
    %2178 = vmatpush2.msra.mxu0 0.0
    %2179 = vmatprep.mubr.f32.mxu0 0.0
    %2180 = vmatmul.mubr.f32.gmra.mxu0 %v2098
    %v2181 = vpop.f32.mrf.mxu0
    %v2182 = vadd.f32 0.0, %v2181
    %v2183 = vpop.f32.mrf.mxu0
    %v2184 = vadd.f32 0.0, %v2183
    %2185 = vdwg.mxu0
    %2186 = vmatprep.subr.mxu0 0.0
    %2187 = vmatpush1.msra.mxu0 %v1899
    %2188 = vmatprep.subr.mxu0 0.0
    %2189 = vmatpush1.msra.mxu0 %v1896
    %2190 = vmatprep.subr.mxu0 0.0
    %2191 = vmatpush1.msra.mxu0 %v1893
    %2192 = vmatprep.subr.mxu0 0.0
    %2193 = vmatpush1.msra.mxu0 %v1890
    %2194 = vmatprep.subr.mxu0 0.0
    %2195 = vmatpush1.msra.mxu0 %v1887
    %2196 = vmatprep.subr.mxu0 0.0
    %2197 = vmatpush1.msra.mxu0 %v1884
    %2198 = vmatprep.subr.mxu0 0.0
    %2199 = vmatpush1.msra.mxu0 %v1881
    %2200 = vmatprep.subr.mxu0 0.0
    %2201 = vmatpush1.msra.mxu0 %v1878
    %2202 = vmatprep.subr.mxu0 0.0
    %2203 = vmatpush1.msra.mxu0 %v1875
    %2204 = vmatprep.subr.mxu0 0.0
    %2205 = vmatpush1.msra.mxu0 %v1872
    %2206 = vmatprep.subr.mxu0 0.0
    %2207 = vmatpush1.msra.mxu0 %v1869
    %2208 = vmatprep.subr.mxu0 0.0
    %2209 = vmatpush1.msra.mxu0 %v1866
    %2210 = vmatprep.subr.mxu0 0.0
    %2211 = vmatpush1.msra.mxu0 %v1863
    %2212 = vmatprep.subr.mxu0 0.0
    %2213 = vmatpush1.msra.mxu0 %v1860
    %2214 = vmatprep.subr.mxu0 0.0
    %2215 = vmatpush1.msra.mxu0 %v1857
    %2216 = vmatprep.subr.mxu0 0.0
    %2217 = vmatpush1.msra.mxu0 %v1854
    %2218 = vmatprep.subr.mxu0 0.0
    %2219 = vmatpush2.msra.mxu0 0.0
    %2220 = vmatprep.subr.mxu0 0.0
    %2221 = vmatpush2.msra.mxu0 0.0
    %2222 = vmatprep.subr.mxu0 0.0
    %2223 = vmatpush2.msra.mxu0 0.0
    %2224 = vmatprep.subr.mxu0 0.0
    %2225 = vmatpush2.msra.mxu0 0.0
    %2226 = vmatprep.subr.mxu0 0.0
    %2227 = vmatpush2.msra.mxu0 0.0
    %2228 = vmatprep.subr.mxu0 0.0
    %2229 = vmatpush2.msra.mxu0 0.0
    %2230 = vmatprep.subr.mxu0 0.0
    %2231 = vmatpush2.msra.mxu0 0.0
    %2232 = vmatprep.subr.mxu0 0.0
    %2233 = vmatpush2.msra.mxu0 0.0
    %2234 = vmatprep.subr.mxu0 0.0
    %2235 = vmatpush2.msra.mxu0 0.0
    %2236 = vmatprep.subr.mxu0 0.0
    %2237 = vmatpush2.msra.mxu0 0.0
    %2238 = vmatprep.subr.mxu0 0.0
    %2239 = vmatpush2.msra.mxu0 0.0
    %2240 = vmatprep.subr.mxu0 0.0
    %2241 = vmatpush2.msra.mxu0 0.0
    %2242 = vmatprep.subr.mxu0 0.0
    %2243 = vmatpush2.msra.mxu0 0.0
    %2244 = vmatprep.subr.mxu0 0.0
    %2245 = vmatpush2.msra.mxu0 0.0
    %2246 = vmatprep.subr.mxu0 0.0
    %2247 = vmatpush2.msra.mxu0 0.0
    %2248 = vmatprep.subr.mxu0 0.0
    %2249 = vmatpush2.msra.mxu0 0.0
    %2250 = vmatprep.mubr.f32.mxu0 0.0
    %2251 = vmatmul.mubr.f32.gmra.mxu0 %v2098
    %v2252 = vpop.f32.mrf.mxu0
    %v2253 = vadd.f32 0.0, %v2252
    %v2254 = vpop.f32.mrf.mxu0
    %2255 = vdwg.mxu0
    %v2256 = vld [vmem:[#allocation3 + $0x18] sm:$0xff]
    %v2257 = vld [vmem:[#allocation3 + $0x20] sm:$0xff]
    %v2258 = vld [vmem:[#allocation3 + $0x28] sm:$0xff]
    %2260 = vset.pattern.permute.xlu0 0
    %2261 = vperm.xlu0 %2260, %v2114
    %v2262 = vpop.permute.xlu0 %2261
    %v2264 = vmul.f32 %v2262, %v2053
    %v2265 = vmul.f32 %v2262, %v2057
    %v2266 = vmul.f32 %v2262, %v2061
    %v2267 = vadd.f32 %v2256, %v2264
    %v2268 = vadd.f32 %v2257, %v2265
    %v2269 = vadd.f32 %v2258, %v2266
    %v2270 = vadd.f32 %v2267, %v2182
    %v2271 = vxor.u32 %v2270, 2147483648
    %v2272 = vmul.f32 %v2271, 1.442695
    %v2273 = vpow.pop %v2272
    %v2274 = vadd.f32 %v2273, 1.0
    %v2275 = vrcp.pop %v2274
    %v2276 = vmul.f32 1.0, %v2275
    %v2277 = vadd.f32 %v2268, %v2184
    %v2278 = vxor.u32 %v2277, 2147483648
    %v2279 = vmul.f32 %v2278, 1.442695
    %v2280 = vpow.pop %v2279
    %v2281 = vadd.f32 %v2280, 1.0
    %v2282 = vrcp.pop %v2281
    %v2283 = vmul.f32 1.0, %v2282
    %v2284 = vadd.f32 %v2253, %v2089
    %v2285 = vmul.f32 %v2276, %v2284
    %v2286 = vadd.f32 %v2269, %v2285
    %v2287 = vtanh.pop %v2286
    %v2288 = vsub.f32 1.0, %v2283
    %v2289 = vmul.f32 %v2288, %v2287
    %v2290 = vmul.f32 %v2283, %v2098
    %v2291 = vadd.f32 %v2289, %v2290
    %v2292 = vmul.f32 %v2291, %v2103
    %2293 = vadd.xlane.f32.xlu0 %v2292
    %v2294 = vpop.xlane.xlu0 %2293
    %v2295 = vadd.f32 %v2294, %v2112
    %2296 = vmatprep.subr.mxu0 %v1898
    %2297 = vmatpush1.msra.mxu0 %v1897
    %2298 = vmatprep.subr.mxu0 %v1895
    %2299 = vmatpush1.msra.mxu0 %v1894
    %2300 = vmatprep.subr.mxu0 %v1892
    %2301 = vmatpush1.msra.mxu0 %v1891
    %2302 = vmatprep.subr.mxu0 %v1889
    %2303 = vmatpush1.msra.mxu0 %v1888
    %2304 = vmatprep.subr.mxu0 %v1886
    %2305 = vmatpush1.msra.mxu0 %v1885
    %2306 = vmatprep.subr.mxu0 %v1883
    %2307 = vmatpush1.msra.mxu0 %v1882
    %2308 = vmatprep.subr.mxu0 %v1880
    %2309 = vmatpush1.msra.mxu0 %v1879
    %2310 = vmatprep.subr.mxu0 %v1877
    %2311 = vmatpush1.msra.mxu0 %v1876
    %2312 = vmatprep.subr.mxu0 %v1874
    %2313 = vmatpush1.msra.mxu0 %v1873
    %2314 = vmatprep.subr.mxu0 %v1871
    %2315 = vmatpush1.msra.mxu0 %v1870
    %2316 = vmatprep.subr.mxu0 %v1868
    %2317 = vmatpush1.msra.mxu0 %v1867
    %2318 = vmatprep.subr.mxu0 %v1865
    %2319 = vmatpush1.msra.mxu0 %v1864
    %2320 = vmatprep.subr.mxu0 %v1862
    %2321 = vmatpush1.msra.mxu0 %v1861
    %2322 = vmatprep.subr.mxu0 %v1859
    %2323 = vmatpush1.msra.mxu0 %v1858
    %2324 = vmatprep.subr.mxu0 %v1856
    %2325 = vmatpush1.msra.mxu0 %v1855
    %2326 = vmatprep.subr.mxu0 %v1853
    %2327 = vmatpush1.msra.mxu0 %v1852
    %2328 = vmatprep.subr.mxu0 0.0
    %2329 = vmatpush2.msra.mxu0 0.0
    %2330 = vmatprep.subr.mxu0 0.0
    %2331 = vmatpush2.msra.mxu0 0.0
    %2332 = vmatprep.subr.mxu0 0.0
    %2333 = vmatpush2.msra.mxu0 0.0
    %2334 = vmatprep.subr.mxu0 0.0
    %2335 = vmatpush2.msra.mxu0 0.0
    %2336 = vmatprep.subr.mxu0 0.0
    %2337 = vmatpush2.msra.mxu0 0.0
    %2338 = vmatprep.subr.mxu0 0.0
    %2339 = vmatpush2.msra.mxu0 0.0
    %2340 = vmatprep.subr.mxu0 0.0
    %2341 = vmatpush2.msra.mxu0 0.0
    %2342 = vmatprep.subr.mxu0 0.0
    %2343 = vmatpush2.msra.mxu0 0.0
    %2344 = vmatprep.subr.mxu0 0.0
    %2345 = vmatpush2.msra.mxu0 0.0
    %2346 = vmatprep.subr.mxu0 0.0
    %2347 = vmatpush2.msra.mxu0 0.0
    %2348 = vmatprep.subr.mxu0 0.0
    %2349 = vmatpush2.msra.mxu0 0.0
    %2350 = vmatprep.subr.mxu0 0.0
    %2351 = vmatpush2.msra.mxu0 0.0
    %2352 = vmatprep.subr.mxu0 0.0
    %2353 = vmatpush2.msra.mxu0 0.0
    %2354 = vmatprep.subr.mxu0 0.0
    %2355 = vmatpush2.msra.mxu0 0.0
    %2356 = vmatprep.subr.mxu0 0.0
    %2357 = vmatpush2.msra.mxu0 0.0
    %2358 = vmatprep.subr.mxu0 0.0
    %2359 = vmatpush2.msra.mxu0 0.0
    %2360 = vmatprep.mubr.f32.mxu0 0.0
    %2361 = vmatmul.mubr.f32.gmra.mxu0 %v2291
    %v2362 = vpop.f32.mrf.mxu0
    %v2363 = vadd.f32 0.0, %v2362
    %v2364 = vpop.f32.mrf.mxu0
    %v2365 = vadd.f32 0.0, %v2364
    %2366 = vdwg.mxu0
    %2367 = vmatprep.subr.mxu0 0.0
    %2368 = vmatpush1.msra.mxu0 %v1899
    %2369 = vmatprep.subr.mxu0 0.0
    %2370 = vmatpush1.msra.mxu0 %v1896
    %2371 = vmatprep.subr.mxu0 0.0
    %2372 = vmatpush1.msra.mxu0 %v1893
    %2373 = vmatprep.subr.mxu0 0.0
    %2374 = vmatpush1.msra.mxu0 %v1890
    %2375 = vmatprep.subr.mxu0 0.0
    %2376 = vmatpush1.msra.mxu0 %v1887
    %2377 = vmatprep.subr.mxu0 0.0
    %2378 = vmatpush1.msra.mxu0 %v1884
    %2379 = vmatprep.subr.mxu0 0.0
    %2380 = vmatpush1.msra.mxu0 %v1881
    %2381 = vmatprep.subr.mxu0 0.0
    %2382 = vmatpush1.msra.mxu0 %v1878
    %2383 = vmatprep.subr.mxu0 0.0
    %2384 = vmatpush1.msra.mxu0 %v1875
    %2385 = vmatprep.subr.mxu0 0.0
    %2386 = vmatpush1.msra.mxu0 %v1872
    %2387 = vmatprep.subr.mxu0 0.0
    %2388 = vmatpush1.msra.mxu0 %v1869
    %2389 = vmatprep.subr.mxu0 0.0
    %2390 = vmatpush1.msra.mxu0 %v1866
    %2391 = vmatprep.subr.mxu0 0.0
    %2392 = vmatpush1.msra.mxu0 %v1863
    %2393 = vmatprep.subr.mxu0 0.0
    %2394 = vmatpush1.msra.mxu0 %v1860
    %2395 = vmatprep.subr.mxu0 0.0
    %2396 = vmatpush1.msra.mxu0 %v1857
    %2397 = vmatprep.subr.mxu0 0.0
    %2398 = vmatpush1.msra.mxu0 %v1854
    %2399 = vmatprep.subr.mxu0 0.0
    %2400 = vmatpush2.msra.mxu0 0.0
    %2401 = vmatprep.subr.mxu0 0.0
    %2402 = vmatpush2.msra.mxu0 0.0
    %2403 = vmatprep.subr.mxu0 0.0
    %2404 = vmatpush2.msra.mxu0 0.0
    %2405 = vmatprep.subr.mxu0 0.0
    %2406 = vmatpush2.msra.mxu0 0.0
    %2407 = vmatprep.subr.mxu0 0.0
    %2408 = vmatpush2.msra.mxu0 0.0
    %2409 = vmatprep.subr.mxu0 0.0
    %2410 = vmatpush2.msra.mxu0 0.0
    %2411 = vmatprep.subr.mxu0 0.0
    %2412 = vmatpush2.msra.mxu0 0.0
    %2413 = vmatprep.subr.mxu0 0.0
    %2414 = vmatpush2.msra.mxu0 0.0
    %2415 = vmatprep.subr.mxu0 0.0
    %2416 = vmatpush2.msra.mxu0 0.0
    %2417 = vmatprep.subr.mxu0 0.0
    %2418 = vmatpush2.msra.mxu0 0.0
    %2419 = vmatprep.subr.mxu0 0.0
    %2420 = vmatpush2.msra.mxu0 0.0
    %2421 = vmatprep.subr.mxu0 0.0
    %2422 = vmatpush2.msra.mxu0 0.0
    %2423 = vmatprep.subr.mxu0 0.0
    %2424 = vmatpush2.msra.mxu0 0.0
    %2425 = vmatprep.subr.mxu0 0.0
    %2426 = vmatpush2.msra.mxu0 0.0
    %2427 = vmatprep.subr.mxu0 0.0
    %2428 = vmatpush2.msra.mxu0 0.0
    %2429 = vmatprep.subr.mxu0 0.0
    %2430 = vmatpush2.msra.mxu0 0.0
    %2431 = vmatprep.mubr.f32.mxu0 0.0
    %2432 = vmatmul.mubr.f32.gmra.mxu0 %v2291
    %v2433 = vpop.f32.mrf.mxu0
    %v2434 = vadd.f32 0.0, %v2433
    %v2435 = vpop.f32.mrf.mxu0
    %2436 = vdwg.mxu0
    %v2437 = vld [vmem:[#allocation3 + $0x30] sm:$0xff]
    %v2438 = vld [vmem:[#allocation3 + $0x38] sm:$0xff]
    %v2439 = vld [vmem:[#allocation3 + $0x40] sm:$0xff]
    %2441 = vset.pattern.permute.xlu0 0
    %2442 = vperm.xlu0 %2441, %v2295
    %v2443 = vpop.permute.xlu0 %2442
    %v2445 = vmul.f32 %v2443, %v2053
    %v2446 = vmul.f32 %v2443, %v2057
    %v2447 = vmul.f32 %v2443, %v2061
    %v2448 = vadd.f32 %v2437, %v2445
    %v2449 = vadd.f32 %v2438, %v2446
    %v2450 = vadd.f32 %v2439, %v2447
    %v2451 = vadd.f32 %v2448, %v2363
    %v2452 = vxor.u32 %v2451, 2147483648
    %v2453 = vmul.f32 %v2452, 1.442695
    %v2454 = vpow.pop %v2453
    %v2455 = vadd.f32 %v2454, 1.0
    %v2456 = vrcp.pop %v2455
    %v2457 = vmul.f32 1.0, %v2456
    %v2458 = vadd.f32 %v2449, %v2365
    %v2459 = vxor.u32 %v2458, 2147483648
    %v2460 = vmul.f32 %v2459, 1.442695
    %v2461 = vpow.pop %v2460
    %v2462 = vadd.f32 %v2461, 1.0
    %v2463 = vrcp.pop %v2462
    %v2464 = vmul.f32 1.0, %v2463
    %v2465 = vadd.f32 %v2434, %v2089
    %v2466 = vmul.f32 %v2457, %v2465
    %v2467 = vadd.f32 %v2450, %v2466
    %v2468 = vtanh.pop %v2467
    %v2469 = vsub.f32 1.0, %v2464
    %v2470 = vmul.f32 %v2469, %v2468
    %v2471 = vmul.f32 %v2464, %v2291
    %v2472 = vadd.f32 %v2470, %v2471
    %v2473 = vmul.f32 %v2472, %v2103
    %2474 = vadd.xlane.f32.xlu0 %v2473
    %v2475 = vpop.xlane.xlu0 %2474
    %v2476 = vadd.f32 %v2475, %v2112
    %2477 = vrot.lane.b32.xlu0 %v2295, 1
    %v2478 = vpop.permute.xlu0 %2477
    %2481 = vrot.lane.b32.xlu0 %v2476, 2
    %v2482 = vpop.permute.xlu0 %2481
    %vm2484 = vcmask 7168
    %v2485 = vsel %vm2484, %v2114, %v2478
    %v2486 = vsel %vm416, %v2485, %v2482
    %vm2487 = vcmask 23552
    %2488 = vst.msk [vmem:[%s13] sm:$0xff] %vm2487, %v2486
    // Predicated region
    $region62: #{tpu_custom_call.1} parent=1 // pred_check
      _
    $region63: #{tpu_custom_call.1} parent=1 // pred_check_branch
      %2490 = sbr.rel (0) target = $region65
    $region64: #{tpu_custom_call.1} parent=1 // pred_region
      _
    $region65: #{tpu_custom_call.1} parent=1 // pred_fallthru
      _
    // Predicated region
    $region66: #{tpu_custom_call.1} parent=1 // pred_check
      _
    $region67: #{tpu_custom_call.1} parent=1 // pred_check_branch
      %2492 = sbr.rel (0) target = $region69
    $region68: #{tpu_custom_call.1} parent=1 // pred_region
      _
    $region69: #{tpu_custom_call.1} parent=1 // pred_fallthru
      _
    %2493 = vsyncpa [#allocation6], 1
    %2494 = vsyncpa [#allocation8], 1

</llo_original>
